<compile_context>
chip_gen: v6e
topology: v6e:2x2x1
jax: 0.10.0
libtpu: 0.0.40
codegen_flags: <defaults>
</compile_context>

<pallas_src>
import functools

import jax
import jax.numpy as jnp
import numpy as np
from jax.experimental import pallas as pl
from jax.experimental.pallas import tpu as pltpu


def _round_up(a, b):
    return ((a + b - 1) // b) * b


def _choose_tile_n(n, d, itemsize, kp, target_tile_bytes):
    """Pick TN (multiple of 128) so TN*D*itemsize ~= target_tile_bytes."""
    per_row = max(d * itemsize, 1)
    tn = target_tile_bytes // per_row
    # Keep the (Kp, TN) f32 temporaries (score / onehot / iota) bounded too.
    tn = min(tn, (16 << 20) // max(4 * 4 * kp, 1))
    tn = max(128, (tn // 128) * 128)
    tn = min(tn, max(128, _round_up(n, 128)))
    return int(tn)


def _vmem_limit_bytes(tn, d, itemsize, kp):
    """Explicit scoped-VMEM limit: actual footprint + margin, below physical."""
    try:
        cap = int(pltpu.get_tpu_info().vmem_capacity_bytes)
    except Exception:  # no hardware query available -> conservative (v7x per-TC)
        cap = 64 << 20
    cap = (cap * 3) // 4                      # leave headroom below physical
    est = (2 * tn * d * itemsize              # x tile, double-buffered
           + 2 * kp * d * 4                   # resident centroids (2 bufs)
           + 2 * kp * d * 4                   # psums output (2 bufs)
           + 2 * kp * 128 * 4                 # pcounts output, lane-padded
           + 2 * 8 * tn * 4                   # assignment output, sublane-padded
           + 8 * kp * tn * 4                  # score / onehot / iota temporaries
           + 2 * tn * d * itemsize)           # masked x copy temporary
    return int(min(cap, max(est + (4 << 20), 32 << 20)))


def kmeans_kernel(c_ref, x_ref, assign_ref, sums_ref, counts_ref, *,
                  num_clusters, n_valid, tile_n, ragged):
    """One N-tile: cluster assignment + per-cluster partial sums / counts.

    c_ref:      (Kp, D) f32, resident across the grid (K padded to 8 sublanes).
    x_ref:      (TN, D) native-dtype tile of samples (last tile may be ragged).
    assign_ref: (1, TN) int32 cluster ids (lane-dense).
    sums_ref:   (Kp, D) f32 partial per-cluster feature sums for this tile.
    counts_ref: (Kp, 1) int32 partial per-cluster counts for this tile.
    """
    i = pl.program_id(0)
    c = c_ref[...]                                            # (Kp, D) f32
    x = x_ref[...]                                            # (TN, D) native dtype
    kp = c.shape[0]
    tn = x.shape[0]

    # argmin_k ||c_k - x_n||^2  ==  argmin_k (||c_k||^2 - 2 c_k . x_n)
    # (||x_n||^2 is constant per column n, so it is dropped: saves a
    #  (TN,1)->(1,TN) XLU transpose and a (Kp,TN) VPU add per tile)
    c2 = jnp.sum(c * c, axis=1, keepdims=True)                # (Kp, 1)
    if kp > num_clusters:
        # padded centroid rows must never win the argmin
        k_row = jax.lax.broadcasted_iota(jnp.int32, (kp, 1), 0)
        c2 = c2 + jnp.where(k_row >= num_clusters,
                            jnp.float32(1e30), jnp.float32(0.0))

    # Fold -2 into the tiny centroid operand; contract on the shared last
    # (lane) dim so the large x tile feeds the MXU without a transpose.
    neg2c = (-2.0 * c).astype(x.dtype)                        # (Kp, D)
    cx = jax.lax.dot_general(
        neg2c, x, dimension_numbers=(((1,), (1,)), ((), ())),
        preferred_element_type=jnp.float32,
        precision=jax.lax.Precision.HIGHEST)                  # (Kp, TN)
    score = c2 + cx                                           # (Kp, TN) f32

    # argmin over clusters, first-index-wins on ties (matches torch.argmin)
    smin = jnp.min(score, axis=0, keepdims=True)              # (1, TN)
    kiota = jax.lax.broadcasted_iota(jnp.int32, (kp, tn), 0)  # (Kp, TN)
    assign = jnp.min(jnp.where(score == smin, kiota, kp),
                     axis=0, keepdims=True)                   # (1, TN) int32
    assign_ref[...] = assign

    # Per-cluster partial sums / counts for this tile.
    matches = kiota == assign                                 # (Kp, TN) bool
    if ragged:
        # The final tile extends past N: its tail rows of x are uninitialized
        # HBM bits.  Zero them before the sums matmul (0 * NaN would poison
        # the partial sums) and mask the tail columns out of the counts.
        col = jax.lax.broadcasted_iota(jnp.int32, (1, tn), 1)
        col_valid = (i * tile_n + col) < n_valid              # (1, TN)
        matches = jnp.logical_and(matches, col_valid)
        row = jax.lax.broadcasted_iota(jnp.int32, (tn, 1), 0)
        row_valid = (i * tile_n + row) < n_valid              # (TN, 1)
        x_stats = jnp.where(row_valid, x, 0).astype(x.dtype)  # (TN, D)
    else:
        x_stats = x

    counts_ref[...] = jnp.sum(matches.astype(jnp.int32), axis=1, keepdims=True)
    onehot = matches.astype(x.dtype)                          # (Kp, TN) 0/1
    sums_ref[...] = jnp.dot(onehot, x_stats,
                            preferred_element_type=jnp.float32,
                            precision=jax.lax.Precision.HIGHEST)  # (Kp, D)


def kmeans_forward(centroids, x, *, x_wire_dtype=None,
                   target_tile_bytes=6 << 20):
    """centroids: (K, 1, D), x: (N, D).

    Returns (assignment (N,) int32, new_means (K, 1, D) float32).

    target_tile_bytes sizes the per-buffer x tile (double-buffered by Pallas);
    ~4-8 MiB keeps the DMA stream near HBM roofline on v5e/v6e/v7x while
    fitting comfortably in scoped VMEM (limit set explicitly below).
    x_wire_dtype=jnp.bfloat16 is an opt-in mode that halves HBM traffic
    (accumulation stays f32); it can flip assignments on near-ties.
    """
    K, _, D = centroids.shape
    N = x.shape[0]
    if x_wire_dtype is not None:
        x = x.astype(x_wire_dtype)
    item = jnp.dtype(x.dtype).itemsize

    Kp = _round_up(K, 8)                        # fill the 8-sublane vreg dim
    tn = _choose_tile_n(N, D, item, Kp, target_tile_bytes)
    num_tiles = -(-N // tn)
    np_out = num_tiles * tn                     # assignment is written lane-dense
    ragged = np_out != N                        # last x tile extends past N

    c2d = jnp.pad(centroids.reshape(K, D).astype(jnp.float32),
                  ((0, Kp - K), (0, 0)))
    # NOTE: x is passed unpadded; the ragged final block is masked in-kernel.

    kernel = functools.partial(kmeans_kernel, num_clusters=K, n_valid=N,
                               tile_n=tn, ragged=ragged)

    assign2d, psums, pcounts = pl.pallas_call(
        kernel,
        out_shape=(
            jax.ShapeDtypeStruct((1, np_out), jnp.int32),
            jax.ShapeDtypeStruct((num_tiles, Kp, D), jnp.float32),
            jax.ShapeDtypeStruct((num_tiles, Kp, 1), jnp.int32),
        ),
        grid=(num_tiles,),
        in_specs=[
            pl.BlockSpec((Kp, D), lambda i: (0, 0)),   # centroids: resident
            pl.BlockSpec((tn, D), lambda i: (i, 0)),   # x: pipelined over N
        ],
        out_specs=(
            pl.BlockSpec((1, tn), lambda i: (0, i)),
            pl.BlockSpec((None, Kp, D), lambda i: (i, 0, 0)),
            pl.BlockSpec((None, Kp, 1), lambda i: (i, 0, 0)),
        ),
        compiler_params=pltpu.CompilerParams(
            dimension_semantics=("parallel",),         # tiles are independent
            vmem_limit_bytes=_vmem_limit_bytes(tn, D, item, Kp),
        ),
    )(c2d, x)

    assignment = assign2d.reshape(np_out)[:N]
    sums = jnp.sum(psums, axis=0)[:K]                      # (K, D) f32
    counts = jnp.sum(pcounts, axis=0)[:K].astype(jnp.float32)  # (K, 1)
    # empty cluster -> 0/0 = NaN, matching torch .mean(0) over an empty slice
    new_means = sums / counts
    return assignment, new_means.reshape(K, 1, D)


def _reference(centroids, x):
    """Pure-JAX reference mirroring the torch forward (dist='p', p=2)."""
    K, _, D = centroids.shape
    c = centroids.reshape(K, D).astype(jnp.float32)
    xf = x.astype(jnp.float32)
    dist = jnp.sum((c[:, None, :] - xf[None, :, :]) ** 2, axis=-1)  # (K, N)
    assignment = jnp.argmin(dist, axis=0)
    onehot = (assignment[None, :] == jnp.arange(K)[:, None]).astype(jnp.float32)
    new_means = (onehot @ xf) / jnp.sum(onehot, axis=1, keepdims=True)
    return assignment.astype(jnp.int32), new_means.reshape(K, 1, D)


if __name__ == "__main__":
    # Small, deterministic example consistent with the module:
    #   N=300 samples (ragged vs the 128-lane tile), D=128 features, K=4.
    key = jax.random.PRNGKey(0)
    N, D, K = 300, 128, 4
    x = jax.random.normal(key, (N, D), dtype=jnp.float32)
    # Deterministic init: pick 4 evenly spaced data points.
    # TODO(synk): the iterative kmeans++ init (plus_plus) is host-side
    # data-loader logic and is not kernelized; the 'corr' distance branch of
    # forward is likewise not implemented (module default dist='p', p=2).
    centroids = x[jnp.array([0, 75, 150, 225])].reshape(K, 1, D)

    ref_assign, ref_means = _reference(centroids, x)

    # 1) Default VMEM-budget tiling (single ragged tile at this small N).
    assignment, new_means = kmeans_forward(centroids, x)
    jax.block_until_ready((assignment, new_means))
    assert np.array_equal(np.asarray(assignment), np.asarray(ref_assign)), \
        "assignment mismatch (default tiling)"
    np.testing.assert_allclose(np.asarray(new_means), np.asarray(ref_means),
                               rtol=1e-4, atol=1e-4)

    # 2) Forced small tiles: exercises the multi-tile grid + ragged last tile.
    assignment2, new_means2 = kmeans_forward(centroids, x,
                                             target_tile_bytes=128 * D * 4)
    jax.block_until_ready((assignment2, new_means2))
    assert np.array_equal(np.asarray(assignment2), np.asarray(ref_assign)), \
        "assignment mismatch (multi-tile)"
    np.testing.assert_allclose(np.asarray(new_means2), np.asarray(ref_means),
                               rtol=1e-4, atol=1e-4)

    print("KERNEL_OK")
</pallas_src>

<mosaic_0001>
module attributes {stable_mosaic.version = 11 : i64} {
  func.func @kmeans_kernel(%arg0: i32, %arg1: memref<8x128xf32, #tpu.memory_space<vmem>>, %arg2: memref<384x128xf32, #tpu.memory_space<vmem>>, %arg3: memref<1x384xi32, #tpu.memory_space<vmem>>, %arg4: memref<1x8x128xf32, #tpu.memory_space<vmem>>, %arg5: memref<1x8x1xi32, #tpu.memory_space<vmem>>) attributes {dimension_semantics = [#tpu.dimension_semantics<parallel>], iteration_bounds = array<i64: 1>, scalar_prefetch = 0 : i64, scratch_operands = 0 : i64, tpu.core_type = #tpu.core_type<tc>, window_params = [{pipeline_mode = #tpu.pipeline_mode<synchronous>, transform_indices = @transform_0, window_bounds = array<i64: 8, 128>}, {transform_indices = @transform_1, window_bounds = array<i64: 384, 128>}, {transform_indices = @transform_2, window_bounds = array<i64: 1, 384>}, {transform_indices = @transform_3, window_bounds = array<i64: 1, 8, 128>}, {transform_indices = @transform_4, window_bounds = array<i64: 1, 8, 1>}]} {
    %c0 = arith.constant 0 : index
    %c0_0 = arith.constant 0 : index
    %0 = vector.load %arg1[%c0, %c0_0] : memref<8x128xf32, #tpu.memory_space<vmem>>, vector<8x128xf32>
    %c0_1 = arith.constant 0 : index
    %c0_2 = arith.constant 0 : index
    %1 = vector.load %arg2[%c0_1, %c0_2] : memref<384x128xf32, #tpu.memory_space<vmem>>, vector<384x128xf32>
    %2 = arith.mulf %0, %0 : vector<8x128xf32>
    %cst = arith.constant dense<0.000000e+00> : vector<8xf32>
    %3 = vector.multi_reduction <add>, %2, %cst [1] : vector<8x128xf32> to vector<8xf32>
    %4 = vector.shape_cast %3 : vector<8xf32> to vector<8x1xf32>
    %5 = tpu.iota {dimensions = array<i32: 0>} : vector<8x1xi32>
    %c4_i32 = arith.constant 4 : i32
    %6 = vector.broadcast %c4_i32 : i32 to vector<8x1xi32>
    %7 = arith.cmpi sge, %5, %6 : vector<8x1xi32>
    %cst_3 = arith.constant 1.000000e+30 : f32
    %cst_4 = arith.constant 0.000000e+00 : f32
    %8 = vector.broadcast %cst_3 : f32 to vector<8x1xf32>
    %9 = vector.broadcast %cst_4 : f32 to vector<8x1xf32>
    %10 = arith.select %7, %8, %9 : vector<8x1xi1>, vector<8x1xf32>
    %11 = arith.addf %4, %10 : vector<8x1xf32>
    %cst_5 = arith.constant -2.000000e+00 : f32
    %12 = vector.broadcast %cst_5 : f32 to vector<8x128xf32>
    %13 = arith.mulf %12, %0 : vector<8x128xf32>
    %cst_6 = arith.constant dense<0.000000e+00> : vector<8x384xf32>
    %14 = tpu.matmul %13, %1, %cst_6 {dimension_numbers = #tpu.dot_dimension_numbers<[1], [1], [0], [0], [0, 0, 1, 0], [], []>, precision = #tpu.contract_precision<fp32>} : vector<8x128xf32>, vector<384x128xf32>, vector<8x384xf32> -> vector<8x384xf32>
    %15 = vector.broadcast %11 : vector<8x1xf32> to vector<8x384xf32>
    %16 = arith.addf %15, %14 : vector<8x384xf32>
    %cst_7 = arith.constant dense<0x7F800000> : vector<384xf32>
    %17 = vector.multi_reduction <minimumf>, %16, %cst_7 [0] : vector<8x384xf32> to vector<384xf32>
    %18 = vector.shape_cast %17 : vector<384xf32> to vector<1x384xf32>
    %19 = tpu.iota {dimensions = array<i32: 0>} : vector<8x384xi32>
    %20 = vector.broadcast %18 : vector<1x384xf32> to vector<8x384xf32>
    %21 = arith.cmpf oeq, %16, %20 : vector<8x384xf32>
    %c8_i32 = arith.constant 8 : i32
    %22 = vector.broadcast %c8_i32 : i32 to vector<8x384xi32>
    %23 = arith.select %21, %19, %22 : vector<8x384xi1>, vector<8x384xi32>
    %cst_8 = arith.constant dense<2147483647> : vector<384xi32>
    %24 = vector.multi_reduction <minsi>, %23, %cst_8 [0] : vector<8x384xi32> to vector<384xi32>
    %25 = vector.shape_cast %24 : vector<384xi32> to vector<1x384xi32>
    %c0_9 = arith.constant 0 : index
    %c0_10 = arith.constant 0 : index
    %26 = vector.load %arg3[%c0_9, %c0_10] : memref<1x384xi32, #tpu.memory_space<vmem>>, vector<1x384xi32>
    tpu.vector_store %arg3[%c0_9, %c0_10], %25 {strides = array<i32>} : memref<1x384xi32, #tpu.memory_space<vmem>>, vector<1x384xi32>,
    %27 = vector.broadcast %25 : vector<1x384xi32> to vector<8x384xi32>
    %28 = arith.cmpi eq, %19, %27 : vector<8x384xi32>
    %29 = tpu.iota {dimensions = array<i32: 1>} : vector<1x384xi32>
    %c384_i32 = arith.constant 384 : i32
    %30 = arith.muli %arg0, %c384_i32 : i32
    %31 = vector.broadcast %30 : i32 to vector<1x384xi32>
    %32 = arith.addi %31, %29 : vector<1x384xi32>
    %c300_i32 = arith.constant 300 : i32
    %33 = vector.broadcast %c300_i32 : i32 to vector<1x384xi32>
    %34 = arith.cmpi slt, %32, %33 : vector<1x384xi32>
    %35 = vector.broadcast %34 : vector<1x384xi1> to vector<8x384xi1>
    %36 = arith.andi %28, %35 : vector<8x384xi1>
    %37 = tpu.iota {dimensions = array<i32: 0>} : vector<384x1xi32>
    %c384_i32_11 = arith.constant 384 : i32
    %38 = arith.muli %arg0, %c384_i32_11 : i32
    %39 = vector.broadcast %38 : i32 to vector<384x1xi32>
    %40 = arith.addi %39, %37 : vector<384x1xi32>
    %c300_i32_12 = arith.constant 300 : i32
    %41 = vector.broadcast %c300_i32_12 : i32 to vector<384x1xi32>
    %42 = arith.cmpi slt, %40, %41 : vector<384x1xi32>
    %c0_i32 = arith.constant 0 : i32
    %43 = arith.sitofp %c0_i32 : i32 to f32
    %44 = vector.shape_cast %42 : vector<384x1xi1> to vector<384x1xi1>
    %45 = vector.broadcast %44 : vector<384x1xi1> to vector<384x128xi1>
    %46 = vector.broadcast %43 : f32 to vector<384x128xf32>
    %47 = arith.select %45, %1, %46 : vector<384x128xi1>, vector<384x128xf32>
    %48 = arith.extui %36 : vector<8x384xi1> to vector<8x384xi32>
    %cst_13 = arith.constant dense<0> : vector<8xi32>
    %49 = vector.multi_reduction <add>, %48, %cst_13 [1] : vector<8x384xi32> to vector<8xi32>
    %50 = vector.shape_cast %49 : vector<8xi32> to vector<8x1xi32>
    %c0_14 = arith.constant 0 : index
    %c0_15 = arith.constant 0 : index
    %c0_16 = arith.constant 0 : index
    %51 = vector.load %arg5[%c0_14, %c0_15, %c0_16] : memref<1x8x1xi32, #tpu.memory_space<vmem>>, vector<1x8x1xi32>
    %52 = vector.shape_cast %51 : vector<1x8x1xi32> to vector<8x1xi32>
    %53 = vector.shape_cast %50 : vector<8x1xi32> to vector<1x8x1xi32>
    tpu.vector_store %arg5[%c0_14, %c0_15, %c0_16], %53 {strides = array<i32>} : memref<1x8x1xi32, #tpu.memory_space<vmem>>, vector<1x8x1xi32>,
    %54 = arith.extui %36 : vector<8x384xi1> to vector<8x384xi32>
    %55 = arith.sitofp %54 : vector<8x384xi32> to vector<8x384xf32>
    %cst_17 = arith.constant dense<0.000000e+00> : vector<8x128xf32>
    %56 = tpu.matmul %55, %47, %cst_17 {dimension_numbers = #tpu.dot_dimension_numbers<[1], [0], [0], [1], [0, 0, 1, 1], [], []>, precision = #tpu.contract_precision<fp32>} : vector<8x384xf32>, vector<384x128xf32>, vector<8x128xf32> -> vector<8x128xf32>
    %c0_18 = arith.constant 0 : index
    %c0_19 = arith.constant 0 : index
    %c0_20 = arith.constant 0 : index
    %57 = vector.load %arg4[%c0_18, %c0_19, %c0_20] : memref<1x8x128xf32, #tpu.memory_space<vmem>>, vector<1x8x128xf32>
    %58 = vector.shape_cast %57 : vector<1x8x128xf32> to vector<8x128xf32>
    %59 = vector.shape_cast %56 : vector<8x128xf32> to vector<1x8x128xf32>
    tpu.vector_store %arg4[%c0_18, %c0_19, %c0_20], %59 {strides = array<i32>} : memref<1x8x128xf32, #tpu.memory_space<vmem>>, vector<1x8x128xf32>,
    return
  }
  func.func @transform_0(%arg0: i32) -> (i32, i32) {
    %c0_i32 = arith.constant 0 : i32
    %c0_i32_0 = arith.constant 0 : i32
    %c0_i32_1 = arith.constant 0 : i32
    return %c0_i32, %c0_i32_0 : i32, i32
  }
  func.func @transform_1(%arg0: i32) -> (i32, i32) {
    %c0_i32 = arith.constant 0 : i32
    %c0_i32_0 = arith.constant 0 : i32
    return %arg0, %c0_i32 : i32, i32
  }
  func.func @transform_2(%arg0: i32) -> (i32, i32) {
    %c0_i32 = arith.constant 0 : i32
    %c0_i32_0 = arith.constant 0 : i32
    return %c0_i32, %arg0 : i32, i32
  }
  func.func @transform_3(%arg0: i32) -> (i32, i32, i32) {
    %c0_i32 = arith.constant 0 : i32
    %c0_i32_0 = arith.constant 0 : i32
    %c0_i32_1 = arith.constant 0 : i32
    return %arg0, %c0_i32, %c0_i32_0 : i32, i32, i32
  }
  func.func @transform_4(%arg0: i32) -> (i32, i32, i32) {
    %c0_i32 = arith.constant 0 : i32
    %c0_i32_0 = arith.constant 0 : i32
    %c0_i32_1 = arith.constant 0 : i32
    return %arg0, %c0_i32, %c0_i32_0 : i32, i32, i32
  }
}

</mosaic_0001>

<llo_original>
// kernel: tpu_custom_call.1
$region0: #{tpu_custom_call.1}
  #allocation0 [shape = 'u32[]', space=smem, size = 0x4, offset = 0x4, fixed_abs, tag = 'smem constant byte address 0x4 - core index']
  #allocation1 [shape = 'u32[144,128]{1,0:T(1,128)}', space=vmem, size = 0x12000, scoped, tag = 'internal scratch']
  %s0 = inlined_call_operand.hbm [shape: f32[8,128], index: 0, kind: input, shape index: {}]
  %s1 = inlined_call_operand.hbm [shape: f32[300,128], index: 1, kind: input, shape index: {}]
  %s2 = inlined_call_operand.hbm [shape: s32[1,384], index: 2, kind: output, shape index: {0}]
  %s3 = inlined_call_operand.hbm [shape: f32[1,8,128], index: 3, kind: output, shape index: {1}]
  %s4 = inlined_call_operand.vmem [shape: s32[1,8,1], index: 4, kind: output, shape index: {2}]
  %5 = xla_tuple %s2, %s3, %s4
  %s6 = sld [smem:[#allocation0]]
  $region42: #{tpu_custom_call.1} parent=0
    _
  %s8 = ssub.s32 1, %s6
  %s9 = scalar_select 0, %s8, %s6
  $region1: #{tpu_custom_call.1} parent=0
    #allocation2 [shape = 'u8[4096]{0}', space=vmem, size = 0x1000, scoped, tag = 'input window, operand 0, single buffered']
    #allocation3 [shape = 's32[1]{0}', space=sflag, size = 0x4, scoped, tag = 'scoped memory for tpu_custom_call.1']
    #allocation4 [shape = 's32[1]{0}', space=sflag, size = 0x4, scoped, tag = 'scoped memory for tpu_custom_call.1']
    #allocation5 [shape = 'u8[196608]{0}', space=vmem, size = 0x30000, scoped, tag = 'input window, operand 1, single buffered']
    #allocation6 [shape = 's32[1]{0}', space=sflag, size = 0x4, scoped, tag = 'scoped memory for tpu_custom_call.1']
    #allocation7 [shape = 'u8[1536]{0}', space=vmem, size = 0x800, scoped, tag = 'output window, operand 0, single buffered']
    #allocation8 [shape = 'u8[4096]{0}', space=vmem, size = 0x1000, scoped, tag = 'output window, operand 1, single buffered']
    #allocation9 [shape = 's32[1]{0}', space=sflag, size = 0x4, scoped, tag = 'scoped memory for tpu_custom_call.1']
    %10 = vsyncpa [#allocation3], 0
    %11 = vsyncpa [#allocation6], 0
    %12 = vsyncpa [#allocation4], 0
    %13 = vsyncpa [#allocation9], 0
    // Predicated region
    $region2: #{tpu_custom_call.1} parent=1 // pred_check
      _
    $region3: #{tpu_custom_call.1} parent=1 // pred_check_branch
      %15 = sbr.rel (0) target = $region5
    $region4: #{tpu_custom_call.1} parent=1 // pred_region
      %s17 = ssub.s32 128, 128
      %18 = vsyncadd [#allocation3], %s17
      %s20 = sshll.u32 [#allocation2], 4
      %s21 = int_to_ptr.vmem [resolvable:$true] %s20
      %23 = dma.hbm_to_vmem [thread:$0]  %s0, 128, %s21, [#allocation3]
    $region5: #{tpu_custom_call.1} parent=1 // pred_fallthru
      _
    // Predicated region
    $region6: #{tpu_custom_call.1} parent=1 // pred_check
      _
    $region7: #{tpu_custom_call.1} parent=1 // pred_check_branch
      %25 = sbr.rel (0) target = $region9
    $region8: #{tpu_custom_call.1} parent=1 // pred_region
      %s27 = ssub.s32 6144, 4864
      %28 = vsyncadd [#allocation6], %s27
      %s29 = sshll.u32 [#allocation5], 4
      %s30 = int_to_ptr.vmem [resolvable:$true] %s29
      %35 = dma.hbm_to_vmem [thread:$0]  %s1, 4864, %s30, [#allocation6], 128, 128, 8
    $region9: #{tpu_custom_call.1} parent=1 // pred_fallthru
      _
    // Predicated region
    $region10: #{tpu_custom_call.1} parent=1 // pred_check
      _
    $region11: #{tpu_custom_call.1} parent=1 // pred_check_branch
      %37 = sbr.rel (0) target = $region13
    $region12: #{tpu_custom_call.1} parent=1 // pred_region
      %38 = dma.done [#allocation3], 128
    $region13: #{tpu_custom_call.1} parent=1 // pred_fallthru
      _
    // Predicated region
    $region14: #{tpu_custom_call.1} parent=1 // pred_check
      _
    $region15: #{tpu_custom_call.1} parent=1 // pred_check_branch
      %40 = sbr.rel (0) target = $region17
    $region16: #{tpu_custom_call.1} parent=1 // pred_region
      %41 = dma.done [#allocation6], 6144
    $region17: #{tpu_custom_call.1} parent=1 // pred_fallthru
      _
    %v42 = vld [vmem:[#allocation2] sm:$0xff]
    %v43 = vld [vmem:[#allocation5] sm:$0xff]
    %v44 = vld [vmem:[#allocation5 + $0x8] sm:$0xff]
    %v45 = vld [vmem:[#allocation5 + $0x10] sm:$0xff]
    %v46 = vld [vmem:[#allocation5 + $0x18] sm:$0xff]
    %v47 = vld [vmem:[#allocation5 + $0x20] sm:$0xff]
    %v48 = vld [vmem:[#allocation5 + $0x28] sm:$0xff]
    %v49 = vld [vmem:[#allocation5 + $0x30] sm:$0xff]
    %v50 = vld [vmem:[#allocation5 + $0x38] sm:$0xff]
    %v51 = vld [vmem:[#allocation5 + $0x40] sm:$0xff]
    %v52 = vld [vmem:[#allocation5 + $0x48] sm:$0xff]
    %v53 = vld [vmem:[#allocation5 + $0x50] sm:$0xff]
    %v54 = vld [vmem:[#allocation5 + $0x58] sm:$0xff]
    %v55 = vld [vmem:[#allocation5 + $0x60] sm:$0xff]
    %v56 = vld [vmem:[#allocation5 + $0x68] sm:$0xff]
    %v57 = vld [vmem:[#allocation5 + $0x70] sm:$0xff]
    %v58 = vld [vmem:[#allocation5 + $0x78] sm:$0xff]
    %v59 = vld [vmem:[#allocation5 + $0x80] sm:$0xff]
    %v60 = vld [vmem:[#allocation5 + $0x88] sm:$0xff]
    %v61 = vld [vmem:[#allocation5 + $0x90] sm:$0xff]
    %v62 = vld [vmem:[#allocation5 + $0x98] sm:$0xff]
    %v63 = vld [vmem:[#allocation5 + $0xa0] sm:$0xff]
    %v64 = vld [vmem:[#allocation5 + $0xa8] sm:$0xff]
    %v65 = vld [vmem:[#allocation5 + $0xb0] sm:$0xff]
    %v66 = vld [vmem:[#allocation5 + $0xb8] sm:$0xff]
    %v67 = vld [vmem:[#allocation5 + $0xc0] sm:$0xff]
    %v68 = vld [vmem:[#allocation5 + $0xc8] sm:$0xff]
    %v69 = vld [vmem:[#allocation5 + $0xd0] sm:$0xff]
    %v70 = vld [vmem:[#allocation5 + $0xd8] sm:$0xff]
    %v71 = vld [vmem:[#allocation5 + $0xe0] sm:$0xff]
    %v72 = vld [vmem:[#allocation5 + $0xe8] sm:$0xff]
    %v73 = vld [vmem:[#allocation5 + $0xf0] sm:$0xff]
    %v74 = vld [vmem:[#allocation5 + $0xf8] sm:$0xff]
    %v75 = vld [vmem:[#allocation5 + $0x100] sm:$0xff]
    %v76 = vld [vmem:[#allocation5 + $0x108] sm:$0xff]
    %v77 = vld [vmem:[#allocation5 + $0x110] sm:$0xff]
    %v78 = vld [vmem:[#allocation5 + $0x118] sm:$0xff]
    %v79 = vld [vmem:[#allocation5 + $0x120] sm:$0xff]
    %v80 = vld [vmem:[#allocation5 + $0x128] sm:$0xff]
    %v81 = vld [vmem:[#allocation5 + $0x130] sm:$0xff]
    %v82 = vld [vmem:[#allocation5 + $0x138] sm:$0xff]
    %v83 = vld [vmem:[#allocation5 + $0x140] sm:$0xff]
    %v84 = vld [vmem:[#allocation5 + $0x148] sm:$0xff]
    %v85 = vld [vmem:[#allocation5 + $0x150] sm:$0xff]
    %v86 = vld [vmem:[#allocation5 + $0x158] sm:$0xff]
    %v87 = vld [vmem:[#allocation5 + $0x160] sm:$0xff]
    %v88 = vld [vmem:[#allocation5 + $0x168] sm:$0xff]
    %v89 = vld [vmem:[#allocation5 + $0x170] sm:$0xff]
    %v90 = vld [vmem:[#allocation5 + $0x178] sm:$0xff]
    %v91 = vmul.f32 %v42, %v42
    %92 = vadd.xlane.f32.xlu0 %v91
    %v93 = vpop.xlane.xlu0 %92
    %v94 = vlaneseq
    %v95 = vshrl.u32 %v94, 7
    %vm96 = vcmp.ge.s32.totalorder %v95, 4
    %v97 = vsel %vm96, 1e+30, 0.0
    %v98 = vadd.f32 %v93, %v97
    %v99 = vmul.f32 %v42, -2.0
    %100 = vmatprep.subr.mxu0 0.0
    %v101 = vand.u32 %v58, 4294901760
    %102 = vmatpush1.xpose.msra.mxu0 %v101
    %103 = vmatprep.subr.mxu0 0.0
    %v104 = vand.u32 %v57, 4294901760
    %105 = vmatpush1.xpose.msra.mxu0 %v104
    %106 = vmatprep.subr.mxu0 0.0
    %v107 = vand.u32 %v56, 4294901760
    %108 = vmatpush1.xpose.msra.mxu0 %v107
    %109 = vmatprep.subr.mxu0 0.0
    %v110 = vand.u32 %v55, 4294901760
    %111 = vmatpush1.xpose.msra.mxu0 %v110
    %112 = vmatprep.subr.mxu0 0.0
    %v113 = vand.u32 %v54, 4294901760
    %114 = vmatpush1.xpose.msra.mxu0 %v113
    %115 = vmatprep.subr.mxu0 0.0
    %v116 = vand.u32 %v53, 4294901760
    %117 = vmatpush1.xpose.msra.mxu0 %v116
    %118 = vmatprep.subr.mxu0 0.0
    %v119 = vand.u32 %v52, 4294901760
    %120 = vmatpush1.xpose.msra.mxu0 %v119
    %121 = vmatprep.subr.mxu0 0.0
    %v122 = vand.u32 %v51, 4294901760
    %123 = vmatpush1.xpose.msra.mxu0 %v122
    %124 = vmatprep.subr.mxu0 0.0
    %v125 = vand.u32 %v50, 4294901760
    %126 = vmatpush1.xpose.msra.mxu0 %v125
    %127 = vmatprep.subr.mxu0 0.0
    %v128 = vand.u32 %v49, 4294901760
    %129 = vmatpush1.xpose.msra.mxu0 %v128
    %130 = vmatprep.subr.mxu0 0.0
    %v131 = vand.u32 %v48, 4294901760
    %132 = vmatpush1.xpose.msra.mxu0 %v131
    %133 = vmatprep.subr.mxu0 0.0
    %v134 = vand.u32 %v47, 4294901760
    %135 = vmatpush1.xpose.msra.mxu0 %v134
    %136 = vmatprep.subr.mxu0 0.0
    %v137 = vand.u32 %v46, 4294901760
    %138 = vmatpush1.xpose.msra.mxu0 %v137
    %139 = vmatprep.subr.mxu0 0.0
    %v140 = vand.u32 %v45, 4294901760
    %141 = vmatpush1.xpose.msra.mxu0 %v140
    %142 = vmatprep.subr.mxu0 0.0
    %v143 = vand.u32 %v44, 4294901760
    %144 = vmatpush1.xpose.msra.mxu0 %v143
    %145 = vmatprep.subr.mxu0 0.0
    %v146 = vand.u32 %v43, 4294901760
    %147 = vmatpush1.xpose.msra.mxu0 %v146
    %148 = vmatprep.subr.mxu0 0.0
    %v149 = vand.u32 %v74, 4294901760
    %150 = vmatpush2.xpose.msra.mxu0 %v149
    %151 = vmatprep.subr.mxu0 0.0
    %v152 = vand.u32 %v73, 4294901760
    %153 = vmatpush2.xpose.msra.mxu0 %v152
    %154 = vmatprep.subr.mxu0 0.0
    %v155 = vand.u32 %v72, 4294901760
    %156 = vmatpush2.xpose.msra.mxu0 %v155
    %157 = vmatprep.subr.mxu0 0.0
    %v158 = vand.u32 %v71, 4294901760
    %159 = vmatpush2.xpose.msra.mxu0 %v158
    %160 = vmatprep.subr.mxu0 0.0
    %v161 = vand.u32 %v70, 4294901760
    %162 = vmatpush2.xpose.msra.mxu0 %v161
    %163 = vmatprep.subr.mxu0 0.0
    %v164 = vand.u32 %v69, 4294901760
    %165 = vmatpush2.xpose.msra.mxu0 %v164
    %166 = vmatprep.subr.mxu0 0.0
    %v167 = vand.u32 %v68, 4294901760
    %168 = vmatpush2.xpose.msra.mxu0 %v167
    %169 = vmatprep.subr.mxu0 0.0
    %v170 = vand.u32 %v67, 4294901760
    %171 = vmatpush2.xpose.msra.mxu0 %v170
    %172 = vmatprep.subr.mxu0 0.0
    %v173 = vand.u32 %v66, 4294901760
    %174 = vmatpush2.xpose.msra.mxu0 %v173
    %175 = vmatprep.subr.mxu0 0.0
    %v176 = vand.u32 %v65, 4294901760
    %177 = vmatpush2.xpose.msra.mxu0 %v176
    %178 = vmatprep.subr.mxu0 0.0
    %v179 = vand.u32 %v64, 4294901760
    %180 = vmatpush2.xpose.msra.mxu0 %v179
    %181 = vmatprep.subr.mxu0 0.0
    %v182 = vand.u32 %v63, 4294901760
    %183 = vmatpush2.xpose.msra.mxu0 %v182
    %184 = vmatprep.subr.mxu0 0.0
    %v185 = vand.u32 %v62, 4294901760
    %186 = vmatpush2.xpose.msra.mxu0 %v185
    %187 = vmatprep.subr.mxu0 0.0
    %v188 = vand.u32 %v61, 4294901760
    %189 = vmatpush2.xpose.msra.mxu0 %v188
    %190 = vmatprep.subr.mxu0 0.0
    %v191 = vand.u32 %v60, 4294901760
    %192 = vmatpush2.xpose.msra.mxu0 %v191
    %193 = vmatprep.subr.mxu0 0.0
    %v194 = vand.u32 %v59, 4294901760
    %195 = vmatpush2.xpose.msra.mxu0 %v194
    %196 = vmatprep.mubr.f32.mxu0 0.0
    %v197 = vand.u32 %v99, 4294901760
    %v198 = vsub.f32 %v99, %v197
    %v199 = vand.u32 %v198, 4294901760
    %v200 = vsub.f32 %v198, %v199
    %v201 = vand.u32 %v200, 4294901760
    %202 = vmatmul.mubr.f32.gmra.mxu0 %v201
    %v203 = vpop.f32.mrf.mxu0
    %v204 = vadd.f32 0.0, %v203
    %v205 = vpop.f32.mrf.mxu0
    %v206 = vadd.f32 0.0, %v205
    %207 = vdwg.mxu0
    %208 = vmatprep.subr.mxu0 0.0
    %v209 = vand.u32 %v58, 4294901760
    %v210 = vsub.f32 %v58, %v209
    %v211 = vand.u32 %v210, 4294901760
    %v212 = vsub.f32 %v210, %v211
    %v213 = vand.u32 %v212, 4294901760
    %214 = vmatpush1.xpose.msra.mxu0 %v213
    %215 = vmatprep.subr.mxu0 0.0
    %v216 = vand.u32 %v57, 4294901760
    %v217 = vsub.f32 %v57, %v216
    %v218 = vand.u32 %v217, 4294901760
    %v219 = vsub.f32 %v217, %v218
    %v220 = vand.u32 %v219, 4294901760
    %221 = vmatpush1.xpose.msra.mxu0 %v220
    %222 = vmatprep.subr.mxu0 0.0
    %v223 = vand.u32 %v56, 4294901760
    %v224 = vsub.f32 %v56, %v223
    %v225 = vand.u32 %v224, 4294901760
    %v226 = vsub.f32 %v224, %v225
    %v227 = vand.u32 %v226, 4294901760
    %228 = vmatpush1.xpose.msra.mxu0 %v227
    %229 = vmatprep.subr.mxu0 0.0
    %v230 = vand.u32 %v55, 4294901760
    %v231 = vsub.f32 %v55, %v230
    %v232 = vand.u32 %v231, 4294901760
    %v233 = vsub.f32 %v231, %v232
    %v234 = vand.u32 %v233, 4294901760
    %235 = vmatpush1.xpose.msra.mxu0 %v234
    %236 = vmatprep.subr.mxu0 0.0
    %v237 = vand.u32 %v54, 4294901760
    %v238 = vsub.f32 %v54, %v237
    %v239 = vand.u32 %v238, 4294901760
    %v240 = vsub.f32 %v238, %v239
    %v241 = vand.u32 %v240, 4294901760
    %242 = vmatpush1.xpose.msra.mxu0 %v241
    %243 = vmatprep.subr.mxu0 0.0
    %v244 = vand.u32 %v53, 4294901760
    %v245 = vsub.f32 %v53, %v244
    %v246 = vand.u32 %v245, 4294901760
    %v247 = vsub.f32 %v245, %v246
    %v248 = vand.u32 %v247, 4294901760
    %249 = vmatpush1.xpose.msra.mxu0 %v248
    %250 = vmatprep.subr.mxu0 0.0
    %v251 = vand.u32 %v52, 4294901760
    %v252 = vsub.f32 %v52, %v251
    %v253 = vand.u32 %v252, 4294901760
    %v254 = vsub.f32 %v252, %v253
    %v255 = vand.u32 %v254, 4294901760
    %256 = vmatpush1.xpose.msra.mxu0 %v255
    %257 = vmatprep.subr.mxu0 0.0
    %v258 = vand.u32 %v51, 4294901760
    %v259 = vsub.f32 %v51, %v258
    %v260 = vand.u32 %v259, 4294901760
    %v261 = vsub.f32 %v259, %v260
    %v262 = vand.u32 %v261, 4294901760
    %263 = vmatpush1.xpose.msra.mxu0 %v262
    %264 = vmatprep.subr.mxu0 0.0
    %v265 = vand.u32 %v50, 4294901760
    %v266 = vsub.f32 %v50, %v265
    %v267 = vand.u32 %v266, 4294901760
    %v268 = vsub.f32 %v266, %v267
    %v269 = vand.u32 %v268, 4294901760
    %270 = vmatpush1.xpose.msra.mxu0 %v269
    %271 = vmatprep.subr.mxu0 0.0
    %v272 = vand.u32 %v49, 4294901760
    %v273 = vsub.f32 %v49, %v272
    %v274 = vand.u32 %v273, 4294901760
    %v275 = vsub.f32 %v273, %v274
    %v276 = vand.u32 %v275, 4294901760
    %277 = vmatpush1.xpose.msra.mxu0 %v276
    %278 = vmatprep.subr.mxu0 0.0
    %v279 = vand.u32 %v48, 4294901760
    %v280 = vsub.f32 %v48, %v279
    %v281 = vand.u32 %v280, 4294901760
    %v282 = vsub.f32 %v280, %v281
    %v283 = vand.u32 %v282, 4294901760
    %284 = vmatpush1.xpose.msra.mxu0 %v283
    %285 = vmatprep.subr.mxu0 0.0
    %v286 = vand.u32 %v47, 4294901760
    %v287 = vsub.f32 %v47, %v286
    %v288 = vand.u32 %v287, 4294901760
    %v289 = vsub.f32 %v287, %v288
    %v290 = vand.u32 %v289, 4294901760
    %291 = vmatpush1.xpose.msra.mxu0 %v290
    %292 = vmatprep.subr.mxu0 0.0
    %v293 = vand.u32 %v46, 4294901760
    %v294 = vsub.f32 %v46, %v293
    %v295 = vand.u32 %v294, 4294901760
    %v296 = vsub.f32 %v294, %v295
    %v297 = vand.u32 %v296, 4294901760
    %298 = vmatpush1.xpose.msra.mxu0 %v297
    %299 = vmatprep.subr.mxu0 0.0
    %v300 = vand.u32 %v45, 4294901760
    %v301 = vsub.f32 %v45, %v300
    %v302 = vand.u32 %v301, 4294901760
    %v303 = vsub.f32 %v301, %v302
    %v304 = vand.u32 %v303, 4294901760
    %305 = vmatpush1.xpose.msra.mxu0 %v304
    %306 = vmatprep.subr.mxu0 0.0
    %v307 = vand.u32 %v44, 4294901760
    %v308 = vsub.f32 %v44, %v307
    %v309 = vand.u32 %v308, 4294901760
    %v310 = vsub.f32 %v308, %v309
    %v311 = vand.u32 %v310, 4294901760
    %312 = vmatpush1.xpose.msra.mxu0 %v311
    %313 = vmatprep.subr.mxu0 0.0
    %v314 = vand.u32 %v43, 4294901760
    %v315 = vsub.f32 %v43, %v314
    %v316 = vand.u32 %v315, 4294901760
    %v317 = vsub.f32 %v315, %v316
    %v318 = vand.u32 %v317, 4294901760
    %319 = vmatpush1.xpose.msra.mxu0 %v318
    %320 = vmatprep.subr.mxu0 0.0
    %v321 = vand.u32 %v74, 4294901760
    %v322 = vsub.f32 %v74, %v321
    %v323 = vand.u32 %v322, 4294901760
    %v324 = vsub.f32 %v322, %v323
    %v325 = vand.u32 %v324, 4294901760
    %326 = vmatpush2.xpose.msra.mxu0 %v325
    %327 = vmatprep.subr.mxu0 0.0
    %v328 = vand.u32 %v73, 4294901760
    %v329 = vsub.f32 %v73, %v328
    %v330 = vand.u32 %v329, 4294901760
    %v331 = vsub.f32 %v329, %v330
    %v332 = vand.u32 %v331, 4294901760
    %333 = vmatpush2.xpose.msra.mxu0 %v332
    %334 = vmatprep.subr.mxu0 0.0
    %v335 = vand.u32 %v72, 4294901760
    %v336 = vsub.f32 %v72, %v335
    %v337 = vand.u32 %v336, 4294901760
    %v338 = vsub.f32 %v336, %v337
    %v339 = vand.u32 %v338, 4294901760
    %340 = vmatpush2.xpose.msra.mxu0 %v339
    %341 = vmatprep.subr.mxu0 0.0
    %v342 = vand.u32 %v71, 4294901760
    %v343 = vsub.f32 %v71, %v342
    %v344 = vand.u32 %v343, 4294901760
    %v345 = vsub.f32 %v343, %v344
    %v346 = vand.u32 %v345, 4294901760
    %347 = vmatpush2.xpose.msra.mxu0 %v346
    %348 = vmatprep.subr.mxu0 0.0
    %v349 = vand.u32 %v70, 4294901760
    %v350 = vsub.f32 %v70, %v349
    %v351 = vand.u32 %v350, 4294901760
    %v352 = vsub.f32 %v350, %v351
    %v353 = vand.u32 %v352, 4294901760
    %354 = vmatpush2.xpose.msra.mxu0 %v353
    %355 = vmatprep.subr.mxu0 0.0
    %v356 = vand.u32 %v69, 4294901760
    %v357 = vsub.f32 %v69, %v356
    %v358 = vand.u32 %v357, 4294901760
    %v359 = vsub.f32 %v357, %v358
    %v360 = vand.u32 %v359, 4294901760
    %361 = vmatpush2.xpose.msra.mxu0 %v360
    %362 = vmatprep.subr.mxu0 0.0
    %v363 = vand.u32 %v68, 4294901760
    %v364 = vsub.f32 %v68, %v363
    %v365 = vand.u32 %v364, 4294901760
    %v366 = vsub.f32 %v364, %v365
    %v367 = vand.u32 %v366, 4294901760
    %368 = vmatpush2.xpose.msra.mxu0 %v367
    %369 = vmatprep.subr.mxu0 0.0
    %v370 = vand.u32 %v67, 4294901760
    %v371 = vsub.f32 %v67, %v370
    %v372 = vand.u32 %v371, 4294901760
    %v373 = vsub.f32 %v371, %v372
    %v374 = vand.u32 %v373, 4294901760
    %375 = vmatpush2.xpose.msra.mxu0 %v374
    %376 = vmatprep.subr.mxu0 0.0
    %v377 = vand.u32 %v66, 4294901760
    %v378 = vsub.f32 %v66, %v377
    %v379 = vand.u32 %v378, 4294901760
    %v380 = vsub.f32 %v378, %v379
    %v381 = vand.u32 %v380, 4294901760
    %382 = vmatpush2.xpose.msra.mxu0 %v381
    %383 = vmatprep.subr.mxu0 0.0
    %v384 = vand.u32 %v65, 4294901760
    %v385 = vsub.f32 %v65, %v384
    %v386 = vand.u32 %v385, 4294901760
    %v387 = vsub.f32 %v385, %v386
    %v388 = vand.u32 %v387, 4294901760
    %389 = vmatpush2.xpose.msra.mxu0 %v388
    %390 = vmatprep.subr.mxu0 0.0
    %v391 = vand.u32 %v64, 4294901760
    %v392 = vsub.f32 %v64, %v391
    %v393 = vand.u32 %v392, 4294901760
    %v394 = vsub.f32 %v392, %v393
    %v395 = vand.u32 %v394, 4294901760
    %396 = vmatpush2.xpose.msra.mxu0 %v395
    %397 = vmatprep.subr.mxu0 0.0
    %v398 = vand.u32 %v63, 4294901760
    %v399 = vsub.f32 %v63, %v398
    %v400 = vand.u32 %v399, 4294901760
    %v401 = vsub.f32 %v399, %v400
    %v402 = vand.u32 %v401, 4294901760
    %403 = vmatpush2.xpose.msra.mxu0 %v402
    %404 = vmatprep.subr.mxu0 0.0
    %v405 = vand.u32 %v62, 4294901760
    %v406 = vsub.f32 %v62, %v405
    %v407 = vand.u32 %v406, 4294901760
    %v408 = vsub.f32 %v406, %v407
    %v409 = vand.u32 %v408, 4294901760
    %410 = vmatpush2.xpose.msra.mxu0 %v409
    %411 = vmatprep.subr.mxu0 0.0
    %v412 = vand.u32 %v61, 4294901760
    %v413 = vsub.f32 %v61, %v412
    %v414 = vand.u32 %v413, 4294901760
    %v415 = vsub.f32 %v413, %v414
    %v416 = vand.u32 %v415, 4294901760
    %417 = vmatpush2.xpose.msra.mxu0 %v416
    %418 = vmatprep.subr.mxu0 0.0
    %v419 = vand.u32 %v60, 4294901760
    %v420 = vsub.f32 %v60, %v419
    %v421 = vand.u32 %v420, 4294901760
    %v422 = vsub.f32 %v420, %v421
    %v423 = vand.u32 %v422, 4294901760
    %424 = vmatpush2.xpose.msra.mxu0 %v423
    %425 = vmatprep.subr.mxu0 0.0
    %v426 = vand.u32 %v59, 4294901760
    %v427 = vsub.f32 %v59, %v426
    %v428 = vand.u32 %v427, 4294901760
    %v429 = vsub.f32 %v427, %v428
    %v430 = vand.u32 %v429, 4294901760
    %431 = vmatpush2.xpose.msra.mxu0 %v430
    %432 = vmatprep.mubr.f32.mxu0 0.0
    %v433 = vand.u32 %v99, 4294901760
    %434 = vmatmul.mubr.f32.gmra.mxu0 %v433
    %v435 = vpop.f32.mrf.mxu0
    %v436 = vadd.f32 %v204, %v435
    %v437 = vpop.f32.mrf.mxu0
    %v438 = vadd.f32 %v206, %v437
    %439 = vdwg.mxu0
    %440 = vmatprep.subr.mxu0 0.0
    %v441 = vand.u32 %v58, 4294901760
    %v442 = vsub.f32 %v58, %v441
    %443 = vmatpush1.xpose.msra.mxu0 %v442
    %444 = vmatprep.subr.mxu0 0.0
    %v445 = vand.u32 %v57, 4294901760
    %v446 = vsub.f32 %v57, %v445
    %447 = vmatpush1.xpose.msra.mxu0 %v446
    %448 = vmatprep.subr.mxu0 0.0
    %v449 = vand.u32 %v56, 4294901760
    %v450 = vsub.f32 %v56, %v449
    %451 = vmatpush1.xpose.msra.mxu0 %v450
    %452 = vmatprep.subr.mxu0 0.0
    %v453 = vand.u32 %v55, 4294901760
    %v454 = vsub.f32 %v55, %v453
    %455 = vmatpush1.xpose.msra.mxu0 %v454
    %456 = vmatprep.subr.mxu0 0.0
    %v457 = vand.u32 %v54, 4294901760
    %v458 = vsub.f32 %v54, %v457
    %459 = vmatpush1.xpose.msra.mxu0 %v458
    %460 = vmatprep.subr.mxu0 0.0
    %v461 = vand.u32 %v53, 4294901760
    %v462 = vsub.f32 %v53, %v461
    %463 = vmatpush1.xpose.msra.mxu0 %v462
    %464 = vmatprep.subr.mxu0 0.0
    %v465 = vand.u32 %v52, 4294901760
    %v466 = vsub.f32 %v52, %v465
    %467 = vmatpush1.xpose.msra.mxu0 %v466
    %468 = vmatprep.subr.mxu0 0.0
    %v469 = vand.u32 %v51, 4294901760
    %v470 = vsub.f32 %v51, %v469
    %471 = vmatpush1.xpose.msra.mxu0 %v470
    %472 = vmatprep.subr.mxu0 0.0
    %v473 = vand.u32 %v50, 4294901760
    %v474 = vsub.f32 %v50, %v473
    %475 = vmatpush1.xpose.msra.mxu0 %v474
    %476 = vmatprep.subr.mxu0 0.0
    %v477 = vand.u32 %v49, 4294901760
    %v478 = vsub.f32 %v49, %v477
    %479 = vmatpush1.xpose.msra.mxu0 %v478
    %480 = vmatprep.subr.mxu0 0.0
    %v481 = vand.u32 %v48, 4294901760
    %v482 = vsub.f32 %v48, %v481
    %483 = vmatpush1.xpose.msra.mxu0 %v482
    %484 = vmatprep.subr.mxu0 0.0
    %v485 = vand.u32 %v47, 4294901760
    %v486 = vsub.f32 %v47, %v485
    %487 = vmatpush1.xpose.msra.mxu0 %v486
    %488 = vmatprep.subr.mxu0 0.0
    %v489 = vand.u32 %v46, 4294901760
    %v490 = vsub.f32 %v46, %v489
    %491 = vmatpush1.xpose.msra.mxu0 %v490
    %492 = vmatprep.subr.mxu0 0.0
    %v493 = vand.u32 %v45, 4294901760
    %v494 = vsub.f32 %v45, %v493
    %495 = vmatpush1.xpose.msra.mxu0 %v494
    %496 = vmatprep.subr.mxu0 0.0
    %v497 = vand.u32 %v44, 4294901760
    %v498 = vsub.f32 %v44, %v497
    %499 = vmatpush1.xpose.msra.mxu0 %v498
    %500 = vmatprep.subr.mxu0 0.0
    %v501 = vand.u32 %v43, 4294901760
    %v502 = vsub.f32 %v43, %v501
    %503 = vmatpush1.xpose.msra.mxu0 %v502
    %504 = vmatprep.subr.mxu0 0.0
    %v505 = vand.u32 %v74, 4294901760
    %v506 = vsub.f32 %v74, %v505
    %507 = vmatpush2.xpose.msra.mxu0 %v506
    %508 = vmatprep.subr.mxu0 0.0
    %v509 = vand.u32 %v73, 4294901760
    %v510 = vsub.f32 %v73, %v509
    %511 = vmatpush2.xpose.msra.mxu0 %v510
    %512 = vmatprep.subr.mxu0 0.0
    %v513 = vand.u32 %v72, 4294901760
    %v514 = vsub.f32 %v72, %v513
    %515 = vmatpush2.xpose.msra.mxu0 %v514
    %516 = vmatprep.subr.mxu0 0.0
    %v517 = vand.u32 %v71, 4294901760
    %v518 = vsub.f32 %v71, %v517
    %519 = vmatpush2.xpose.msra.mxu0 %v518
    %520 = vmatprep.subr.mxu0 0.0
    %v521 = vand.u32 %v70, 4294901760
    %v522 = vsub.f32 %v70, %v521
    %523 = vmatpush2.xpose.msra.mxu0 %v522
    %524 = vmatprep.subr.mxu0 0.0
    %v525 = vand.u32 %v69, 4294901760
    %v526 = vsub.f32 %v69, %v525
    %527 = vmatpush2.xpose.msra.mxu0 %v526
    %528 = vmatprep.subr.mxu0 0.0
    %v529 = vand.u32 %v68, 4294901760
    %v530 = vsub.f32 %v68, %v529
    %531 = vmatpush2.xpose.msra.mxu0 %v530
    %532 = vmatprep.subr.mxu0 0.0
    %v533 = vand.u32 %v67, 4294901760
    %v534 = vsub.f32 %v67, %v533
    %535 = vmatpush2.xpose.msra.mxu0 %v534
    %536 = vmatprep.subr.mxu0 0.0
    %v537 = vand.u32 %v66, 4294901760
    %v538 = vsub.f32 %v66, %v537
    %539 = vmatpush2.xpose.msra.mxu0 %v538
    %540 = vmatprep.subr.mxu0 0.0
    %v541 = vand.u32 %v65, 4294901760
    %v542 = vsub.f32 %v65, %v541
    %543 = vmatpush2.xpose.msra.mxu0 %v542
    %544 = vmatprep.subr.mxu0 0.0
    %v545 = vand.u32 %v64, 4294901760
    %v546 = vsub.f32 %v64, %v545
    %547 = vmatpush2.xpose.msra.mxu0 %v546
    %548 = vmatprep.subr.mxu0 0.0
    %v549 = vand.u32 %v63, 4294901760
    %v550 = vsub.f32 %v63, %v549
    %551 = vmatpush2.xpose.msra.mxu0 %v550
    %552 = vmatprep.subr.mxu0 0.0
    %v553 = vand.u32 %v62, 4294901760
    %v554 = vsub.f32 %v62, %v553
    %555 = vmatpush2.xpose.msra.mxu0 %v554
    %556 = vmatprep.subr.mxu0 0.0
    %v557 = vand.u32 %v61, 4294901760
    %v558 = vsub.f32 %v61, %v557
    %559 = vmatpush2.xpose.msra.mxu0 %v558
    %560 = vmatprep.subr.mxu0 0.0
    %v561 = vand.u32 %v60, 4294901760
    %v562 = vsub.f32 %v60, %v561
    %563 = vmatpush2.xpose.msra.mxu0 %v562
    %564 = vmatprep.subr.mxu0 0.0
    %v565 = vand.u32 %v59, 4294901760
    %v566 = vsub.f32 %v59, %v565
    %567 = vmatpush2.xpose.msra.mxu0 %v566
    %568 = vmatprep.mubr.f32.mxu0 0.0
    %v569 = vand.u32 %v99, 4294901760
    %v570 = vsub.f32 %v99, %v569
    %571 = vmatmul.mubr.f32.gmra.mxu0 %v570
    %v572 = vpop.f32.mrf.mxu0
    %v573 = vadd.f32 %v436, %v572
    %v574 = vpop.f32.mrf.mxu0
    %v575 = vadd.f32 %v438, %v574
    %576 = vdwg.mxu0
    %577 = vmatprep.subr.mxu0 0.0
    %v578 = vand.u32 %v58, 4294901760
    %579 = vmatpush1.xpose.msra.mxu0 %v578
    %580 = vmatprep.subr.mxu0 0.0
    %v581 = vand.u32 %v57, 4294901760
    %582 = vmatpush1.xpose.msra.mxu0 %v581
    %583 = vmatprep.subr.mxu0 0.0
    %v584 = vand.u32 %v56, 4294901760
    %585 = vmatpush1.xpose.msra.mxu0 %v584
    %586 = vmatprep.subr.mxu0 0.0
    %v587 = vand.u32 %v55, 4294901760
    %588 = vmatpush1.xpose.msra.mxu0 %v587
    %589 = vmatprep.subr.mxu0 0.0
    %v590 = vand.u32 %v54, 4294901760
    %591 = vmatpush1.xpose.msra.mxu0 %v590
    %592 = vmatprep.subr.mxu0 0.0
    %v593 = vand.u32 %v53, 4294901760
    %594 = vmatpush1.xpose.msra.mxu0 %v593
    %595 = vmatprep.subr.mxu0 0.0
    %v596 = vand.u32 %v52, 4294901760
    %597 = vmatpush1.xpose.msra.mxu0 %v596
    %598 = vmatprep.subr.mxu0 0.0
    %v599 = vand.u32 %v51, 4294901760
    %600 = vmatpush1.xpose.msra.mxu0 %v599
    %601 = vmatprep.subr.mxu0 0.0
    %v602 = vand.u32 %v50, 4294901760
    %603 = vmatpush1.xpose.msra.mxu0 %v602
    %604 = vmatprep.subr.mxu0 0.0
    %v605 = vand.u32 %v49, 4294901760
    %606 = vmatpush1.xpose.msra.mxu0 %v605
    %607 = vmatprep.subr.mxu0 0.0
    %v608 = vand.u32 %v48, 4294901760
    %609 = vmatpush1.xpose.msra.mxu0 %v608
    %610 = vmatprep.subr.mxu0 0.0
    %v611 = vand.u32 %v47, 4294901760
    %612 = vmatpush1.xpose.msra.mxu0 %v611
    %613 = vmatprep.subr.mxu0 0.0
    %v614 = vand.u32 %v46, 4294901760
    %615 = vmatpush1.xpose.msra.mxu0 %v614
    %616 = vmatprep.subr.mxu0 0.0
    %v617 = vand.u32 %v45, 4294901760
    %618 = vmatpush1.xpose.msra.mxu0 %v617
    %619 = vmatprep.subr.mxu0 0.0
    %v620 = vand.u32 %v44, 4294901760
    %621 = vmatpush1.xpose.msra.mxu0 %v620
    %622 = vmatprep.subr.mxu0 0.0
    %v623 = vand.u32 %v43, 4294901760
    %624 = vmatpush1.xpose.msra.mxu0 %v623
    %625 = vmatprep.subr.mxu0 0.0
    %v626 = vand.u32 %v74, 4294901760
    %627 = vmatpush2.xpose.msra.mxu0 %v626
    %628 = vmatprep.subr.mxu0 0.0
    %v629 = vand.u32 %v73, 4294901760
    %630 = vmatpush2.xpose.msra.mxu0 %v629
    %631 = vmatprep.subr.mxu0 0.0
    %v632 = vand.u32 %v72, 4294901760
    %633 = vmatpush2.xpose.msra.mxu0 %v632
    %634 = vmatprep.subr.mxu0 0.0
    %v635 = vand.u32 %v71, 4294901760
    %636 = vmatpush2.xpose.msra.mxu0 %v635
    %637 = vmatprep.subr.mxu0 0.0
    %v638 = vand.u32 %v70, 4294901760
    %639 = vmatpush2.xpose.msra.mxu0 %v638
    %640 = vmatprep.subr.mxu0 0.0
    %v641 = vand.u32 %v69, 4294901760
    %642 = vmatpush2.xpose.msra.mxu0 %v641
    %643 = vmatprep.subr.mxu0 0.0
    %v644 = vand.u32 %v68, 4294901760
    %645 = vmatpush2.xpose.msra.mxu0 %v644
    %646 = vmatprep.subr.mxu0 0.0
    %v647 = vand.u32 %v67, 4294901760
    %648 = vmatpush2.xpose.msra.mxu0 %v647
    %649 = vmatprep.subr.mxu0 0.0
    %v650 = vand.u32 %v66, 4294901760
    %651 = vmatpush2.xpose.msra.mxu0 %v650
    %652 = vmatprep.subr.mxu0 0.0
    %v653 = vand.u32 %v65, 4294901760
    %654 = vmatpush2.xpose.msra.mxu0 %v653
    %655 = vmatprep.subr.mxu0 0.0
    %v656 = vand.u32 %v64, 4294901760
    %657 = vmatpush2.xpose.msra.mxu0 %v656
    %658 = vmatprep.subr.mxu0 0.0
    %v659 = vand.u32 %v63, 4294901760
    %660 = vmatpush2.xpose.msra.mxu0 %v659
    %661 = vmatprep.subr.mxu0 0.0
    %v662 = vand.u32 %v62, 4294901760
    %663 = vmatpush2.xpose.msra.mxu0 %v662
    %664 = vmatprep.subr.mxu0 0.0
    %v665 = vand.u32 %v61, 4294901760
    %666 = vmatpush2.xpose.msra.mxu0 %v665
    %667 = vmatprep.subr.mxu0 0.0
    %v668 = vand.u32 %v60, 4294901760
    %669 = vmatpush2.xpose.msra.mxu0 %v668
    %670 = vmatprep.subr.mxu0 0.0
    %v671 = vand.u32 %v59, 4294901760
    %672 = vmatpush2.xpose.msra.mxu0 %v671
    %673 = vmatprep.mubr.f32.mxu0 0.0
    %v674 = vand.u32 %v99, 4294901760
    %v675 = vsub.f32 %v99, %v674
    %v676 = vand.u32 %v675, 4294901760
    %677 = vmatmul.mubr.f32.gmra.mxu0 %v676
    %v678 = vpop.f32.mrf.mxu0
    %v679 = vadd.f32 %v573, %v678
    %v680 = vpop.f32.mrf.mxu0
    %v681 = vadd.f32 %v575, %v680
    %682 = vdwg.mxu0
    %683 = vmatprep.subr.mxu0 0.0
    %v684 = vand.u32 %v58, 4294901760
    %v685 = vsub.f32 %v58, %v684
    %v686 = vand.u32 %v685, 4294901760
    %687 = vmatpush1.xpose.msra.mxu0 %v686
    %688 = vmatprep.subr.mxu0 0.0
    %v689 = vand.u32 %v57, 4294901760
    %v690 = vsub.f32 %v57, %v689
    %v691 = vand.u32 %v690, 4294901760
    %692 = vmatpush1.xpose.msra.mxu0 %v691
    %693 = vmatprep.subr.mxu0 0.0
    %v694 = vand.u32 %v56, 4294901760
    %v695 = vsub.f32 %v56, %v694
    %v696 = vand.u32 %v695, 4294901760
    %697 = vmatpush1.xpose.msra.mxu0 %v696
    %698 = vmatprep.subr.mxu0 0.0
    %v699 = vand.u32 %v55, 4294901760
    %v700 = vsub.f32 %v55, %v699
    %v701 = vand.u32 %v700, 4294901760
    %702 = vmatpush1.xpose.msra.mxu0 %v701
    %703 = vmatprep.subr.mxu0 0.0
    %v704 = vand.u32 %v54, 4294901760
    %v705 = vsub.f32 %v54, %v704
    %v706 = vand.u32 %v705, 4294901760
    %707 = vmatpush1.xpose.msra.mxu0 %v706
    %708 = vmatprep.subr.mxu0 0.0
    %v709 = vand.u32 %v53, 4294901760
    %v710 = vsub.f32 %v53, %v709
    %v711 = vand.u32 %v710, 4294901760
    %712 = vmatpush1.xpose.msra.mxu0 %v711
    %713 = vmatprep.subr.mxu0 0.0
    %v714 = vand.u32 %v52, 4294901760
    %v715 = vsub.f32 %v52, %v714
    %v716 = vand.u32 %v715, 4294901760
    %717 = vmatpush1.xpose.msra.mxu0 %v716
    %718 = vmatprep.subr.mxu0 0.0
    %v719 = vand.u32 %v51, 4294901760
    %v720 = vsub.f32 %v51, %v719
    %v721 = vand.u32 %v720, 4294901760
    %722 = vmatpush1.xpose.msra.mxu0 %v721
    %723 = vmatprep.subr.mxu0 0.0
    %v724 = vand.u32 %v50, 4294901760
    %v725 = vsub.f32 %v50, %v724
    %v726 = vand.u32 %v725, 4294901760
    %727 = vmatpush1.xpose.msra.mxu0 %v726
    %728 = vmatprep.subr.mxu0 0.0
    %v729 = vand.u32 %v49, 4294901760
    %v730 = vsub.f32 %v49, %v729
    %v731 = vand.u32 %v730, 4294901760
    %732 = vmatpush1.xpose.msra.mxu0 %v731
    %733 = vmatprep.subr.mxu0 0.0
    %v734 = vand.u32 %v48, 4294901760
    %v735 = vsub.f32 %v48, %v734
    %v736 = vand.u32 %v735, 4294901760
    %737 = vmatpush1.xpose.msra.mxu0 %v736
    %738 = vmatprep.subr.mxu0 0.0
    %v739 = vand.u32 %v47, 4294901760
    %v740 = vsub.f32 %v47, %v739
    %v741 = vand.u32 %v740, 4294901760
    %742 = vmatpush1.xpose.msra.mxu0 %v741
    %743 = vmatprep.subr.mxu0 0.0
    %v744 = vand.u32 %v46, 4294901760
    %v745 = vsub.f32 %v46, %v744
    %v746 = vand.u32 %v745, 4294901760
    %747 = vmatpush1.xpose.msra.mxu0 %v746
    %748 = vmatprep.subr.mxu0 0.0
    %v749 = vand.u32 %v45, 4294901760
    %v750 = vsub.f32 %v45, %v749
    %v751 = vand.u32 %v750, 4294901760
    %752 = vmatpush1.xpose.msra.mxu0 %v751
    %753 = vmatprep.subr.mxu0 0.0
    %v754 = vand.u32 %v44, 4294901760
    %v755 = vsub.f32 %v44, %v754
    %v756 = vand.u32 %v755, 4294901760
    %757 = vmatpush1.xpose.msra.mxu0 %v756
    %758 = vmatprep.subr.mxu0 0.0
    %v759 = vand.u32 %v43, 4294901760
    %v760 = vsub.f32 %v43, %v759
    %v761 = vand.u32 %v760, 4294901760
    %762 = vmatpush1.xpose.msra.mxu0 %v761
    %763 = vmatprep.subr.mxu0 0.0
    %v764 = vand.u32 %v74, 4294901760
    %v765 = vsub.f32 %v74, %v764
    %v766 = vand.u32 %v765, 4294901760
    %767 = vmatpush2.xpose.msra.mxu0 %v766
    %768 = vmatprep.subr.mxu0 0.0
    %v769 = vand.u32 %v73, 4294901760
    %v770 = vsub.f32 %v73, %v769
    %v771 = vand.u32 %v770, 4294901760
    %772 = vmatpush2.xpose.msra.mxu0 %v771
    %773 = vmatprep.subr.mxu0 0.0
    %v774 = vand.u32 %v72, 4294901760
    %v775 = vsub.f32 %v72, %v774
    %v776 = vand.u32 %v775, 4294901760
    %777 = vmatpush2.xpose.msra.mxu0 %v776
    %778 = vmatprep.subr.mxu0 0.0
    %v779 = vand.u32 %v71, 4294901760
    %v780 = vsub.f32 %v71, %v779
    %v781 = vand.u32 %v780, 4294901760
    %782 = vmatpush2.xpose.msra.mxu0 %v781
    %783 = vmatprep.subr.mxu0 0.0
    %v784 = vand.u32 %v70, 4294901760
    %v785 = vsub.f32 %v70, %v784
    %v786 = vand.u32 %v785, 4294901760
    %787 = vmatpush2.xpose.msra.mxu0 %v786
    %788 = vmatprep.subr.mxu0 0.0
    %v789 = vand.u32 %v69, 4294901760
    %v790 = vsub.f32 %v69, %v789
    %v791 = vand.u32 %v790, 4294901760
    %792 = vmatpush2.xpose.msra.mxu0 %v791
    %793 = vmatprep.subr.mxu0 0.0
    %v794 = vand.u32 %v68, 4294901760
    %v795 = vsub.f32 %v68, %v794
    %v796 = vand.u32 %v795, 4294901760
    %797 = vmatpush2.xpose.msra.mxu0 %v796
    %798 = vmatprep.subr.mxu0 0.0
    %v799 = vand.u32 %v67, 4294901760
    %v800 = vsub.f32 %v67, %v799
    %v801 = vand.u32 %v800, 4294901760
    %802 = vmatpush2.xpose.msra.mxu0 %v801
    %803 = vmatprep.subr.mxu0 0.0
    %v804 = vand.u32 %v66, 4294901760
    %v805 = vsub.f32 %v66, %v804
    %v806 = vand.u32 %v805, 4294901760
    %807 = vmatpush2.xpose.msra.mxu0 %v806
    %808 = vmatprep.subr.mxu0 0.0
    %v809 = vand.u32 %v65, 4294901760
    %v810 = vsub.f32 %v65, %v809
    %v811 = vand.u32 %v810, 4294901760
    %812 = vmatpush2.xpose.msra.mxu0 %v811
    %813 = vmatprep.subr.mxu0 0.0
    %v814 = vand.u32 %v64, 4294901760
    %v815 = vsub.f32 %v64, %v814
    %v816 = vand.u32 %v815, 4294901760
    %817 = vmatpush2.xpose.msra.mxu0 %v816
    %818 = vmatprep.subr.mxu0 0.0
    %v819 = vand.u32 %v63, 4294901760
    %v820 = vsub.f32 %v63, %v819
    %v821 = vand.u32 %v820, 4294901760
    %822 = vmatpush2.xpose.msra.mxu0 %v821
    %823 = vmatprep.subr.mxu0 0.0
    %v824 = vand.u32 %v62, 4294901760
    %v825 = vsub.f32 %v62, %v824
    %v826 = vand.u32 %v825, 4294901760
    %827 = vmatpush2.xpose.msra.mxu0 %v826
    %828 = vmatprep.subr.mxu0 0.0
    %v829 = vand.u32 %v61, 4294901760
    %v830 = vsub.f32 %v61, %v829
    %v831 = vand.u32 %v830, 4294901760
    %832 = vmatpush2.xpose.msra.mxu0 %v831
    %833 = vmatprep.subr.mxu0 0.0
    %v834 = vand.u32 %v60, 4294901760
    %v835 = vsub.f32 %v60, %v834
    %v836 = vand.u32 %v835, 4294901760
    %837 = vmatpush2.xpose.msra.mxu0 %v836
    %838 = vmatprep.subr.mxu0 0.0
    %v839 = vand.u32 %v59, 4294901760
    %v840 = vsub.f32 %v59, %v839
    %v841 = vand.u32 %v840, 4294901760
    %842 = vmatpush2.xpose.msra.mxu0 %v841
    %843 = vmatprep.mubr.f32.mxu0 0.0
    %v844 = vand.u32 %v99, 4294901760
    %845 = vmatmul.mubr.f32.gmra.mxu0 %v844
    %v846 = vpop.f32.mrf.mxu0
    %v847 = vadd.f32 %v679, %v846
    %v848 = vpop.f32.mrf.mxu0
    %v849 = vadd.f32 %v681, %v848
    %850 = vdwg.mxu0
    %851 = vmatprep.subr.mxu0 0.0
    %v852 = vand.u32 %v58, 4294901760
    %853 = vmatpush1.xpose.msra.mxu0 %v852
    %854 = vmatprep.subr.mxu0 0.0
    %v855 = vand.u32 %v57, 4294901760
    %856 = vmatpush1.xpose.msra.mxu0 %v855
    %857 = vmatprep.subr.mxu0 0.0
    %v858 = vand.u32 %v56, 4294901760
    %859 = vmatpush1.xpose.msra.mxu0 %v858
    %860 = vmatprep.subr.mxu0 0.0
    %v861 = vand.u32 %v55, 4294901760
    %862 = vmatpush1.xpose.msra.mxu0 %v861
    %863 = vmatprep.subr.mxu0 0.0
    %v864 = vand.u32 %v54, 4294901760
    %865 = vmatpush1.xpose.msra.mxu0 %v864
    %866 = vmatprep.subr.mxu0 0.0
    %v867 = vand.u32 %v53, 4294901760
    %868 = vmatpush1.xpose.msra.mxu0 %v867
    %869 = vmatprep.subr.mxu0 0.0
    %v870 = vand.u32 %v52, 4294901760
    %871 = vmatpush1.xpose.msra.mxu0 %v870
    %872 = vmatprep.subr.mxu0 0.0
    %v873 = vand.u32 %v51, 4294901760
    %874 = vmatpush1.xpose.msra.mxu0 %v873
    %875 = vmatprep.subr.mxu0 0.0
    %v876 = vand.u32 %v50, 4294901760
    %877 = vmatpush1.xpose.msra.mxu0 %v876
    %878 = vmatprep.subr.mxu0 0.0
    %v879 = vand.u32 %v49, 4294901760
    %880 = vmatpush1.xpose.msra.mxu0 %v879
    %881 = vmatprep.subr.mxu0 0.0
    %v882 = vand.u32 %v48, 4294901760
    %883 = vmatpush1.xpose.msra.mxu0 %v882
    %884 = vmatprep.subr.mxu0 0.0
    %v885 = vand.u32 %v47, 4294901760
    %886 = vmatpush1.xpose.msra.mxu0 %v885
    %887 = vmatprep.subr.mxu0 0.0
    %v888 = vand.u32 %v46, 4294901760
    %889 = vmatpush1.xpose.msra.mxu0 %v888
    %890 = vmatprep.subr.mxu0 0.0
    %v891 = vand.u32 %v45, 4294901760
    %892 = vmatpush1.xpose.msra.mxu0 %v891
    %893 = vmatprep.subr.mxu0 0.0
    %v894 = vand.u32 %v44, 4294901760
    %895 = vmatpush1.xpose.msra.mxu0 %v894
    %896 = vmatprep.subr.mxu0 0.0
    %v897 = vand.u32 %v43, 4294901760
    %898 = vmatpush1.xpose.msra.mxu0 %v897
    %899 = vmatprep.subr.mxu0 0.0
    %v900 = vand.u32 %v74, 4294901760
    %901 = vmatpush2.xpose.msra.mxu0 %v900
    %902 = vmatprep.subr.mxu0 0.0
    %v903 = vand.u32 %v73, 4294901760
    %904 = vmatpush2.xpose.msra.mxu0 %v903
    %905 = vmatprep.subr.mxu0 0.0
    %v906 = vand.u32 %v72, 4294901760
    %907 = vmatpush2.xpose.msra.mxu0 %v906
    %908 = vmatprep.subr.mxu0 0.0
    %v909 = vand.u32 %v71, 4294901760
    %910 = vmatpush2.xpose.msra.mxu0 %v909
    %911 = vmatprep.subr.mxu0 0.0
    %v912 = vand.u32 %v70, 4294901760
    %913 = vmatpush2.xpose.msra.mxu0 %v912
    %914 = vmatprep.subr.mxu0 0.0
    %v915 = vand.u32 %v69, 4294901760
    %916 = vmatpush2.xpose.msra.mxu0 %v915
    %917 = vmatprep.subr.mxu0 0.0
    %v918 = vand.u32 %v68, 4294901760
    %919 = vmatpush2.xpose.msra.mxu0 %v918
    %920 = vmatprep.subr.mxu0 0.0
    %v921 = vand.u32 %v67, 4294901760
    %922 = vmatpush2.xpose.msra.mxu0 %v921
    %923 = vmatprep.subr.mxu0 0.0
    %v924 = vand.u32 %v66, 4294901760
    %925 = vmatpush2.xpose.msra.mxu0 %v924
    %926 = vmatprep.subr.mxu0 0.0
    %v927 = vand.u32 %v65, 4294901760
    %928 = vmatpush2.xpose.msra.mxu0 %v927
    %929 = vmatprep.subr.mxu0 0.0
    %v930 = vand.u32 %v64, 4294901760
    %931 = vmatpush2.xpose.msra.mxu0 %v930
    %932 = vmatprep.subr.mxu0 0.0
    %v933 = vand.u32 %v63, 4294901760
    %934 = vmatpush2.xpose.msra.mxu0 %v933
    %935 = vmatprep.subr.mxu0 0.0
    %v936 = vand.u32 %v62, 4294901760
    %937 = vmatpush2.xpose.msra.mxu0 %v936
    %938 = vmatprep.subr.mxu0 0.0
    %v939 = vand.u32 %v61, 4294901760
    %940 = vmatpush2.xpose.msra.mxu0 %v939
    %941 = vmatprep.subr.mxu0 0.0
    %v942 = vand.u32 %v60, 4294901760
    %943 = vmatpush2.xpose.msra.mxu0 %v942
    %944 = vmatprep.subr.mxu0 0.0
    %v945 = vand.u32 %v59, 4294901760
    %946 = vmatpush2.xpose.msra.mxu0 %v945
    %947 = vmatprep.mubr.f32.mxu0 0.0
    %v948 = vand.u32 %v99, 4294901760
    %949 = vmatmul.mubr.f32.gmra.mxu0 %v948
    %v950 = vpop.f32.mrf.mxu0
    %v951 = vadd.f32 %v847, %v950
    %v952 = vpop.f32.mrf.mxu0
    %v953 = vadd.f32 %v849, %v952
    %954 = vdwg.mxu0
    %955 = vmatprep.subr.mxu0 0.0
    %v956 = vand.u32 %v90, 4294901760
    %957 = vmatpush1.xpose.msra.mxu0 %v956
    %958 = vmatprep.subr.mxu0 0.0
    %v959 = vand.u32 %v89, 4294901760
    %960 = vmatpush1.xpose.msra.mxu0 %v959
    %961 = vmatprep.subr.mxu0 0.0
    %v962 = vand.u32 %v88, 4294901760
    %963 = vmatpush1.xpose.msra.mxu0 %v962
    %964 = vmatprep.subr.mxu0 0.0
    %v965 = vand.u32 %v87, 4294901760
    %966 = vmatpush1.xpose.msra.mxu0 %v965
    %967 = vmatprep.subr.mxu0 0.0
    %v968 = vand.u32 %v86, 4294901760
    %969 = vmatpush1.xpose.msra.mxu0 %v968
    %970 = vmatprep.subr.mxu0 0.0
    %v971 = vand.u32 %v85, 4294901760
    %972 = vmatpush1.xpose.msra.mxu0 %v971
    %973 = vmatprep.subr.mxu0 0.0
    %v974 = vand.u32 %v84, 4294901760
    %975 = vmatpush1.xpose.msra.mxu0 %v974
    %976 = vmatprep.subr.mxu0 0.0
    %v977 = vand.u32 %v83, 4294901760
    %978 = vmatpush1.xpose.msra.mxu0 %v977
    %979 = vmatprep.subr.mxu0 0.0
    %v980 = vand.u32 %v82, 4294901760
    %981 = vmatpush1.xpose.msra.mxu0 %v980
    %982 = vmatprep.subr.mxu0 0.0
    %v983 = vand.u32 %v81, 4294901760
    %984 = vmatpush1.xpose.msra.mxu0 %v983
    %985 = vmatprep.subr.mxu0 0.0
    %v986 = vand.u32 %v80, 4294901760
    %987 = vmatpush1.xpose.msra.mxu0 %v986
    %988 = vmatprep.subr.mxu0 0.0
    %v989 = vand.u32 %v79, 4294901760
    %990 = vmatpush1.xpose.msra.mxu0 %v989
    %991 = vmatprep.subr.mxu0 0.0
    %v992 = vand.u32 %v78, 4294901760
    %993 = vmatpush1.xpose.msra.mxu0 %v992
    %994 = vmatprep.subr.mxu0 0.0
    %v995 = vand.u32 %v77, 4294901760
    %996 = vmatpush1.xpose.msra.mxu0 %v995
    %997 = vmatprep.subr.mxu0 0.0
    %v998 = vand.u32 %v76, 4294901760
    %999 = vmatpush1.xpose.msra.mxu0 %v998
    %1000 = vmatprep.subr.mxu0 0.0
    %v1001 = vand.u32 %v75, 4294901760
    %1002 = vmatpush1.xpose.msra.mxu0 %v1001
    %1003 = vmatprep.subr.mxu0 0.0
    %1004 = vmatpush2.xpose.msra.mxu0 0.0
    %1005 = vmatprep.subr.mxu0 0.0
    %1006 = vmatpush2.xpose.msra.mxu0 0.0
    %1007 = vmatprep.subr.mxu0 0.0
    %1008 = vmatpush2.xpose.msra.mxu0 0.0
    %1009 = vmatprep.subr.mxu0 0.0
    %1010 = vmatpush2.xpose.msra.mxu0 0.0
    %1011 = vmatprep.subr.mxu0 0.0
    %1012 = vmatpush2.xpose.msra.mxu0 0.0
    %1013 = vmatprep.subr.mxu0 0.0
    %1014 = vmatpush2.xpose.msra.mxu0 0.0
    %1015 = vmatprep.subr.mxu0 0.0
    %1016 = vmatpush2.xpose.msra.mxu0 0.0
    %1017 = vmatprep.subr.mxu0 0.0
    %1018 = vmatpush2.xpose.msra.mxu0 0.0
    %1019 = vmatprep.subr.mxu0 0.0
    %1020 = vmatpush2.xpose.msra.mxu0 0.0
    %1021 = vmatprep.subr.mxu0 0.0
    %1022 = vmatpush2.xpose.msra.mxu0 0.0
    %1023 = vmatprep.subr.mxu0 0.0
    %1024 = vmatpush2.xpose.msra.mxu0 0.0
    %1025 = vmatprep.subr.mxu0 0.0
    %1026 = vmatpush2.xpose.msra.mxu0 0.0
    %1027 = vmatprep.subr.mxu0 0.0
    %1028 = vmatpush2.xpose.msra.mxu0 0.0
    %1029 = vmatprep.subr.mxu0 0.0
    %1030 = vmatpush2.xpose.msra.mxu0 0.0
    %1031 = vmatprep.subr.mxu0 0.0
    %1032 = vmatpush2.xpose.msra.mxu0 0.0
    %1033 = vmatprep.subr.mxu0 0.0
    %1034 = vmatpush2.xpose.msra.mxu0 0.0
    %1035 = vmatprep.mubr.f32.mxu0 0.0
    %v1036 = vand.u32 %v99, 4294901760
    %v1037 = vsub.f32 %v99, %v1036
    %v1038 = vand.u32 %v1037, 4294901760
    %v1039 = vsub.f32 %v1037, %v1038
    %v1040 = vand.u32 %v1039, 4294901760
    %1041 = vmatmul.mubr.f32.gmra.mxu0 %v1040
    %v1042 = vpop.f32.mrf.mxu0
    %v1043 = vadd.f32 0.0, %v1042
    %v1044 = vpop.f32.mrf.mxu0
    %1045 = vdwg.mxu0
    %1046 = vmatprep.subr.mxu0 0.0
    %v1047 = vand.u32 %v90, 4294901760
    %v1048 = vsub.f32 %v90, %v1047
    %v1049 = vand.u32 %v1048, 4294901760
    %v1050 = vsub.f32 %v1048, %v1049
    %v1051 = vand.u32 %v1050, 4294901760
    %1052 = vmatpush1.xpose.msra.mxu0 %v1051
    %1053 = vmatprep.subr.mxu0 0.0
    %v1054 = vand.u32 %v89, 4294901760
    %v1055 = vsub.f32 %v89, %v1054
    %v1056 = vand.u32 %v1055, 4294901760
    %v1057 = vsub.f32 %v1055, %v1056
    %v1058 = vand.u32 %v1057, 4294901760
    %1059 = vmatpush1.xpose.msra.mxu0 %v1058
    %1060 = vmatprep.subr.mxu0 0.0
    %v1061 = vand.u32 %v88, 4294901760
    %v1062 = vsub.f32 %v88, %v1061
    %v1063 = vand.u32 %v1062, 4294901760
    %v1064 = vsub.f32 %v1062, %v1063
    %v1065 = vand.u32 %v1064, 4294901760
    %1066 = vmatpush1.xpose.msra.mxu0 %v1065
    %1067 = vmatprep.subr.mxu0 0.0
    %v1068 = vand.u32 %v87, 4294901760
    %v1069 = vsub.f32 %v87, %v1068
    %v1070 = vand.u32 %v1069, 4294901760
    %v1071 = vsub.f32 %v1069, %v1070
    %v1072 = vand.u32 %v1071, 4294901760
    %1073 = vmatpush1.xpose.msra.mxu0 %v1072
    %1074 = vmatprep.subr.mxu0 0.0
    %v1075 = vand.u32 %v86, 4294901760
    %v1076 = vsub.f32 %v86, %v1075
    %v1077 = vand.u32 %v1076, 4294901760
    %v1078 = vsub.f32 %v1076, %v1077
    %v1079 = vand.u32 %v1078, 4294901760
    %1080 = vmatpush1.xpose.msra.mxu0 %v1079
    %1081 = vmatprep.subr.mxu0 0.0
    %v1082 = vand.u32 %v85, 4294901760
    %v1083 = vsub.f32 %v85, %v1082
    %v1084 = vand.u32 %v1083, 4294901760
    %v1085 = vsub.f32 %v1083, %v1084
    %v1086 = vand.u32 %v1085, 4294901760
    %1087 = vmatpush1.xpose.msra.mxu0 %v1086
    %1088 = vmatprep.subr.mxu0 0.0
    %v1089 = vand.u32 %v84, 4294901760
    %v1090 = vsub.f32 %v84, %v1089
    %v1091 = vand.u32 %v1090, 4294901760
    %v1092 = vsub.f32 %v1090, %v1091
    %v1093 = vand.u32 %v1092, 4294901760
    %1094 = vmatpush1.xpose.msra.mxu0 %v1093
    %1095 = vmatprep.subr.mxu0 0.0
    %v1096 = vand.u32 %v83, 4294901760
    %v1097 = vsub.f32 %v83, %v1096
    %v1098 = vand.u32 %v1097, 4294901760
    %v1099 = vsub.f32 %v1097, %v1098
    %v1100 = vand.u32 %v1099, 4294901760
    %1101 = vmatpush1.xpose.msra.mxu0 %v1100
    %1102 = vmatprep.subr.mxu0 0.0
    %v1103 = vand.u32 %v82, 4294901760
    %v1104 = vsub.f32 %v82, %v1103
    %v1105 = vand.u32 %v1104, 4294901760
    %v1106 = vsub.f32 %v1104, %v1105
    %v1107 = vand.u32 %v1106, 4294901760
    %1108 = vmatpush1.xpose.msra.mxu0 %v1107
    %1109 = vmatprep.subr.mxu0 0.0
    %v1110 = vand.u32 %v81, 4294901760
    %v1111 = vsub.f32 %v81, %v1110
    %v1112 = vand.u32 %v1111, 4294901760
    %v1113 = vsub.f32 %v1111, %v1112
    %v1114 = vand.u32 %v1113, 4294901760
    %1115 = vmatpush1.xpose.msra.mxu0 %v1114
    %1116 = vmatprep.subr.mxu0 0.0
    %v1117 = vand.u32 %v80, 4294901760
    %v1118 = vsub.f32 %v80, %v1117
    %v1119 = vand.u32 %v1118, 4294901760
    %v1120 = vsub.f32 %v1118, %v1119
    %v1121 = vand.u32 %v1120, 4294901760
    %1122 = vmatpush1.xpose.msra.mxu0 %v1121
    %1123 = vmatprep.subr.mxu0 0.0
    %v1124 = vand.u32 %v79, 4294901760
    %v1125 = vsub.f32 %v79, %v1124
    %v1126 = vand.u32 %v1125, 4294901760
    %v1127 = vsub.f32 %v1125, %v1126
    %v1128 = vand.u32 %v1127, 4294901760
    %1129 = vmatpush1.xpose.msra.mxu0 %v1128
    %1130 = vmatprep.subr.mxu0 0.0
    %v1131 = vand.u32 %v78, 4294901760
    %v1132 = vsub.f32 %v78, %v1131
    %v1133 = vand.u32 %v1132, 4294901760
    %v1134 = vsub.f32 %v1132, %v1133
    %v1135 = vand.u32 %v1134, 4294901760
    %1136 = vmatpush1.xpose.msra.mxu0 %v1135
    %1137 = vmatprep.subr.mxu0 0.0
    %v1138 = vand.u32 %v77, 4294901760
    %v1139 = vsub.f32 %v77, %v1138
    %v1140 = vand.u32 %v1139, 4294901760
    %v1141 = vsub.f32 %v1139, %v1140
    %v1142 = vand.u32 %v1141, 4294901760
    %1143 = vmatpush1.xpose.msra.mxu0 %v1142
    %1144 = vmatprep.subr.mxu0 0.0
    %v1145 = vand.u32 %v76, 4294901760
    %v1146 = vsub.f32 %v76, %v1145
    %v1147 = vand.u32 %v1146, 4294901760
    %v1148 = vsub.f32 %v1146, %v1147
    %v1149 = vand.u32 %v1148, 4294901760
    %1150 = vmatpush1.xpose.msra.mxu0 %v1149
    %1151 = vmatprep.subr.mxu0 0.0
    %v1152 = vand.u32 %v75, 4294901760
    %v1153 = vsub.f32 %v75, %v1152
    %v1154 = vand.u32 %v1153, 4294901760
    %v1155 = vsub.f32 %v1153, %v1154
    %v1156 = vand.u32 %v1155, 4294901760
    %1157 = vmatpush1.xpose.msra.mxu0 %v1156
    %1158 = vmatprep.subr.mxu0 0.0
    %1159 = vmatpush2.xpose.msra.mxu0 0.0
    %1160 = vmatprep.subr.mxu0 0.0
    %1161 = vmatpush2.xpose.msra.mxu0 0.0
    %1162 = vmatprep.subr.mxu0 0.0
    %1163 = vmatpush2.xpose.msra.mxu0 0.0
    %1164 = vmatprep.subr.mxu0 0.0
    %1165 = vmatpush2.xpose.msra.mxu0 0.0
    %1166 = vmatprep.subr.mxu0 0.0
    %1167 = vmatpush2.xpose.msra.mxu0 0.0
    %1168 = vmatprep.subr.mxu0 0.0
    %1169 = vmatpush2.xpose.msra.mxu0 0.0
    %1170 = vmatprep.subr.mxu0 0.0
    %1171 = vmatpush2.xpose.msra.mxu0 0.0
    %1172 = vmatprep.subr.mxu0 0.0
    %1173 = vmatpush2.xpose.msra.mxu0 0.0
    %1174 = vmatprep.subr.mxu0 0.0
    %1175 = vmatpush2.xpose.msra.mxu0 0.0
    %1176 = vmatprep.subr.mxu0 0.0
    %1177 = vmatpush2.xpose.msra.mxu0 0.0
    %1178 = vmatprep.subr.mxu0 0.0
    %1179 = vmatpush2.xpose.msra.mxu0 0.0
    %1180 = vmatprep.subr.mxu0 0.0
    %1181 = vmatpush2.xpose.msra.mxu0 0.0
    %1182 = vmatprep.subr.mxu0 0.0
    %1183 = vmatpush2.xpose.msra.mxu0 0.0
    %1184 = vmatprep.subr.mxu0 0.0
    %1185 = vmatpush2.xpose.msra.mxu0 0.0
    %1186 = vmatprep.subr.mxu0 0.0
    %1187 = vmatpush2.xpose.msra.mxu0 0.0
    %1188 = vmatprep.subr.mxu0 0.0
    %1189 = vmatpush2.xpose.msra.mxu0 0.0
    %1190 = vmatprep.mubr.f32.mxu0 0.0
    %v1191 = vand.u32 %v99, 4294901760
    %1192 = vmatmul.mubr.f32.gmra.mxu0 %v1191
    %v1193 = vpop.f32.mrf.mxu0
    %v1194 = vadd.f32 %v1043, %v1193
    %v1195 = vpop.f32.mrf.mxu0
    %1196 = vdwg.mxu0
    %1197 = vmatprep.subr.mxu0 0.0
    %v1198 = vand.u32 %v90, 4294901760
    %v1199 = vsub.f32 %v90, %v1198
    %1200 = vmatpush1.xpose.msra.mxu0 %v1199
    %1201 = vmatprep.subr.mxu0 0.0
    %v1202 = vand.u32 %v89, 4294901760
    %v1203 = vsub.f32 %v89, %v1202
    %1204 = vmatpush1.xpose.msra.mxu0 %v1203
    %1205 = vmatprep.subr.mxu0 0.0
    %v1206 = vand.u32 %v88, 4294901760
    %v1207 = vsub.f32 %v88, %v1206
    %1208 = vmatpush1.xpose.msra.mxu0 %v1207
    %1209 = vmatprep.subr.mxu0 0.0
    %v1210 = vand.u32 %v87, 4294901760
    %v1211 = vsub.f32 %v87, %v1210
    %1212 = vmatpush1.xpose.msra.mxu0 %v1211
    %1213 = vmatprep.subr.mxu0 0.0
    %v1214 = vand.u32 %v86, 4294901760
    %v1215 = vsub.f32 %v86, %v1214
    %1216 = vmatpush1.xpose.msra.mxu0 %v1215
    %1217 = vmatprep.subr.mxu0 0.0
    %v1218 = vand.u32 %v85, 4294901760
    %v1219 = vsub.f32 %v85, %v1218
    %1220 = vmatpush1.xpose.msra.mxu0 %v1219
    %1221 = vmatprep.subr.mxu0 0.0
    %v1222 = vand.u32 %v84, 4294901760
    %v1223 = vsub.f32 %v84, %v1222
    %1224 = vmatpush1.xpose.msra.mxu0 %v1223
    %1225 = vmatprep.subr.mxu0 0.0
    %v1226 = vand.u32 %v83, 4294901760
    %v1227 = vsub.f32 %v83, %v1226
    %1228 = vmatpush1.xpose.msra.mxu0 %v1227
    %1229 = vmatprep.subr.mxu0 0.0
    %v1230 = vand.u32 %v82, 4294901760
    %v1231 = vsub.f32 %v82, %v1230
    %1232 = vmatpush1.xpose.msra.mxu0 %v1231
    %1233 = vmatprep.subr.mxu0 0.0
    %v1234 = vand.u32 %v81, 4294901760
    %v1235 = vsub.f32 %v81, %v1234
    %1236 = vmatpush1.xpose.msra.mxu0 %v1235
    %1237 = vmatprep.subr.mxu0 0.0
    %v1238 = vand.u32 %v80, 4294901760
    %v1239 = vsub.f32 %v80, %v1238
    %1240 = vmatpush1.xpose.msra.mxu0 %v1239
    %1241 = vmatprep.subr.mxu0 0.0
    %v1242 = vand.u32 %v79, 4294901760
    %v1243 = vsub.f32 %v79, %v1242
    %1244 = vmatpush1.xpose.msra.mxu0 %v1243
    %1245 = vmatprep.subr.mxu0 0.0
    %v1246 = vand.u32 %v78, 4294901760
    %v1247 = vsub.f32 %v78, %v1246
    %1248 = vmatpush1.xpose.msra.mxu0 %v1247
    %1249 = vmatprep.subr.mxu0 0.0
    %v1250 = vand.u32 %v77, 4294901760
    %v1251 = vsub.f32 %v77, %v1250
    %1252 = vmatpush1.xpose.msra.mxu0 %v1251
    %1253 = vmatprep.subr.mxu0 0.0
    %v1254 = vand.u32 %v76, 4294901760
    %v1255 = vsub.f32 %v76, %v1254
    %1256 = vmatpush1.xpose.msra.mxu0 %v1255
    %1257 = vmatprep.subr.mxu0 0.0
    %v1258 = vand.u32 %v75, 4294901760
    %v1259 = vsub.f32 %v75, %v1258
    %1260 = vmatpush1.xpose.msra.mxu0 %v1259
    %1261 = vmatprep.subr.mxu0 0.0
    %1262 = vmatpush2.xpose.msra.mxu0 0.0
    %1263 = vmatprep.subr.mxu0 0.0
    %1264 = vmatpush2.xpose.msra.mxu0 0.0
    %1265 = vmatprep.subr.mxu0 0.0
    %1266 = vmatpush2.xpose.msra.mxu0 0.0
    %1267 = vmatprep.subr.mxu0 0.0
    %1268 = vmatpush2.xpose.msra.mxu0 0.0
    %1269 = vmatprep.subr.mxu0 0.0
    %1270 = vmatpush2.xpose.msra.mxu0 0.0
    %1271 = vmatprep.subr.mxu0 0.0
    %1272 = vmatpush2.xpose.msra.mxu0 0.0
    %1273 = vmatprep.subr.mxu0 0.0
    %1274 = vmatpush2.xpose.msra.mxu0 0.0
    %1275 = vmatprep.subr.mxu0 0.0
    %1276 = vmatpush2.xpose.msra.mxu0 0.0
    %1277 = vmatprep.subr.mxu0 0.0
    %1278 = vmatpush2.xpose.msra.mxu0 0.0
    %1279 = vmatprep.subr.mxu0 0.0
    %1280 = vmatpush2.xpose.msra.mxu0 0.0
    %1281 = vmatprep.subr.mxu0 0.0
    %1282 = vmatpush2.xpose.msra.mxu0 0.0
    %1283 = vmatprep.subr.mxu0 0.0
    %1284 = vmatpush2.xpose.msra.mxu0 0.0
    %1285 = vmatprep.subr.mxu0 0.0
    %1286 = vmatpush2.xpose.msra.mxu0 0.0
    %1287 = vmatprep.subr.mxu0 0.0
    %1288 = vmatpush2.xpose.msra.mxu0 0.0
    %1289 = vmatprep.subr.mxu0 0.0
    %1290 = vmatpush2.xpose.msra.mxu0 0.0
    %1291 = vmatprep.subr.mxu0 0.0
    %1292 = vmatpush2.xpose.msra.mxu0 0.0
    %1293 = vmatprep.mubr.f32.mxu0 0.0
    %v1294 = vand.u32 %v99, 4294901760
    %v1295 = vsub.f32 %v99, %v1294
    %1296 = vmatmul.mubr.f32.gmra.mxu0 %v1295
    %v1297 = vpop.f32.mrf.mxu0
    %v1298 = vadd.f32 %v1194, %v1297
    %v1299 = vpop.f32.mrf.mxu0
    %1300 = vdwg.mxu0
    %1301 = vmatprep.subr.mxu0 0.0
    %v1302 = vand.u32 %v90, 4294901760
    %1303 = vmatpush1.xpose.msra.mxu0 %v1302
    %1304 = vmatprep.subr.mxu0 0.0
    %v1305 = vand.u32 %v89, 4294901760
    %1306 = vmatpush1.xpose.msra.mxu0 %v1305
    %1307 = vmatprep.subr.mxu0 0.0
    %v1308 = vand.u32 %v88, 4294901760
    %1309 = vmatpush1.xpose.msra.mxu0 %v1308
    %1310 = vmatprep.subr.mxu0 0.0
    %v1311 = vand.u32 %v87, 4294901760
    %1312 = vmatpush1.xpose.msra.mxu0 %v1311
    %1313 = vmatprep.subr.mxu0 0.0
    %v1314 = vand.u32 %v86, 4294901760
    %1315 = vmatpush1.xpose.msra.mxu0 %v1314
    %1316 = vmatprep.subr.mxu0 0.0
    %v1317 = vand.u32 %v85, 4294901760
    %1318 = vmatpush1.xpose.msra.mxu0 %v1317
    %1319 = vmatprep.subr.mxu0 0.0
    %v1320 = vand.u32 %v84, 4294901760
    %1321 = vmatpush1.xpose.msra.mxu0 %v1320
    %1322 = vmatprep.subr.mxu0 0.0
    %v1323 = vand.u32 %v83, 4294901760
    %1324 = vmatpush1.xpose.msra.mxu0 %v1323
    %1325 = vmatprep.subr.mxu0 0.0
    %v1326 = vand.u32 %v82, 4294901760
    %1327 = vmatpush1.xpose.msra.mxu0 %v1326
    %1328 = vmatprep.subr.mxu0 0.0
    %v1329 = vand.u32 %v81, 4294901760
    %1330 = vmatpush1.xpose.msra.mxu0 %v1329
    %1331 = vmatprep.subr.mxu0 0.0
    %v1332 = vand.u32 %v80, 4294901760
    %1333 = vmatpush1.xpose.msra.mxu0 %v1332
    %1334 = vmatprep.subr.mxu0 0.0
    %v1335 = vand.u32 %v79, 4294901760
    %1336 = vmatpush1.xpose.msra.mxu0 %v1335
    %1337 = vmatprep.subr.mxu0 0.0
    %v1338 = vand.u32 %v78, 4294901760
    %1339 = vmatpush1.xpose.msra.mxu0 %v1338
    %1340 = vmatprep.subr.mxu0 0.0
    %v1341 = vand.u32 %v77, 4294901760
    %1342 = vmatpush1.xpose.msra.mxu0 %v1341
    %1343 = vmatprep.subr.mxu0 0.0
    %v1344 = vand.u32 %v76, 4294901760
    %1345 = vmatpush1.xpose.msra.mxu0 %v1344
    %1346 = vmatprep.subr.mxu0 0.0
    %v1347 = vand.u32 %v75, 4294901760
    %1348 = vmatpush1.xpose.msra.mxu0 %v1347
    %1349 = vmatprep.subr.mxu0 0.0
    %1350 = vmatpush2.xpose.msra.mxu0 0.0
    %1351 = vmatprep.subr.mxu0 0.0
    %1352 = vmatpush2.xpose.msra.mxu0 0.0
    %1353 = vmatprep.subr.mxu0 0.0
    %1354 = vmatpush2.xpose.msra.mxu0 0.0
    %1355 = vmatprep.subr.mxu0 0.0
    %1356 = vmatpush2.xpose.msra.mxu0 0.0
    %1357 = vmatprep.subr.mxu0 0.0
    %1358 = vmatpush2.xpose.msra.mxu0 0.0
    %1359 = vmatprep.subr.mxu0 0.0
    %1360 = vmatpush2.xpose.msra.mxu0 0.0
    %1361 = vmatprep.subr.mxu0 0.0
    %1362 = vmatpush2.xpose.msra.mxu0 0.0
    %1363 = vmatprep.subr.mxu0 0.0
    %1364 = vmatpush2.xpose.msra.mxu0 0.0
    %1365 = vmatprep.subr.mxu0 0.0
    %1366 = vmatpush2.xpose.msra.mxu0 0.0
    %1367 = vmatprep.subr.mxu0 0.0
    %1368 = vmatpush2.xpose.msra.mxu0 0.0
    %1369 = vmatprep.subr.mxu0 0.0
    %1370 = vmatpush2.xpose.msra.mxu0 0.0
    %1371 = vmatprep.subr.mxu0 0.0
    %1372 = vmatpush2.xpose.msra.mxu0 0.0
    %1373 = vmatprep.subr.mxu0 0.0
    %1374 = vmatpush2.xpose.msra.mxu0 0.0
    %1375 = vmatprep.subr.mxu0 0.0
    %1376 = vmatpush2.xpose.msra.mxu0 0.0
    %1377 = vmatprep.subr.mxu0 0.0
    %1378 = vmatpush2.xpose.msra.mxu0 0.0
    %1379 = vmatprep.subr.mxu0 0.0
    %1380 = vmatpush2.xpose.msra.mxu0 0.0
    %1381 = vmatprep.mubr.f32.mxu0 0.0
    %v1382 = vand.u32 %v99, 4294901760
    %v1383 = vsub.f32 %v99, %v1382
    %v1384 = vand.u32 %v1383, 4294901760
    %1385 = vmatmul.mubr.f32.gmra.mxu0 %v1384
    %v1386 = vpop.f32.mrf.mxu0
    %v1387 = vadd.f32 %v1298, %v1386
    %v1388 = vpop.f32.mrf.mxu0
    %1389 = vdwg.mxu0
    %1390 = vmatprep.subr.mxu0 0.0
    %v1391 = vand.u32 %v90, 4294901760
    %v1392 = vsub.f32 %v90, %v1391
    %v1393 = vand.u32 %v1392, 4294901760
    %1394 = vmatpush1.xpose.msra.mxu0 %v1393
    %1395 = vmatprep.subr.mxu0 0.0
    %v1396 = vand.u32 %v89, 4294901760
    %v1397 = vsub.f32 %v89, %v1396
    %v1398 = vand.u32 %v1397, 4294901760
    %1399 = vmatpush1.xpose.msra.mxu0 %v1398
    %1400 = vmatprep.subr.mxu0 0.0
    %v1401 = vand.u32 %v88, 4294901760
    %v1402 = vsub.f32 %v88, %v1401
    %v1403 = vand.u32 %v1402, 4294901760
    %1404 = vmatpush1.xpose.msra.mxu0 %v1403
    %1405 = vmatprep.subr.mxu0 0.0
    %v1406 = vand.u32 %v87, 4294901760
    %v1407 = vsub.f32 %v87, %v1406
    %v1408 = vand.u32 %v1407, 4294901760
    %1409 = vmatpush1.xpose.msra.mxu0 %v1408
    %1410 = vmatprep.subr.mxu0 0.0
    %v1411 = vand.u32 %v86, 4294901760
    %v1412 = vsub.f32 %v86, %v1411
    %v1413 = vand.u32 %v1412, 4294901760
    %1414 = vmatpush1.xpose.msra.mxu0 %v1413
    %1415 = vmatprep.subr.mxu0 0.0
    %v1416 = vand.u32 %v85, 4294901760
    %v1417 = vsub.f32 %v85, %v1416
    %v1418 = vand.u32 %v1417, 4294901760
    %1419 = vmatpush1.xpose.msra.mxu0 %v1418
    %1420 = vmatprep.subr.mxu0 0.0
    %v1421 = vand.u32 %v84, 4294901760
    %v1422 = vsub.f32 %v84, %v1421
    %v1423 = vand.u32 %v1422, 4294901760
    %1424 = vmatpush1.xpose.msra.mxu0 %v1423
    %1425 = vmatprep.subr.mxu0 0.0
    %v1426 = vand.u32 %v83, 4294901760
    %v1427 = vsub.f32 %v83, %v1426
    %v1428 = vand.u32 %v1427, 4294901760
    %1429 = vmatpush1.xpose.msra.mxu0 %v1428
    %1430 = vmatprep.subr.mxu0 0.0
    %v1431 = vand.u32 %v82, 4294901760
    %v1432 = vsub.f32 %v82, %v1431
    %v1433 = vand.u32 %v1432, 4294901760
    %1434 = vmatpush1.xpose.msra.mxu0 %v1433
    %1435 = vmatprep.subr.mxu0 0.0
    %v1436 = vand.u32 %v81, 4294901760
    %v1437 = vsub.f32 %v81, %v1436
    %v1438 = vand.u32 %v1437, 4294901760
    %1439 = vmatpush1.xpose.msra.mxu0 %v1438
    %1440 = vmatprep.subr.mxu0 0.0
    %v1441 = vand.u32 %v80, 4294901760
    %v1442 = vsub.f32 %v80, %v1441
    %v1443 = vand.u32 %v1442, 4294901760
    %1444 = vmatpush1.xpose.msra.mxu0 %v1443
    %1445 = vmatprep.subr.mxu0 0.0
    %v1446 = vand.u32 %v79, 4294901760
    %v1447 = vsub.f32 %v79, %v1446
    %v1448 = vand.u32 %v1447, 4294901760
    %1449 = vmatpush1.xpose.msra.mxu0 %v1448
    %1450 = vmatprep.subr.mxu0 0.0
    %v1451 = vand.u32 %v78, 4294901760
    %v1452 = vsub.f32 %v78, %v1451
    %v1453 = vand.u32 %v1452, 4294901760
    %1454 = vmatpush1.xpose.msra.mxu0 %v1453
    %1455 = vmatprep.subr.mxu0 0.0
    %v1456 = vand.u32 %v77, 4294901760
    %v1457 = vsub.f32 %v77, %v1456
    %v1458 = vand.u32 %v1457, 4294901760
    %1459 = vmatpush1.xpose.msra.mxu0 %v1458
    %1460 = vmatprep.subr.mxu0 0.0
    %v1461 = vand.u32 %v76, 4294901760
    %v1462 = vsub.f32 %v76, %v1461
    %v1463 = vand.u32 %v1462, 4294901760
    %1464 = vmatpush1.xpose.msra.mxu0 %v1463
    %1465 = vmatprep.subr.mxu0 0.0
    %v1466 = vand.u32 %v75, 4294901760
    %v1467 = vsub.f32 %v75, %v1466
    %v1468 = vand.u32 %v1467, 4294901760
    %1469 = vmatpush1.xpose.msra.mxu0 %v1468
    %1470 = vmatprep.subr.mxu0 0.0
    %1471 = vmatpush2.xpose.msra.mxu0 0.0
    %1472 = vmatprep.subr.mxu0 0.0
    %1473 = vmatpush2.xpose.msra.mxu0 0.0
    %1474 = vmatprep.subr.mxu0 0.0
    %1475 = vmatpush2.xpose.msra.mxu0 0.0
    %1476 = vmatprep.subr.mxu0 0.0
    %1477 = vmatpush2.xpose.msra.mxu0 0.0
    %1478 = vmatprep.subr.mxu0 0.0
    %1479 = vmatpush2.xpose.msra.mxu0 0.0
    %1480 = vmatprep.subr.mxu0 0.0
    %1481 = vmatpush2.xpose.msra.mxu0 0.0
    %1482 = vmatprep.subr.mxu0 0.0
    %1483 = vmatpush2.xpose.msra.mxu0 0.0
    %1484 = vmatprep.subr.mxu0 0.0
    %1485 = vmatpush2.xpose.msra.mxu0 0.0
    %1486 = vmatprep.subr.mxu0 0.0
    %1487 = vmatpush2.xpose.msra.mxu0 0.0
    %1488 = vmatprep.subr.mxu0 0.0
    %1489 = vmatpush2.xpose.msra.mxu0 0.0
    %1490 = vmatprep.subr.mxu0 0.0
    %1491 = vmatpush2.xpose.msra.mxu0 0.0
    %1492 = vmatprep.subr.mxu0 0.0
    %1493 = vmatpush2.xpose.msra.mxu0 0.0
    %1494 = vmatprep.subr.mxu0 0.0
    %1495 = vmatpush2.xpose.msra.mxu0 0.0
    %1496 = vmatprep.subr.mxu0 0.0
    %1497 = vmatpush2.xpose.msra.mxu0 0.0
    %1498 = vmatprep.subr.mxu0 0.0
    %1499 = vmatpush2.xpose.msra.mxu0 0.0
    %1500 = vmatprep.subr.mxu0 0.0
    %1501 = vmatpush2.xpose.msra.mxu0 0.0
    %1502 = vmatprep.mubr.f32.mxu0 0.0
    %v1503 = vand.u32 %v99, 4294901760
    %1504 = vmatmul.mubr.f32.gmra.mxu0 %v1503
    %v1505 = vpop.f32.mrf.mxu0
    %v1506 = vadd.f32 %v1387, %v1505
    %v1507 = vpop.f32.mrf.mxu0
    %1508 = vdwg.mxu0
    %1509 = vmatprep.subr.mxu0 0.0
    %v1510 = vand.u32 %v90, 4294901760
    %1511 = vmatpush1.xpose.msra.mxu0 %v1510
    %1512 = vmatprep.subr.mxu0 0.0
    %v1513 = vand.u32 %v89, 4294901760
    %1514 = vmatpush1.xpose.msra.mxu0 %v1513
    %1515 = vmatprep.subr.mxu0 0.0
    %v1516 = vand.u32 %v88, 4294901760
    %1517 = vmatpush1.xpose.msra.mxu0 %v1516
    %1518 = vmatprep.subr.mxu0 0.0
    %v1519 = vand.u32 %v87, 4294901760
    %1520 = vmatpush1.xpose.msra.mxu0 %v1519
    %1521 = vmatprep.subr.mxu0 0.0
    %v1522 = vand.u32 %v86, 4294901760
    %1523 = vmatpush1.xpose.msra.mxu0 %v1522
    %1524 = vmatprep.subr.mxu0 0.0
    %v1525 = vand.u32 %v85, 4294901760
    %1526 = vmatpush1.xpose.msra.mxu0 %v1525
    %1527 = vmatprep.subr.mxu0 0.0
    %v1528 = vand.u32 %v84, 4294901760
    %1529 = vmatpush1.xpose.msra.mxu0 %v1528
    %1530 = vmatprep.subr.mxu0 0.0
    %v1531 = vand.u32 %v83, 4294901760
    %1532 = vmatpush1.xpose.msra.mxu0 %v1531
    %1533 = vmatprep.subr.mxu0 0.0
    %v1534 = vand.u32 %v82, 4294901760
    %1535 = vmatpush1.xpose.msra.mxu0 %v1534
    %1536 = vmatprep.subr.mxu0 0.0
    %v1537 = vand.u32 %v81, 4294901760
    %1538 = vmatpush1.xpose.msra.mxu0 %v1537
    %1539 = vmatprep.subr.mxu0 0.0
    %v1540 = vand.u32 %v80, 4294901760
    %1541 = vmatpush1.xpose.msra.mxu0 %v1540
    %1542 = vmatprep.subr.mxu0 0.0
    %v1543 = vand.u32 %v79, 4294901760
    %1544 = vmatpush1.xpose.msra.mxu0 %v1543
    %1545 = vmatprep.subr.mxu0 0.0
    %v1546 = vand.u32 %v78, 4294901760
    %1547 = vmatpush1.xpose.msra.mxu0 %v1546
    %1548 = vmatprep.subr.mxu0 0.0
    %v1549 = vand.u32 %v77, 4294901760
    %1550 = vmatpush1.xpose.msra.mxu0 %v1549
    %1551 = vmatprep.subr.mxu0 0.0
    %v1552 = vand.u32 %v76, 4294901760
    %1553 = vmatpush1.xpose.msra.mxu0 %v1552
    %1554 = vmatprep.subr.mxu0 0.0
    %v1555 = vand.u32 %v75, 4294901760
    %1556 = vmatpush1.xpose.msra.mxu0 %v1555
    %1557 = vmatprep.subr.mxu0 0.0
    %1558 = vmatpush2.xpose.msra.mxu0 0.0
    %1559 = vmatprep.subr.mxu0 0.0
    %1560 = vmatpush2.xpose.msra.mxu0 0.0
    %1561 = vmatprep.subr.mxu0 0.0
    %1562 = vmatpush2.xpose.msra.mxu0 0.0
    %1563 = vmatprep.subr.mxu0 0.0
    %1564 = vmatpush2.xpose.msra.mxu0 0.0
    %1565 = vmatprep.subr.mxu0 0.0
    %1566 = vmatpush2.xpose.msra.mxu0 0.0
    %1567 = vmatprep.subr.mxu0 0.0
    %1568 = vmatpush2.xpose.msra.mxu0 0.0
    %1569 = vmatprep.subr.mxu0 0.0
    %1570 = vmatpush2.xpose.msra.mxu0 0.0
    %1571 = vmatprep.subr.mxu0 0.0
    %1572 = vmatpush2.xpose.msra.mxu0 0.0
    %1573 = vmatprep.subr.mxu0 0.0
    %1574 = vmatpush2.xpose.msra.mxu0 0.0
    %1575 = vmatprep.subr.mxu0 0.0
    %1576 = vmatpush2.xpose.msra.mxu0 0.0
    %1577 = vmatprep.subr.mxu0 0.0
    %1578 = vmatpush2.xpose.msra.mxu0 0.0
    %1579 = vmatprep.subr.mxu0 0.0
    %1580 = vmatpush2.xpose.msra.mxu0 0.0
    %1581 = vmatprep.subr.mxu0 0.0
    %1582 = vmatpush2.xpose.msra.mxu0 0.0
    %1583 = vmatprep.subr.mxu0 0.0
    %1584 = vmatpush2.xpose.msra.mxu0 0.0
    %1585 = vmatprep.subr.mxu0 0.0
    %1586 = vmatpush2.xpose.msra.mxu0 0.0
    %1587 = vmatprep.subr.mxu0 0.0
    %1588 = vmatpush2.xpose.msra.mxu0 0.0
    %1589 = vmatprep.mubr.f32.mxu0 0.0
    %v1590 = vand.u32 %v99, 4294901760
    %1591 = vmatmul.mubr.f32.gmra.mxu0 %v1590
    %v1592 = vpop.f32.mrf.mxu0
    %v1593 = vadd.f32 %v1506, %v1592
    %v1594 = vpop.f32.mrf.mxu0
    %1595 = vdwg.mxu0
    %v1596 = vadd.f32 %v98, %v951
    %v1597 = vadd.f32 %v98, %v953
    %v1598 = vadd.f32 %v98, %v1593
    %v1599 = vrot.slane %v1596, 4
    %v1600 = vmin.f32 %v1596, %v1599
    %v1601 = vrot.slane %v1600, 2
    %v1602 = vmin.f32 %v1600, %v1601
    %v1603 = vrot.slane %v1602, 1
    %v1604 = vmin.f32 %v1602, %v1603
    %v1605 = vrot.slane %v1597, 4
    %v1606 = vmin.f32 %v1597, %v1605
    %v1607 = vrot.slane %v1606, 2
    %v1608 = vmin.f32 %v1606, %v1607
    %v1609 = vrot.slane %v1608, 1
    %v1610 = vmin.f32 %v1608, %v1609
    %v1611 = vrot.slane %v1598, 4
    %v1612 = vmin.f32 %v1598, %v1611
    %v1613 = vrot.slane %v1612, 2
    %v1614 = vmin.f32 %v1612, %v1613
    %v1615 = vrot.slane %v1614, 1
    %v1616 = vmin.f32 %v1614, %v1615
    %vm1617 = vcmp.eq.f32.partialorder %v1596, %v1604
    %vm1618 = vcmp.eq.f32.partialorder %v1597, %v1610
    %vm1619 = vcmp.eq.f32.partialorder %v1598, %v1616
    %v1620 = vsel %vm1617, %v95, 8
    %v1621 = vsel %vm1618, %v95, 8
    %v1622 = vsel %vm1619, %v95, 8
    %v1623 = vrot.slane %v1620, 4
    %vm1624 = vcmp.lt.s32.totalorder %v1620, %v1623
    %v1625 = vsel %vm1624, %v1620, %v1623
    %v1626 = vrot.slane %v1625, 2
    %vm1627 = vcmp.lt.s32.totalorder %v1625, %v1626
    %v1628 = vsel %vm1627, %v1625, %v1626
    %v1629 = vrot.slane %v1628, 1
    %vm1630 = vcmp.lt.s32.totalorder %v1628, %v1629
    %v1631 = vsel %vm1630, %v1628, %v1629
    %v1632 = vrot.slane %v1621, 4
    %vm1633 = vcmp.lt.s32.totalorder %v1621, %v1632
    %v1634 = vsel %vm1633, %v1621, %v1632
    %v1635 = vrot.slane %v1634, 2
    %vm1636 = vcmp.lt.s32.totalorder %v1634, %v1635
    %v1637 = vsel %vm1636, %v1634, %v1635
    %v1638 = vrot.slane %v1637, 1
    %vm1639 = vcmp.lt.s32.totalorder %v1637, %v1638
    %v1640 = vsel %vm1639, %v1637, %v1638
    %v1641 = vrot.slane %v1622, 4
    %vm1642 = vcmp.lt.s32.totalorder %v1622, %v1641
    %v1643 = vsel %vm1642, %v1622, %v1641
    %v1644 = vrot.slane %v1643, 2
    %vm1645 = vcmp.lt.s32.totalorder %v1643, %v1644
    %v1646 = vsel %vm1645, %v1643, %v1644
    %v1647 = vrot.slane %v1646, 1
    %vm1648 = vcmp.lt.s32.totalorder %v1646, %v1647
    %v1649 = vsel %vm1648, %v1646, %v1647
    %v1650 = vcombine.low %v1631, %v1640
    %v1652 = vunpack.c.l.s4 1966171168
    %v1653 = vunpack.c.0.s8 %v1652
    %v1654 = vlaneseq
    %v1655 = vshrl.u32 %v1654, 7
    %v1656 = vsub.s32 %v1653, %v1655
    %v1657 = vrot.slane %v1650, %v1656
    %v1659 = vunpack.c.l.s4 1966171168
    %v1660 = vunpack.c.0.s8 %v1659
    %v1661 = vlaneseq
    %v1662 = vshrl.u32 %v1661, 7
    %v1663 = vsub.s32 %v1660, %v1662
    %v1664 = vrot.slane %v1649, %v1663
    %v1665 = vcombine.low %v1657, %v1664
    %v1667 = vunpack.c.l.s4 1966171168
    %v1668 = vunpack.c.0.s8 %v1667
    %v1669 = vlaneseq
    %v1670 = vshrl.u32 %v1669, 7
    %v1671 = vsub.s32 %v1668, %v1670
    %v1672 = vrot.slane %v1665, %v1671
    %v1673 = vlaneseq
    %vm1674 = vcmp.ge.s32.totalorder %v1673, 0
    %vm1675 = vcmp.lt.s32.totalorder %v1673, 384
    %vm1676 = vmand %vm1674, %vm1675
    %1677 = vst.msk [vmem:[#allocation7] sm:$0x7] %vm1676, %v1672
    %vm1678 = vcmp.eq.s32.totalorder %v95, %v1631
    %vm1679 = vcmp.eq.s32.totalorder %v95, %v1640
    %vm1680 = vcmp.eq.s32.totalorder %v95, %v1649
    %v1681 = vlaneseq
    %v1682 = vand.u32 %v1681, 127
    %v1683 = vadd.s32 %v1682, 128
    %v1684 = vadd.s32 %v1682, 256
    %s1685 = smul.u32 0, 384
    %v1686 = vstv %s1685
    %v1687 = vadd.s32 %v1686, %v1682
    %v1688 = vadd.s32 %v1686, %v1683
    %v1689 = vadd.s32 %v1686, %v1684
    %vm1690 = vcmp.lt.s32.totalorder %v1687, 300
    %vm1691 = vcmp.lt.s32.totalorder %v1688, 300
    %vm1692 = vcmp.lt.s32.totalorder %v1689, 300
    %v1693 = vsel %vm1690, 1, 0
    %v1694 = vsel %vm1691, 1, 0
    %v1695 = vsel %vm1692, 1, 0
    %vm1696 = vcmp.eq.s32.totalorder %v1693, 1
    %vm1697 = vcmp.eq.s32.totalorder %v1694, 1
    %vm1698 = vcmp.eq.s32.totalorder %v1695, 1
    %vm1699 = vmand %vm1678, %vm1696
    %vm1700 = vmand %vm1679, %vm1697
    %vm1701 = vmand %vm1680, %vm1698
    %v1702 = vadd.s32 %v95, 8
    %v1703 = vadd.s32 %v95, 16
    %v1704 = vadd.s32 %v95, 24
    %v1705 = vadd.s32 %v95, 32
    %v1706 = vadd.s32 %v95, 40
    %v1707 = vadd.s32 %v95, 48
    %v1708 = vadd.s32 %v95, 56
    %v1709 = vadd.s32 %v95, 64
    %v1710 = vadd.s32 %v95, 72
    %v1711 = vadd.s32 %v95, 80
    %v1712 = vadd.s32 %v95, 88
    %v1713 = vadd.s32 %v95, 96
    %v1714 = vadd.s32 %v95, 104
    %v1715 = vadd.s32 %v95, 112
    %v1716 = vadd.s32 %v95, 120
    %v1717 = vadd.s32 %v95, 128
    %v1718 = vadd.s32 %v95, 136
    %v1719 = vadd.s32 %v95, 144
    %v1720 = vadd.s32 %v95, 152
    %v1721 = vadd.s32 %v95, 160
    %v1722 = vadd.s32 %v95, 168
    %v1723 = vadd.s32 %v95, 176
    %v1724 = vadd.s32 %v95, 184
    %v1725 = vadd.s32 %v95, 192
    %v1726 = vadd.s32 %v95, 200
    %v1727 = vadd.s32 %v95, 208
    %v1728 = vadd.s32 %v95, 216
    %v1729 = vadd.s32 %v95, 224
    %v1730 = vadd.s32 %v95, 232
    %v1731 = vadd.s32 %v95, 240
    %v1732 = vadd.s32 %v95, 248
    %v1733 = vadd.s32 %v95, 256
    %v1734 = vadd.s32 %v95, 264
    %v1735 = vadd.s32 %v95, 272
    %v1736 = vadd.s32 %v95, 280
    %v1737 = vadd.s32 %v95, 288
    %v1738 = vadd.s32 %v95, 296
    %v1739 = vadd.s32 %v95, 304
    %v1740 = vadd.s32 %v95, 312
    %v1741 = vadd.s32 %v95, 320
    %v1742 = vadd.s32 %v95, 328
    %v1743 = vadd.s32 %v95, 336
    %v1744 = vadd.s32 %v95, 344
    %v1745 = vadd.s32 %v95, 352
    %v1746 = vadd.s32 %v95, 360
    %v1747 = vadd.s32 %v95, 368
    %v1748 = vadd.s32 %v95, 376
    %v1749 = vadd.s32 %v1686, %v95
    %v1750 = vadd.s32 %v1686, %v1702
    %v1751 = vadd.s32 %v1686, %v1703
    %v1752 = vadd.s32 %v1686, %v1704
    %v1753 = vadd.s32 %v1686, %v1705
    %v1754 = vadd.s32 %v1686, %v1706
    %v1755 = vadd.s32 %v1686, %v1707
    %v1756 = vadd.s32 %v1686, %v1708
    %v1757 = vadd.s32 %v1686, %v1709
    %v1758 = vadd.s32 %v1686, %v1710
    %v1759 = vadd.s32 %v1686, %v1711
    %v1760 = vadd.s32 %v1686, %v1712
    %v1761 = vadd.s32 %v1686, %v1713
    %v1762 = vadd.s32 %v1686, %v1714
    %v1763 = vadd.s32 %v1686, %v1715
    %v1764 = vadd.s32 %v1686, %v1716
    %v1765 = vadd.s32 %v1686, %v1717
    %v1766 = vadd.s32 %v1686, %v1718
    %v1767 = vadd.s32 %v1686, %v1719
    %v1768 = vadd.s32 %v1686, %v1720
    %v1769 = vadd.s32 %v1686, %v1721
    %v1770 = vadd.s32 %v1686, %v1722
    %v1771 = vadd.s32 %v1686, %v1723
    %v1772 = vadd.s32 %v1686, %v1724
    %v1773 = vadd.s32 %v1686, %v1725
    %v1774 = vadd.s32 %v1686, %v1726
    %v1775 = vadd.s32 %v1686, %v1727
    %v1776 = vadd.s32 %v1686, %v1728
    %v1777 = vadd.s32 %v1686, %v1729
    %v1778 = vadd.s32 %v1686, %v1730
    %v1779 = vadd.s32 %v1686, %v1731
    %v1780 = vadd.s32 %v1686, %v1732
    %v1781 = vadd.s32 %v1686, %v1733
    %v1782 = vadd.s32 %v1686, %v1734
    %v1783 = vadd.s32 %v1686, %v1735
    %v1784 = vadd.s32 %v1686, %v1736
    %v1785 = vadd.s32 %v1686, %v1737
    %v1786 = vadd.s32 %v1686, %v1738
    %v1787 = vadd.s32 %v1686, %v1739
    %v1788 = vadd.s32 %v1686, %v1740
    %v1789 = vadd.s32 %v1686, %v1741
    %v1790 = vadd.s32 %v1686, %v1742
    %v1791 = vadd.s32 %v1686, %v1743
    %v1792 = vadd.s32 %v1686, %v1744
    %v1793 = vadd.s32 %v1686, %v1745
    %v1794 = vadd.s32 %v1686, %v1746
    %v1795 = vadd.s32 %v1686, %v1747
    %v1796 = vadd.s32 %v1686, %v1748
    %vm1797 = vcmp.lt.s32.totalorder %v1749, 300
    %vm1798 = vcmp.lt.s32.totalorder %v1750, 300
    %vm1799 = vcmp.lt.s32.totalorder %v1751, 300
    %vm1800 = vcmp.lt.s32.totalorder %v1752, 300
    %vm1801 = vcmp.lt.s32.totalorder %v1753, 300
    %vm1802 = vcmp.lt.s32.totalorder %v1754, 300
    %vm1803 = vcmp.lt.s32.totalorder %v1755, 300
    %vm1804 = vcmp.lt.s32.totalorder %v1756, 300
    %vm1805 = vcmp.lt.s32.totalorder %v1757, 300
    %vm1806 = vcmp.lt.s32.totalorder %v1758, 300
    %vm1807 = vcmp.lt.s32.totalorder %v1759, 300
    %vm1808 = vcmp.lt.s32.totalorder %v1760, 300
    %vm1809 = vcmp.lt.s32.totalorder %v1761, 300
    %vm1810 = vcmp.lt.s32.totalorder %v1762, 300
    %vm1811 = vcmp.lt.s32.totalorder %v1763, 300
    %vm1812 = vcmp.lt.s32.totalorder %v1764, 300
    %vm1813 = vcmp.lt.s32.totalorder %v1765, 300
    %vm1814 = vcmp.lt.s32.totalorder %v1766, 300
    %vm1815 = vcmp.lt.s32.totalorder %v1767, 300
    %vm1816 = vcmp.lt.s32.totalorder %v1768, 300
    %vm1817 = vcmp.lt.s32.totalorder %v1769, 300
    %vm1818 = vcmp.lt.s32.totalorder %v1770, 300
    %vm1819 = vcmp.lt.s32.totalorder %v1771, 300
    %vm1820 = vcmp.lt.s32.totalorder %v1772, 300
    %vm1821 = vcmp.lt.s32.totalorder %v1773, 300
    %vm1822 = vcmp.lt.s32.totalorder %v1774, 300
    %vm1823 = vcmp.lt.s32.totalorder %v1775, 300
    %vm1824 = vcmp.lt.s32.totalorder %v1776, 300
    %vm1825 = vcmp.lt.s32.totalorder %v1777, 300
    %vm1826 = vcmp.lt.s32.totalorder %v1778, 300
    %vm1827 = vcmp.lt.s32.totalorder %v1779, 300
    %vm1828 = vcmp.lt.s32.totalorder %v1780, 300
    %vm1829 = vcmp.lt.s32.totalorder %v1781, 300
    %vm1830 = vcmp.lt.s32.totalorder %v1782, 300
    %vm1831 = vcmp.lt.s32.totalorder %v1783, 300
    %vm1832 = vcmp.lt.s32.totalorder %v1784, 300
    %vm1833 = vcmp.lt.s32.totalorder %v1785, 300
    %vm1834 = vcmp.lt.s32.totalorder %v1786, 300
    %vm1835 = vcmp.lt.s32.totalorder %v1787, 300
    %vm1836 = vcmp.lt.s32.totalorder %v1788, 300
    %vm1837 = vcmp.lt.s32.totalorder %v1789, 300
    %vm1838 = vcmp.lt.s32.totalorder %v1790, 300
    %vm1839 = vcmp.lt.s32.totalorder %v1791, 300
    %vm1840 = vcmp.lt.s32.totalorder %v1792, 300
    %vm1841 = vcmp.lt.s32.totalorder %v1793, 300
    %vm1842 = vcmp.lt.s32.totalorder %v1794, 300
    %vm1843 = vcmp.lt.s32.totalorder %v1795, 300
    %vm1844 = vcmp.lt.s32.totalorder %v1796, 300
    %v1845 = vsel %vm1797, 1, 0
    %v1846 = vsel %vm1798, 1, 0
    %v1847 = vsel %vm1799, 1, 0
    %v1848 = vsel %vm1800, 1, 0
    %v1849 = vsel %vm1801, 1, 0
    %v1850 = vsel %vm1802, 1, 0
    %v1851 = vsel %vm1803, 1, 0
    %v1852 = vsel %vm1804, 1, 0
    %v1853 = vsel %vm1805, 1, 0
    %v1854 = vsel %vm1806, 1, 0
    %v1855 = vsel %vm1807, 1, 0
    %v1856 = vsel %vm1808, 1, 0
    %v1857 = vsel %vm1809, 1, 0
    %v1858 = vsel %vm1810, 1, 0
    %v1859 = vsel %vm1811, 1, 0
    %v1860 = vsel %vm1812, 1, 0
    %v1861 = vsel %vm1813, 1, 0
    %v1862 = vsel %vm1814, 1, 0
    %v1863 = vsel %vm1815, 1, 0
    %v1864 = vsel %vm1816, 1, 0
    %v1865 = vsel %vm1817, 1, 0
    %v1866 = vsel %vm1818, 1, 0
    %v1867 = vsel %vm1819, 1, 0
    %v1868 = vsel %vm1820, 1, 0
    %v1869 = vsel %vm1821, 1, 0
    %v1870 = vsel %vm1822, 1, 0
    %v1871 = vsel %vm1823, 1, 0
    %v1872 = vsel %vm1824, 1, 0
    %v1873 = vsel %vm1825, 1, 0
    %v1874 = vsel %vm1826, 1, 0
    %v1875 = vsel %vm1827, 1, 0
    %v1876 = vsel %vm1828, 1, 0
    %v1877 = vsel %vm1829, 1, 0
    %v1878 = vsel %vm1830, 1, 0
    %v1879 = vsel %vm1831, 1, 0
    %v1880 = vsel %vm1832, 1, 0
    %v1881 = vsel %vm1833, 1, 0
    %v1882 = vsel %vm1834, 1, 0
    %v1883 = vsel %vm1835, 1, 0
    %v1884 = vsel %vm1836, 1, 0
    %v1885 = vsel %vm1837, 1, 0
    %v1886 = vsel %vm1838, 1, 0
    %v1887 = vsel %vm1839, 1, 0
    %v1888 = vsel %vm1840, 1, 0
    %v1889 = vsel %vm1841, 1, 0
    %v1890 = vsel %vm1842, 1, 0
    %v1891 = vsel %vm1843, 1, 0
    %v1892 = vsel %vm1844, 1, 0
    %vm1893 = vcmp.eq.s32.totalorder %v1845, 1
    %vm1894 = vcmp.eq.s32.totalorder %v1846, 1
    %vm1895 = vcmp.eq.s32.totalorder %v1847, 1
    %vm1896 = vcmp.eq.s32.totalorder %v1848, 1
    %vm1897 = vcmp.eq.s32.totalorder %v1849, 1
    %vm1898 = vcmp.eq.s32.totalorder %v1850, 1
    %vm1899 = vcmp.eq.s32.totalorder %v1851, 1
    %vm1900 = vcmp.eq.s32.totalorder %v1852, 1
    %vm1901 = vcmp.eq.s32.totalorder %v1853, 1
    %vm1902 = vcmp.eq.s32.totalorder %v1854, 1
    %vm1903 = vcmp.eq.s32.totalorder %v1855, 1
    %vm1904 = vcmp.eq.s32.totalorder %v1856, 1
    %vm1905 = vcmp.eq.s32.totalorder %v1857, 1
    %vm1906 = vcmp.eq.s32.totalorder %v1858, 1
    %vm1907 = vcmp.eq.s32.totalorder %v1859, 1
    %vm1908 = vcmp.eq.s32.totalorder %v1860, 1
    %vm1909 = vcmp.eq.s32.totalorder %v1861, 1
    %vm1910 = vcmp.eq.s32.totalorder %v1862, 1
    %vm1911 = vcmp.eq.s32.totalorder %v1863, 1
    %vm1912 = vcmp.eq.s32.totalorder %v1864, 1
    %vm1913 = vcmp.eq.s32.totalorder %v1865, 1
    %vm1914 = vcmp.eq.s32.totalorder %v1866, 1
    %vm1915 = vcmp.eq.s32.totalorder %v1867, 1
    %vm1916 = vcmp.eq.s32.totalorder %v1868, 1
    %vm1917 = vcmp.eq.s32.totalorder %v1869, 1
    %vm1918 = vcmp.eq.s32.totalorder %v1870, 1
    %vm1919 = vcmp.eq.s32.totalorder %v1871, 1
    %vm1920 = vcmp.eq.s32.totalorder %v1872, 1
    %vm1921 = vcmp.eq.s32.totalorder %v1873, 1
    %vm1922 = vcmp.eq.s32.totalorder %v1874, 1
    %vm1923 = vcmp.eq.s32.totalorder %v1875, 1
    %vm1924 = vcmp.eq.s32.totalorder %v1876, 1
    %vm1925 = vcmp.eq.s32.totalorder %v1877, 1
    %vm1926 = vcmp.eq.s32.totalorder %v1878, 1
    %vm1927 = vcmp.eq.s32.totalorder %v1879, 1
    %vm1928 = vcmp.eq.s32.totalorder %v1880, 1
    %vm1929 = vcmp.eq.s32.totalorder %v1881, 1
    %vm1930 = vcmp.eq.s32.totalorder %v1882, 1
    %vm1931 = vcmp.eq.s32.totalorder %v1883, 1
    %vm1932 = vcmp.eq.s32.totalorder %v1884, 1
    %vm1933 = vcmp.eq.s32.totalorder %v1885, 1
    %vm1934 = vcmp.eq.s32.totalorder %v1886, 1
    %vm1935 = vcmp.eq.s32.totalorder %v1887, 1
    %vm1936 = vcmp.eq.s32.totalorder %v1888, 1
    %vm1937 = vcmp.eq.s32.totalorder %v1889, 1
    %vm1938 = vcmp.eq.s32.totalorder %v1890, 1
    %vm1939 = vcmp.eq.s32.totalorder %v1891, 1
    %vm1940 = vcmp.eq.s32.totalorder %v1892, 1
    %v1941 = vsel %vm1893, %v43, 0.0
    %v1942 = vsel %vm1894, %v44, 0.0
    %v1943 = vsel %vm1895, %v45, 0.0
    %v1944 = vsel %vm1896, %v46, 0.0
    %v1945 = vsel %vm1897, %v47, 0.0
    %v1946 = vsel %vm1898, %v48, 0.0
    %v1947 = vsel %vm1899, %v49, 0.0
    %v1948 = vsel %vm1900, %v50, 0.0
    %v1949 = vsel %vm1901, %v51, 0.0
    %v1950 = vsel %vm1902, %v52, 0.0
    %v1951 = vsel %vm1903, %v53, 0.0
    %v1952 = vsel %vm1904, %v54, 0.0
    %v1953 = vsel %vm1905, %v55, 0.0
    %v1954 = vsel %vm1906, %v56, 0.0
    %v1955 = vsel %vm1907, %v57, 0.0
    %v1956 = vsel %vm1908, %v58, 0.0
    %v1957 = vsel %vm1909, %v59, 0.0
    %v1958 = vsel %vm1910, %v60, 0.0
    %v1959 = vsel %vm1911, %v61, 0.0
    %v1960 = vsel %vm1912, %v62, 0.0
    %v1961 = vsel %vm1913, %v63, 0.0
    %v1962 = vsel %vm1914, %v64, 0.0
    %v1963 = vsel %vm1915, %v65, 0.0
    %v1964 = vsel %vm1916, %v66, 0.0
    %v1965 = vsel %vm1917, %v67, 0.0
    %v1966 = vsel %vm1918, %v68, 0.0
    %v1967 = vsel %vm1919, %v69, 0.0
    %v1968 = vsel %vm1920, %v70, 0.0
    %v1969 = vsel %vm1921, %v71, 0.0
    %v1970 = vsel %vm1922, %v72, 0.0
    %v1971 = vsel %vm1923, %v73, 0.0
    %v1972 = vsel %vm1924, %v74, 0.0
    %v1973 = vsel %vm1925, %v75, 0.0
    %v1974 = vsel %vm1926, %v76, 0.0
    %v1975 = vsel %vm1927, %v77, 0.0
    %v1976 = vsel %vm1928, %v78, 0.0
    %v1977 = vsel %vm1929, %v79, 0.0
    %v1978 = vsel %vm1930, %v80, 0.0
    %v1979 = vsel %vm1931, %v81, 0.0
    %v1980 = vsel %vm1932, %v82, 0.0
    %v1981 = vsel %vm1933, %v83, 0.0
    %v1982 = vsel %vm1934, %v84, 0.0
    %v1983 = vsel %vm1935, %v85, 0.0
    %v1984 = vsel %vm1936, %v86, 0.0
    %v1985 = vsel %vm1937, %v87, 0.0
    %v1986 = vsel %vm1938, %v88, 0.0
    %v1987 = vsel %vm1939, %v89, 0.0
    %v1988 = vsel %vm1940, %v90, 0.0
    %v1989 = vsel %vm1699, 1, 0
    %v1990 = vsel %vm1700, 1, 0
    %v1991 = vsel %vm1701, 1, 0
    %v1992 = vadd.s32 %v1989, %v1990
    %v1993 = vadd.s32 %v1992, %v1991
    %v1994 = vand.u32 %v1993, 65535
    %v1995 = vshrl.u32 %v1993, 16
    %v1996 = vcvt.s32.f32 %v1994
    %v1997 = vcvt.s32.f32 %v1995
    %1998 = vadd.xlane.f32.xlu0 %v1996
    %v1999 = vpop.xlane.xlu0 %1998
    %2000 = vadd.xlane.f32.xlu0 %v1997
    %v2001 = vpop.xlane.xlu0 %2000
    %v2002 = vcvt.f32.s32 %v1999
    %v2003 = vcvt.f32.s32 %v2001
    %v2004 = vshll.u32 %v2003, 16
    %v2005 = vadd.s32 %v2004, %v2002
    %vm2006 = vcmask 7168
    %2007 = vst.msk [vmem:[%s4] sm:$0xff] %vm2006, %v2005
    %v2008 = vcvt.s32.f32 %v1989
    %v2009 = vcvt.s32.f32 %v1990
    %v2010 = vcvt.s32.f32 %v1991
    %2011 = vmatprep.subr.mxu0 0.0
    %v2012 = vand.u32 %v1956, 4294901760
    %2013 = vmatpush1.msra.mxu0 %v2012
    %2014 = vmatprep.subr.mxu0 0.0
    %v2015 = vand.u32 %v1955, 4294901760
    %2016 = vmatpush1.msra.mxu0 %v2015
    %2017 = vmatprep.subr.mxu0 0.0
    %v2018 = vand.u32 %v1954, 4294901760
    %2019 = vmatpush1.msra.mxu0 %v2018
    %2020 = vmatprep.subr.mxu0 0.0
    %v2021 = vand.u32 %v1953, 4294901760
    %2022 = vmatpush1.msra.mxu0 %v2021
    %2023 = vmatprep.subr.mxu0 0.0
    %v2024 = vand.u32 %v1952, 4294901760
    %2025 = vmatpush1.msra.mxu0 %v2024
    %2026 = vmatprep.subr.mxu0 0.0
    %v2027 = vand.u32 %v1951, 4294901760
    %2028 = vmatpush1.msra.mxu0 %v2027
    %2029 = vmatprep.subr.mxu0 0.0
    %v2030 = vand.u32 %v1950, 4294901760
    %2031 = vmatpush1.msra.mxu0 %v2030
    %2032 = vmatprep.subr.mxu0 0.0
    %v2033 = vand.u32 %v1949, 4294901760
    %2034 = vmatpush1.msra.mxu0 %v2033
    %2035 = vmatprep.subr.mxu0 0.0
    %v2036 = vand.u32 %v1948, 4294901760
    %2037 = vmatpush1.msra.mxu0 %v2036
    %2038 = vmatprep.subr.mxu0 0.0
    %v2039 = vand.u32 %v1947, 4294901760
    %2040 = vmatpush1.msra.mxu0 %v2039
    %2041 = vmatprep.subr.mxu0 0.0
    %v2042 = vand.u32 %v1946, 4294901760
    %2043 = vmatpush1.msra.mxu0 %v2042
    %2044 = vmatprep.subr.mxu0 0.0
    %v2045 = vand.u32 %v1945, 4294901760
    %2046 = vmatpush1.msra.mxu0 %v2045
    %2047 = vmatprep.subr.mxu0 0.0
    %v2048 = vand.u32 %v1944, 4294901760
    %2049 = vmatpush1.msra.mxu0 %v2048
    %2050 = vmatprep.subr.mxu0 0.0
    %v2051 = vand.u32 %v1943, 4294901760
    %2052 = vmatpush1.msra.mxu0 %v2051
    %2053 = vmatprep.subr.mxu0 0.0
    %v2054 = vand.u32 %v1942, 4294901760
    %2055 = vmatpush1.msra.mxu0 %v2054
    %2056 = vmatprep.subr.mxu0 0.0
    %v2057 = vand.u32 %v1941, 4294901760
    %2058 = vmatpush1.msra.mxu0 %v2057
    %2059 = vmatprep.subr.mxu0 0.0
    %v2060 = vand.u32 %v1972, 4294901760
    %2061 = vmatpush2.msra.mxu0 %v2060
    %2062 = vmatprep.subr.mxu0 0.0
    %v2063 = vand.u32 %v1971, 4294901760
    %2064 = vmatpush2.msra.mxu0 %v2063
    %2065 = vmatprep.subr.mxu0 0.0
    %v2066 = vand.u32 %v1970, 4294901760
    %2067 = vmatpush2.msra.mxu0 %v2066
    %2068 = vmatprep.subr.mxu0 0.0
    %v2069 = vand.u32 %v1969, 4294901760
    %2070 = vmatpush2.msra.mxu0 %v2069
    %2071 = vmatprep.subr.mxu0 0.0
    %v2072 = vand.u32 %v1968, 4294901760
    %2073 = vmatpush2.msra.mxu0 %v2072
    %2074 = vmatprep.subr.mxu0 0.0
    %v2075 = vand.u32 %v1967, 4294901760
    %2076 = vmatpush2.msra.mxu0 %v2075
    %2077 = vmatprep.subr.mxu0 0.0
    %v2078 = vand.u32 %v1966, 4294901760
    %2079 = vmatpush2.msra.mxu0 %v2078
    %2080 = vmatprep.subr.mxu0 0.0
    %v2081 = vand.u32 %v1965, 4294901760
    %2082 = vmatpush2.msra.mxu0 %v2081
    %2083 = vmatprep.subr.mxu0 0.0
    %v2084 = vand.u32 %v1964, 4294901760
    %2085 = vmatpush2.msra.mxu0 %v2084
    %2086 = vmatprep.subr.mxu0 0.0
    %v2087 = vand.u32 %v1963, 4294901760
    %2088 = vmatpush2.msra.mxu0 %v2087
    %2089 = vmatprep.subr.mxu0 0.0
    %v2090 = vand.u32 %v1962, 4294901760
    %2091 = vmatpush2.msra.mxu0 %v2090
    %2092 = vmatprep.subr.mxu0 0.0
    %v2093 = vand.u32 %v1961, 4294901760
    %2094 = vmatpush2.msra.mxu0 %v2093
    %2095 = vmatprep.subr.mxu0 0.0
    %v2096 = vand.u32 %v1960, 4294901760
    %2097 = vmatpush2.msra.mxu0 %v2096
    %2098 = vmatprep.subr.mxu0 0.0
    %v2099 = vand.u32 %v1959, 4294901760
    %2100 = vmatpush2.msra.mxu0 %v2099
    %2101 = vmatprep.subr.mxu0 0.0
    %v2102 = vand.u32 %v1958, 4294901760
    %2103 = vmatpush2.msra.mxu0 %v2102
    %2104 = vmatprep.subr.mxu0 0.0
    %v2105 = vand.u32 %v1957, 4294901760
    %2106 = vmatpush2.msra.mxu0 %v2105
    %v2107 = vand.u32 %v2009, 4294901760
    %v2108 = vsub.f32 %v2009, %v2107
    %v2109 = vand.u32 %v2108, 4294901760
    %v2110 = vsub.f32 %v2108, %v2109
    %v2111 = vand.u32 %v2110, 4294901760
    %2112 = vmatprep.mubr.f32.mxu0 %v2111
    %v2113 = vand.u32 %v2008, 4294901760
    %v2114 = vsub.f32 %v2008, %v2113
    %v2115 = vand.u32 %v2114, 4294901760
    %v2116 = vsub.f32 %v2114, %v2115
    %v2117 = vand.u32 %v2116, 4294901760
    %2118 = vmatmul.mubr.f32.gmra.mxu0 %v2117
    %v2119 = vpop.f32.mrf.mxu0
    %v2120 = vadd.f32 0.0, %v2119
    %v2121 = vpop.f32.mrf.mxu0
    %2122 = vdwg.mxu0
    %2123 = vmatprep.subr.mxu0 0.0
    %v2124 = vand.u32 %v1956, 4294901760
    %v2125 = vsub.f32 %v1956, %v2124
    %v2126 = vand.u32 %v2125, 4294901760
    %v2127 = vsub.f32 %v2125, %v2126
    %v2128 = vand.u32 %v2127, 4294901760
    %2129 = vmatpush1.msra.mxu0 %v2128
    %2130 = vmatprep.subr.mxu0 0.0
    %v2131 = vand.u32 %v1955, 4294901760
    %v2132 = vsub.f32 %v1955, %v2131
    %v2133 = vand.u32 %v2132, 4294901760
    %v2134 = vsub.f32 %v2132, %v2133
    %v2135 = vand.u32 %v2134, 4294901760
    %2136 = vmatpush1.msra.mxu0 %v2135
    %2137 = vmatprep.subr.mxu0 0.0
    %v2138 = vand.u32 %v1954, 4294901760
    %v2139 = vsub.f32 %v1954, %v2138
    %v2140 = vand.u32 %v2139, 4294901760
    %v2141 = vsub.f32 %v2139, %v2140
    %v2142 = vand.u32 %v2141, 4294901760
    %2143 = vmatpush1.msra.mxu0 %v2142
    %2144 = vmatprep.subr.mxu0 0.0
    %v2145 = vand.u32 %v1953, 4294901760
    %v2146 = vsub.f32 %v1953, %v2145
    %v2147 = vand.u32 %v2146, 4294901760
    %v2148 = vsub.f32 %v2146, %v2147
    %v2149 = vand.u32 %v2148, 4294901760
    %2150 = vmatpush1.msra.mxu0 %v2149
    %2151 = vmatprep.subr.mxu0 0.0
    %v2152 = vand.u32 %v1952, 4294901760
    %v2153 = vsub.f32 %v1952, %v2152
    %v2154 = vand.u32 %v2153, 4294901760
    %v2155 = vsub.f32 %v2153, %v2154
    %v2156 = vand.u32 %v2155, 4294901760
    %2157 = vmatpush1.msra.mxu0 %v2156
    %2158 = vmatprep.subr.mxu0 0.0
    %v2159 = vand.u32 %v1951, 4294901760
    %v2160 = vsub.f32 %v1951, %v2159
    %v2161 = vand.u32 %v2160, 4294901760
    %v2162 = vsub.f32 %v2160, %v2161
    %v2163 = vand.u32 %v2162, 4294901760
    %2164 = vmatpush1.msra.mxu0 %v2163
    %2165 = vmatprep.subr.mxu0 0.0
    %v2166 = vand.u32 %v1950, 4294901760
    %v2167 = vsub.f32 %v1950, %v2166
    %v2168 = vand.u32 %v2167, 4294901760
    %v2169 = vsub.f32 %v2167, %v2168
    %v2170 = vand.u32 %v2169, 4294901760
    %2171 = vmatpush1.msra.mxu0 %v2170
    %2172 = vmatprep.subr.mxu0 0.0
    %v2173 = vand.u32 %v1949, 4294901760
    %v2174 = vsub.f32 %v1949, %v2173
    %v2175 = vand.u32 %v2174, 4294901760
    %v2176 = vsub.f32 %v2174, %v2175
    %v2177 = vand.u32 %v2176, 4294901760
    %2178 = vmatpush1.msra.mxu0 %v2177
    %2179 = vmatprep.subr.mxu0 0.0
    %v2180 = vand.u32 %v1948, 4294901760
    %v2181 = vsub.f32 %v1948, %v2180
    %v2182 = vand.u32 %v2181, 4294901760
    %v2183 = vsub.f32 %v2181, %v2182
    %v2184 = vand.u32 %v2183, 4294901760
    %2185 = vmatpush1.msra.mxu0 %v2184
    %2186 = vmatprep.subr.mxu0 0.0
    %v2187 = vand.u32 %v1947, 4294901760
    %v2188 = vsub.f32 %v1947, %v2187
    %v2189 = vand.u32 %v2188, 4294901760
    %v2190 = vsub.f32 %v2188, %v2189
    %v2191 = vand.u32 %v2190, 4294901760
    %2192 = vmatpush1.msra.mxu0 %v2191
    %2193 = vmatprep.subr.mxu0 0.0
    %v2194 = vand.u32 %v1946, 4294901760
    %v2195 = vsub.f32 %v1946, %v2194
    %v2196 = vand.u32 %v2195, 4294901760
    %v2197 = vsub.f32 %v2195, %v2196
    %v2198 = vand.u32 %v2197, 4294901760
    %2199 = vmatpush1.msra.mxu0 %v2198
    %2200 = vmatprep.subr.mxu0 0.0
    %v2201 = vand.u32 %v1945, 4294901760
    %v2202 = vsub.f32 %v1945, %v2201
    %v2203 = vand.u32 %v2202, 4294901760
    %v2204 = vsub.f32 %v2202, %v2203
    %v2205 = vand.u32 %v2204, 4294901760
    %2206 = vmatpush1.msra.mxu0 %v2205
    %2207 = vmatprep.subr.mxu0 0.0
    %v2208 = vand.u32 %v1944, 4294901760
    %v2209 = vsub.f32 %v1944, %v2208
    %v2210 = vand.u32 %v2209, 4294901760
    %v2211 = vsub.f32 %v2209, %v2210
    %v2212 = vand.u32 %v2211, 4294901760
    %2213 = vmatpush1.msra.mxu0 %v2212
    %2214 = vmatprep.subr.mxu0 0.0
    %v2215 = vand.u32 %v1943, 4294901760
    %v2216 = vsub.f32 %v1943, %v2215
    %v2217 = vand.u32 %v2216, 4294901760
    %v2218 = vsub.f32 %v2216, %v2217
    %v2219 = vand.u32 %v2218, 4294901760
    %2220 = vmatpush1.msra.mxu0 %v2219
    %2221 = vmatprep.subr.mxu0 0.0
    %v2222 = vand.u32 %v1942, 4294901760
    %v2223 = vsub.f32 %v1942, %v2222
    %v2224 = vand.u32 %v2223, 4294901760
    %v2225 = vsub.f32 %v2223, %v2224
    %v2226 = vand.u32 %v2225, 4294901760
    %2227 = vmatpush1.msra.mxu0 %v2226
    %2228 = vmatprep.subr.mxu0 0.0
    %v2229 = vand.u32 %v1941, 4294901760
    %v2230 = vsub.f32 %v1941, %v2229
    %v2231 = vand.u32 %v2230, 4294901760
    %v2232 = vsub.f32 %v2230, %v2231
    %v2233 = vand.u32 %v2232, 4294901760
    %2234 = vmatpush1.msra.mxu0 %v2233
    %2235 = vmatprep.subr.mxu0 0.0
    %v2236 = vand.u32 %v1972, 4294901760
    %v2237 = vsub.f32 %v1972, %v2236
    %v2238 = vand.u32 %v2237, 4294901760
    %v2239 = vsub.f32 %v2237, %v2238
    %v2240 = vand.u32 %v2239, 4294901760
    %2241 = vmatpush2.msra.mxu0 %v2240
    %2242 = vmatprep.subr.mxu0 0.0
    %v2243 = vand.u32 %v1971, 4294901760
    %v2244 = vsub.f32 %v1971, %v2243
    %v2245 = vand.u32 %v2244, 4294901760
    %v2246 = vsub.f32 %v2244, %v2245
    %v2247 = vand.u32 %v2246, 4294901760
    %2248 = vmatpush2.msra.mxu0 %v2247
    %2249 = vmatprep.subr.mxu0 0.0
    %v2250 = vand.u32 %v1970, 4294901760
    %v2251 = vsub.f32 %v1970, %v2250
    %v2252 = vand.u32 %v2251, 4294901760
    %v2253 = vsub.f32 %v2251, %v2252
    %v2254 = vand.u32 %v2253, 4294901760
    %2255 = vmatpush2.msra.mxu0 %v2254
    %2256 = vmatprep.subr.mxu0 0.0
    %v2257 = vand.u32 %v1969, 4294901760
    %v2258 = vsub.f32 %v1969, %v2257
    %v2259 = vand.u32 %v2258, 4294901760
    %v2260 = vsub.f32 %v2258, %v2259
    %v2261 = vand.u32 %v2260, 4294901760
    %2262 = vmatpush2.msra.mxu0 %v2261
    %2263 = vmatprep.subr.mxu0 0.0
    %v2264 = vand.u32 %v1968, 4294901760
    %v2265 = vsub.f32 %v1968, %v2264
    %v2266 = vand.u32 %v2265, 4294901760
    %v2267 = vsub.f32 %v2265, %v2266
    %v2268 = vand.u32 %v2267, 4294901760
    %2269 = vmatpush2.msra.mxu0 %v2268
    %2270 = vmatprep.subr.mxu0 0.0
    %v2271 = vand.u32 %v1967, 4294901760
    %v2272 = vsub.f32 %v1967, %v2271
    %v2273 = vand.u32 %v2272, 4294901760
    %v2274 = vsub.f32 %v2272, %v2273
    %v2275 = vand.u32 %v2274, 4294901760
    %2276 = vmatpush2.msra.mxu0 %v2275
    %2277 = vmatprep.subr.mxu0 0.0
    %v2278 = vand.u32 %v1966, 4294901760
    %v2279 = vsub.f32 %v1966, %v2278
    %v2280 = vand.u32 %v2279, 4294901760
    %v2281 = vsub.f32 %v2279, %v2280
    %v2282 = vand.u32 %v2281, 4294901760
    %2283 = vmatpush2.msra.mxu0 %v2282
    %2284 = vmatprep.subr.mxu0 0.0
    %v2285 = vand.u32 %v1965, 4294901760
    %v2286 = vsub.f32 %v1965, %v2285
    %v2287 = vand.u32 %v2286, 4294901760
    %v2288 = vsub.f32 %v2286, %v2287
    %v2289 = vand.u32 %v2288, 4294901760
    %2290 = vmatpush2.msra.mxu0 %v2289
    %2291 = vmatprep.subr.mxu0 0.0
    %v2292 = vand.u32 %v1964, 4294901760
    %v2293 = vsub.f32 %v1964, %v2292
    %v2294 = vand.u32 %v2293, 4294901760
    %v2295 = vsub.f32 %v2293, %v2294
    %v2296 = vand.u32 %v2295, 4294901760
    %2297 = vmatpush2.msra.mxu0 %v2296
    %2298 = vmatprep.subr.mxu0 0.0
    %v2299 = vand.u32 %v1963, 4294901760
    %v2300 = vsub.f32 %v1963, %v2299
    %v2301 = vand.u32 %v2300, 4294901760
    %v2302 = vsub.f32 %v2300, %v2301
    %v2303 = vand.u32 %v2302, 4294901760
    %2304 = vmatpush2.msra.mxu0 %v2303
    %2305 = vmatprep.subr.mxu0 0.0
    %v2306 = vand.u32 %v1962, 4294901760
    %v2307 = vsub.f32 %v1962, %v2306
    %v2308 = vand.u32 %v2307, 4294901760
    %v2309 = vsub.f32 %v2307, %v2308
    %v2310 = vand.u32 %v2309, 4294901760
    %2311 = vmatpush2.msra.mxu0 %v2310
    %2312 = vmatprep.subr.mxu0 0.0
    %v2313 = vand.u32 %v1961, 4294901760
    %v2314 = vsub.f32 %v1961, %v2313
    %v2315 = vand.u32 %v2314, 4294901760
    %v2316 = vsub.f32 %v2314, %v2315
    %v2317 = vand.u32 %v2316, 4294901760
    %2318 = vmatpush2.msra.mxu0 %v2317
    %2319 = vmatprep.subr.mxu0 0.0
    %v2320 = vand.u32 %v1960, 4294901760
    %v2321 = vsub.f32 %v1960, %v2320
    %v2322 = vand.u32 %v2321, 4294901760
    %v2323 = vsub.f32 %v2321, %v2322
    %v2324 = vand.u32 %v2323, 4294901760
    %2325 = vmatpush2.msra.mxu0 %v2324
    %2326 = vmatprep.subr.mxu0 0.0
    %v2327 = vand.u32 %v1959, 4294901760
    %v2328 = vsub.f32 %v1959, %v2327
    %v2329 = vand.u32 %v2328, 4294901760
    %v2330 = vsub.f32 %v2328, %v2329
    %v2331 = vand.u32 %v2330, 4294901760
    %2332 = vmatpush2.msra.mxu0 %v2331
    %2333 = vmatprep.subr.mxu0 0.0
    %v2334 = vand.u32 %v1958, 4294901760
    %v2335 = vsub.f32 %v1958, %v2334
    %v2336 = vand.u32 %v2335, 4294901760
    %v2337 = vsub.f32 %v2335, %v2336
    %v2338 = vand.u32 %v2337, 4294901760
    %2339 = vmatpush2.msra.mxu0 %v2338
    %2340 = vmatprep.subr.mxu0 0.0
    %v2341 = vand.u32 %v1957, 4294901760
    %v2342 = vsub.f32 %v1957, %v2341
    %v2343 = vand.u32 %v2342, 4294901760
    %v2344 = vsub.f32 %v2342, %v2343
    %v2345 = vand.u32 %v2344, 4294901760
    %2346 = vmatpush2.msra.mxu0 %v2345
    %v2347 = vand.u32 %v2009, 4294901760
    %2348 = vmatprep.mubr.f32.mxu0 %v2347
    %v2349 = vand.u32 %v2008, 4294901760
    %2350 = vmatmul.mubr.f32.gmra.mxu0 %v2349
    %v2351 = vpop.f32.mrf.mxu0
    %v2352 = vadd.f32 %v2120, %v2351
    %v2353 = vpop.f32.mrf.mxu0
    %2354 = vdwg.mxu0
    %2355 = vmatprep.subr.mxu0 0.0
    %v2356 = vand.u32 %v1956, 4294901760
    %v2357 = vsub.f32 %v1956, %v2356
    %2358 = vmatpush1.msra.mxu0 %v2357
    %2359 = vmatprep.subr.mxu0 0.0
    %v2360 = vand.u32 %v1955, 4294901760
    %v2361 = vsub.f32 %v1955, %v2360
    %2362 = vmatpush1.msra.mxu0 %v2361
    %2363 = vmatprep.subr.mxu0 0.0
    %v2364 = vand.u32 %v1954, 4294901760
    %v2365 = vsub.f32 %v1954, %v2364
    %2366 = vmatpush1.msra.mxu0 %v2365
    %2367 = vmatprep.subr.mxu0 0.0
    %v2368 = vand.u32 %v1953, 4294901760
    %v2369 = vsub.f32 %v1953, %v2368
    %2370 = vmatpush1.msra.mxu0 %v2369
    %2371 = vmatprep.subr.mxu0 0.0
    %v2372 = vand.u32 %v1952, 4294901760
    %v2373 = vsub.f32 %v1952, %v2372
    %2374 = vmatpush1.msra.mxu0 %v2373
    %2375 = vmatprep.subr.mxu0 0.0
    %v2376 = vand.u32 %v1951, 4294901760
    %v2377 = vsub.f32 %v1951, %v2376
    %2378 = vmatpush1.msra.mxu0 %v2377
    %2379 = vmatprep.subr.mxu0 0.0
    %v2380 = vand.u32 %v1950, 4294901760
    %v2381 = vsub.f32 %v1950, %v2380
    %2382 = vmatpush1.msra.mxu0 %v2381
    %2383 = vmatprep.subr.mxu0 0.0
    %v2384 = vand.u32 %v1949, 4294901760
    %v2385 = vsub.f32 %v1949, %v2384
    %2386 = vmatpush1.msra.mxu0 %v2385
    %2387 = vmatprep.subr.mxu0 0.0
    %v2388 = vand.u32 %v1948, 4294901760
    %v2389 = vsub.f32 %v1948, %v2388
    %2390 = vmatpush1.msra.mxu0 %v2389
    %2391 = vmatprep.subr.mxu0 0.0
    %v2392 = vand.u32 %v1947, 4294901760
    %v2393 = vsub.f32 %v1947, %v2392
    %2394 = vmatpush1.msra.mxu0 %v2393
    %2395 = vmatprep.subr.mxu0 0.0
    %v2396 = vand.u32 %v1946, 4294901760
    %v2397 = vsub.f32 %v1946, %v2396
    %2398 = vmatpush1.msra.mxu0 %v2397
    %2399 = vmatprep.subr.mxu0 0.0
    %v2400 = vand.u32 %v1945, 4294901760
    %v2401 = vsub.f32 %v1945, %v2400
    %2402 = vmatpush1.msra.mxu0 %v2401
    %2403 = vmatprep.subr.mxu0 0.0
    %v2404 = vand.u32 %v1944, 4294901760
    %v2405 = vsub.f32 %v1944, %v2404
    %2406 = vmatpush1.msra.mxu0 %v2405
    %2407 = vmatprep.subr.mxu0 0.0
    %v2408 = vand.u32 %v1943, 4294901760
    %v2409 = vsub.f32 %v1943, %v2408
    %2410 = vmatpush1.msra.mxu0 %v2409
    %2411 = vmatprep.subr.mxu0 0.0
    %v2412 = vand.u32 %v1942, 4294901760
    %v2413 = vsub.f32 %v1942, %v2412
    %2414 = vmatpush1.msra.mxu0 %v2413
    %2415 = vmatprep.subr.mxu0 0.0
    %v2416 = vand.u32 %v1941, 4294901760
    %v2417 = vsub.f32 %v1941, %v2416
    %2418 = vmatpush1.msra.mxu0 %v2417
    %2419 = vmatprep.subr.mxu0 0.0
    %v2420 = vand.u32 %v1972, 4294901760
    %v2421 = vsub.f32 %v1972, %v2420
    %2422 = vmatpush2.msra.mxu0 %v2421
    %2423 = vmatprep.subr.mxu0 0.0
    %v2424 = vand.u32 %v1971, 4294901760
    %v2425 = vsub.f32 %v1971, %v2424
    %2426 = vmatpush2.msra.mxu0 %v2425
    %2427 = vmatprep.subr.mxu0 0.0
    %v2428 = vand.u32 %v1970, 4294901760
    %v2429 = vsub.f32 %v1970, %v2428
    %2430 = vmatpush2.msra.mxu0 %v2429
    %2431 = vmatprep.subr.mxu0 0.0
    %v2432 = vand.u32 %v1969, 4294901760
    %v2433 = vsub.f32 %v1969, %v2432
    %2434 = vmatpush2.msra.mxu0 %v2433
    %2435 = vmatprep.subr.mxu0 0.0
    %v2436 = vand.u32 %v1968, 4294901760
    %v2437 = vsub.f32 %v1968, %v2436
    %2438 = vmatpush2.msra.mxu0 %v2437
    %2439 = vmatprep.subr.mxu0 0.0
    %v2440 = vand.u32 %v1967, 4294901760
    %v2441 = vsub.f32 %v1967, %v2440
    %2442 = vmatpush2.msra.mxu0 %v2441
    %2443 = vmatprep.subr.mxu0 0.0
    %v2444 = vand.u32 %v1966, 4294901760
    %v2445 = vsub.f32 %v1966, %v2444
    %2446 = vmatpush2.msra.mxu0 %v2445
    %2447 = vmatprep.subr.mxu0 0.0
    %v2448 = vand.u32 %v1965, 4294901760
    %v2449 = vsub.f32 %v1965, %v2448
    %2450 = vmatpush2.msra.mxu0 %v2449
    %2451 = vmatprep.subr.mxu0 0.0
    %v2452 = vand.u32 %v1964, 4294901760
    %v2453 = vsub.f32 %v1964, %v2452
    %2454 = vmatpush2.msra.mxu0 %v2453
    %2455 = vmatprep.subr.mxu0 0.0
    %v2456 = vand.u32 %v1963, 4294901760
    %v2457 = vsub.f32 %v1963, %v2456
    %2458 = vmatpush2.msra.mxu0 %v2457
    %2459 = vmatprep.subr.mxu0 0.0
    %v2460 = vand.u32 %v1962, 4294901760
    %v2461 = vsub.f32 %v1962, %v2460
    %2462 = vmatpush2.msra.mxu0 %v2461
    %2463 = vmatprep.subr.mxu0 0.0
    %v2464 = vand.u32 %v1961, 4294901760
    %v2465 = vsub.f32 %v1961, %v2464
    %2466 = vmatpush2.msra.mxu0 %v2465
    %2467 = vmatprep.subr.mxu0 0.0
    %v2468 = vand.u32 %v1960, 4294901760
    %v2469 = vsub.f32 %v1960, %v2468
    %2470 = vmatpush2.msra.mxu0 %v2469
    %2471 = vmatprep.subr.mxu0 0.0
    %v2472 = vand.u32 %v1959, 4294901760
    %v2473 = vsub.f32 %v1959, %v2472
    %2474 = vmatpush2.msra.mxu0 %v2473
    %2475 = vmatprep.subr.mxu0 0.0
    %v2476 = vand.u32 %v1958, 4294901760
    %v2477 = vsub.f32 %v1958, %v2476
    %2478 = vmatpush2.msra.mxu0 %v2477
    %2479 = vmatprep.subr.mxu0 0.0
    %v2480 = vand.u32 %v1957, 4294901760
    %v2481 = vsub.f32 %v1957, %v2480
    %2482 = vmatpush2.msra.mxu0 %v2481
    %v2483 = vand.u32 %v2009, 4294901760
    %v2484 = vsub.f32 %v2009, %v2483
    %2485 = vmatprep.mubr.f32.mxu0 %v2484
    %v2486 = vand.u32 %v2008, 4294901760
    %v2487 = vsub.f32 %v2008, %v2486
    %2488 = vmatmul.mubr.f32.gmra.mxu0 %v2487
    %v2489 = vpop.f32.mrf.mxu0
    %v2490 = vadd.f32 %v2352, %v2489
    %v2491 = vpop.f32.mrf.mxu0
    %2492 = vdwg.mxu0
    %2493 = vmatprep.subr.mxu0 0.0
    %v2494 = vand.u32 %v1956, 4294901760
    %2495 = vmatpush1.msra.mxu0 %v2494
    %2496 = vmatprep.subr.mxu0 0.0
    %v2497 = vand.u32 %v1955, 4294901760
    %2498 = vmatpush1.msra.mxu0 %v2497
    %2499 = vmatprep.subr.mxu0 0.0
    %v2500 = vand.u32 %v1954, 4294901760
    %2501 = vmatpush1.msra.mxu0 %v2500
    %2502 = vmatprep.subr.mxu0 0.0
    %v2503 = vand.u32 %v1953, 4294901760
    %2504 = vmatpush1.msra.mxu0 %v2503
    %2505 = vmatprep.subr.mxu0 0.0
    %v2506 = vand.u32 %v1952, 4294901760
    %2507 = vmatpush1.msra.mxu0 %v2506
    %2508 = vmatprep.subr.mxu0 0.0
    %v2509 = vand.u32 %v1951, 4294901760
    %2510 = vmatpush1.msra.mxu0 %v2509
    %2511 = vmatprep.subr.mxu0 0.0
    %v2512 = vand.u32 %v1950, 4294901760
    %2513 = vmatpush1.msra.mxu0 %v2512
    %2514 = vmatprep.subr.mxu0 0.0
    %v2515 = vand.u32 %v1949, 4294901760
    %2516 = vmatpush1.msra.mxu0 %v2515
    %2517 = vmatprep.subr.mxu0 0.0
    %v2518 = vand.u32 %v1948, 4294901760
    %2519 = vmatpush1.msra.mxu0 %v2518
    %2520 = vmatprep.subr.mxu0 0.0
    %v2521 = vand.u32 %v1947, 4294901760
    %2522 = vmatpush1.msra.mxu0 %v2521
    %2523 = vmatprep.subr.mxu0 0.0
    %v2524 = vand.u32 %v1946, 4294901760
    %2525 = vmatpush1.msra.mxu0 %v2524
    %2526 = vmatprep.subr.mxu0 0.0
    %v2527 = vand.u32 %v1945, 4294901760
    %2528 = vmatpush1.msra.mxu0 %v2527
    %2529 = vmatprep.subr.mxu0 0.0
    %v2530 = vand.u32 %v1944, 4294901760
    %2531 = vmatpush1.msra.mxu0 %v2530
    %2532 = vmatprep.subr.mxu0 0.0
    %v2533 = vand.u32 %v1943, 4294901760
    %2534 = vmatpush1.msra.mxu0 %v2533
    %2535 = vmatprep.subr.mxu0 0.0
    %v2536 = vand.u32 %v1942, 4294901760
    %2537 = vmatpush1.msra.mxu0 %v2536
    %2538 = vmatprep.subr.mxu0 0.0
    %v2539 = vand.u32 %v1941, 4294901760
    %2540 = vmatpush1.msra.mxu0 %v2539
    %2541 = vmatprep.subr.mxu0 0.0
    %v2542 = vand.u32 %v1972, 4294901760
    %2543 = vmatpush2.msra.mxu0 %v2542
    %2544 = vmatprep.subr.mxu0 0.0
    %v2545 = vand.u32 %v1971, 4294901760
    %2546 = vmatpush2.msra.mxu0 %v2545
    %2547 = vmatprep.subr.mxu0 0.0
    %v2548 = vand.u32 %v1970, 4294901760
    %2549 = vmatpush2.msra.mxu0 %v2548
    %2550 = vmatprep.subr.mxu0 0.0
    %v2551 = vand.u32 %v1969, 4294901760
    %2552 = vmatpush2.msra.mxu0 %v2551
    %2553 = vmatprep.subr.mxu0 0.0
    %v2554 = vand.u32 %v1968, 4294901760
    %2555 = vmatpush2.msra.mxu0 %v2554
    %2556 = vmatprep.subr.mxu0 0.0
    %v2557 = vand.u32 %v1967, 4294901760
    %2558 = vmatpush2.msra.mxu0 %v2557
    %2559 = vmatprep.subr.mxu0 0.0
    %v2560 = vand.u32 %v1966, 4294901760
    %2561 = vmatpush2.msra.mxu0 %v2560
    %2562 = vmatprep.subr.mxu0 0.0
    %v2563 = vand.u32 %v1965, 4294901760
    %2564 = vmatpush2.msra.mxu0 %v2563
    %2565 = vmatprep.subr.mxu0 0.0
    %v2566 = vand.u32 %v1964, 4294901760
    %2567 = vmatpush2.msra.mxu0 %v2566
    %2568 = vmatprep.subr.mxu0 0.0
    %v2569 = vand.u32 %v1963, 4294901760
    %2570 = vmatpush2.msra.mxu0 %v2569
    %2571 = vmatprep.subr.mxu0 0.0
    %v2572 = vand.u32 %v1962, 4294901760
    %2573 = vmatpush2.msra.mxu0 %v2572
    %2574 = vmatprep.subr.mxu0 0.0
    %v2575 = vand.u32 %v1961, 4294901760
    %2576 = vmatpush2.msra.mxu0 %v2575
    %2577 = vmatprep.subr.mxu0 0.0
    %v2578 = vand.u32 %v1960, 4294901760
    %2579 = vmatpush2.msra.mxu0 %v2578
    %2580 = vmatprep.subr.mxu0 0.0
    %v2581 = vand.u32 %v1959, 4294901760
    %2582 = vmatpush2.msra.mxu0 %v2581
    %2583 = vmatprep.subr.mxu0 0.0
    %v2584 = vand.u32 %v1958, 4294901760
    %2585 = vmatpush2.msra.mxu0 %v2584
    %2586 = vmatprep.subr.mxu0 0.0
    %v2587 = vand.u32 %v1957, 4294901760
    %2588 = vmatpush2.msra.mxu0 %v2587
    %v2589 = vand.u32 %v2009, 4294901760
    %v2590 = vsub.f32 %v2009, %v2589
    %v2591 = vand.u32 %v2590, 4294901760
    %2592 = vmatprep.mubr.f32.mxu0 %v2591
    %v2593 = vand.u32 %v2008, 4294901760
    %v2594 = vsub.f32 %v2008, %v2593
    %v2595 = vand.u32 %v2594, 4294901760
    %2596 = vmatmul.mubr.f32.gmra.mxu0 %v2595
    %v2597 = vpop.f32.mrf.mxu0
    %v2598 = vadd.f32 %v2490, %v2597
    %v2599 = vpop.f32.mrf.mxu0
    %2600 = vdwg.mxu0
    %2601 = vmatprep.subr.mxu0 0.0
    %v2602 = vand.u32 %v1956, 4294901760
    %v2603 = vsub.f32 %v1956, %v2602
    %v2604 = vand.u32 %v2603, 4294901760
    %2605 = vmatpush1.msra.mxu0 %v2604
    %2606 = vmatprep.subr.mxu0 0.0
    %v2607 = vand.u32 %v1955, 4294901760
    %v2608 = vsub.f32 %v1955, %v2607
    %v2609 = vand.u32 %v2608, 4294901760
    %2610 = vmatpush1.msra.mxu0 %v2609
    %2611 = vmatprep.subr.mxu0 0.0
    %v2612 = vand.u32 %v1954, 4294901760
    %v2613 = vsub.f32 %v1954, %v2612
    %v2614 = vand.u32 %v2613, 4294901760
    %2615 = vmatpush1.msra.mxu0 %v2614
    %2616 = vmatprep.subr.mxu0 0.0
    %v2617 = vand.u32 %v1953, 4294901760
    %v2618 = vsub.f32 %v1953, %v2617
    %v2619 = vand.u32 %v2618, 4294901760
    %2620 = vmatpush1.msra.mxu0 %v2619
    %2621 = vmatprep.subr.mxu0 0.0
    %v2622 = vand.u32 %v1952, 4294901760
    %v2623 = vsub.f32 %v1952, %v2622
    %v2624 = vand.u32 %v2623, 4294901760
    %2625 = vmatpush1.msra.mxu0 %v2624
    %2626 = vmatprep.subr.mxu0 0.0
    %v2627 = vand.u32 %v1951, 4294901760
    %v2628 = vsub.f32 %v1951, %v2627
    %v2629 = vand.u32 %v2628, 4294901760
    %2630 = vmatpush1.msra.mxu0 %v2629
    %2631 = vmatprep.subr.mxu0 0.0
    %v2632 = vand.u32 %v1950, 4294901760
    %v2633 = vsub.f32 %v1950, %v2632
    %v2634 = vand.u32 %v2633, 4294901760
    %2635 = vmatpush1.msra.mxu0 %v2634
    %2636 = vmatprep.subr.mxu0 0.0
    %v2637 = vand.u32 %v1949, 4294901760
    %v2638 = vsub.f32 %v1949, %v2637
    %v2639 = vand.u32 %v2638, 4294901760
    %2640 = vmatpush1.msra.mxu0 %v2639
    %2641 = vmatprep.subr.mxu0 0.0
    %v2642 = vand.u32 %v1948, 4294901760
    %v2643 = vsub.f32 %v1948, %v2642
    %v2644 = vand.u32 %v2643, 4294901760
    %2645 = vmatpush1.msra.mxu0 %v2644
    %2646 = vmatprep.subr.mxu0 0.0
    %v2647 = vand.u32 %v1947, 4294901760
    %v2648 = vsub.f32 %v1947, %v2647
    %v2649 = vand.u32 %v2648, 4294901760
    %2650 = vmatpush1.msra.mxu0 %v2649
    %2651 = vmatprep.subr.mxu0 0.0
    %v2652 = vand.u32 %v1946, 4294901760
    %v2653 = vsub.f32 %v1946, %v2652
    %v2654 = vand.u32 %v2653, 4294901760
    %2655 = vmatpush1.msra.mxu0 %v2654
    %2656 = vmatprep.subr.mxu0 0.0
    %v2657 = vand.u32 %v1945, 4294901760
    %v2658 = vsub.f32 %v1945, %v2657
    %v2659 = vand.u32 %v2658, 4294901760
    %2660 = vmatpush1.msra.mxu0 %v2659
    %2661 = vmatprep.subr.mxu0 0.0
    %v2662 = vand.u32 %v1944, 4294901760
    %v2663 = vsub.f32 %v1944, %v2662
    %v2664 = vand.u32 %v2663, 4294901760
    %2665 = vmatpush1.msra.mxu0 %v2664
    %2666 = vmatprep.subr.mxu0 0.0
    %v2667 = vand.u32 %v1943, 4294901760
    %v2668 = vsub.f32 %v1943, %v2667
    %v2669 = vand.u32 %v2668, 4294901760
    %2670 = vmatpush1.msra.mxu0 %v2669
    %2671 = vmatprep.subr.mxu0 0.0
    %v2672 = vand.u32 %v1942, 4294901760
    %v2673 = vsub.f32 %v1942, %v2672
    %v2674 = vand.u32 %v2673, 4294901760
    %2675 = vmatpush1.msra.mxu0 %v2674
    %2676 = vmatprep.subr.mxu0 0.0
    %v2677 = vand.u32 %v1941, 4294901760
    %v2678 = vsub.f32 %v1941, %v2677
    %v2679 = vand.u32 %v2678, 4294901760
    %2680 = vmatpush1.msra.mxu0 %v2679
    %2681 = vmatprep.subr.mxu0 0.0
    %v2682 = vand.u32 %v1972, 4294901760
    %v2683 = vsub.f32 %v1972, %v2682
    %v2684 = vand.u32 %v2683, 4294901760
    %2685 = vmatpush2.msra.mxu0 %v2684
    %2686 = vmatprep.subr.mxu0 0.0
    %v2687 = vand.u32 %v1971, 4294901760
    %v2688 = vsub.f32 %v1971, %v2687
    %v2689 = vand.u32 %v2688, 4294901760
    %2690 = vmatpush2.msra.mxu0 %v2689
    %2691 = vmatprep.subr.mxu0 0.0
    %v2692 = vand.u32 %v1970, 4294901760
    %v2693 = vsub.f32 %v1970, %v2692
    %v2694 = vand.u32 %v2693, 4294901760
    %2695 = vmatpush2.msra.mxu0 %v2694
    %2696 = vmatprep.subr.mxu0 0.0
    %v2697 = vand.u32 %v1969, 4294901760
    %v2698 = vsub.f32 %v1969, %v2697
    %v2699 = vand.u32 %v2698, 4294901760
    %2700 = vmatpush2.msra.mxu0 %v2699
    %2701 = vmatprep.subr.mxu0 0.0
    %v2702 = vand.u32 %v1968, 4294901760
    %v2703 = vsub.f32 %v1968, %v2702
    %v2704 = vand.u32 %v2703, 4294901760
    %2705 = vmatpush2.msra.mxu0 %v2704
    %2706 = vmatprep.subr.mxu0 0.0
    %v2707 = vand.u32 %v1967, 4294901760
    %v2708 = vsub.f32 %v1967, %v2707
    %v2709 = vand.u32 %v2708, 4294901760
    %2710 = vmatpush2.msra.mxu0 %v2709
    %2711 = vmatprep.subr.mxu0 0.0
    %v2712 = vand.u32 %v1966, 4294901760
    %v2713 = vsub.f32 %v1966, %v2712
    %v2714 = vand.u32 %v2713, 4294901760
    %2715 = vmatpush2.msra.mxu0 %v2714
    %2716 = vmatprep.subr.mxu0 0.0
    %v2717 = vand.u32 %v1965, 4294901760
    %v2718 = vsub.f32 %v1965, %v2717
    %v2719 = vand.u32 %v2718, 4294901760
    %2720 = vmatpush2.msra.mxu0 %v2719
    %2721 = vmatprep.subr.mxu0 0.0
    %v2722 = vand.u32 %v1964, 4294901760
    %v2723 = vsub.f32 %v1964, %v2722
    %v2724 = vand.u32 %v2723, 4294901760
    %2725 = vmatpush2.msra.mxu0 %v2724
    %2726 = vmatprep.subr.mxu0 0.0
    %v2727 = vand.u32 %v1963, 4294901760
    %v2728 = vsub.f32 %v1963, %v2727
    %v2729 = vand.u32 %v2728, 4294901760
    %2730 = vmatpush2.msra.mxu0 %v2729
    %2731 = vmatprep.subr.mxu0 0.0
    %v2732 = vand.u32 %v1962, 4294901760
    %v2733 = vsub.f32 %v1962, %v2732
    %v2734 = vand.u32 %v2733, 4294901760
    %2735 = vmatpush2.msra.mxu0 %v2734
    %2736 = vmatprep.subr.mxu0 0.0
    %v2737 = vand.u32 %v1961, 4294901760
    %v2738 = vsub.f32 %v1961, %v2737
    %v2739 = vand.u32 %v2738, 4294901760
    %2740 = vmatpush2.msra.mxu0 %v2739
    %2741 = vmatprep.subr.mxu0 0.0
    %v2742 = vand.u32 %v1960, 4294901760
    %v2743 = vsub.f32 %v1960, %v2742
    %v2744 = vand.u32 %v2743, 4294901760
    %2745 = vmatpush2.msra.mxu0 %v2744
    %2746 = vmatprep.subr.mxu0 0.0
    %v2747 = vand.u32 %v1959, 4294901760
    %v2748 = vsub.f32 %v1959, %v2747
    %v2749 = vand.u32 %v2748, 4294901760
    %2750 = vmatpush2.msra.mxu0 %v2749
    %2751 = vmatprep.subr.mxu0 0.0
    %v2752 = vand.u32 %v1958, 4294901760
    %v2753 = vsub.f32 %v1958, %v2752
    %v2754 = vand.u32 %v2753, 4294901760
    %2755 = vmatpush2.msra.mxu0 %v2754
    %2756 = vmatprep.subr.mxu0 0.0
    %v2757 = vand.u32 %v1957, 4294901760
    %v2758 = vsub.f32 %v1957, %v2757
    %v2759 = vand.u32 %v2758, 4294901760
    %2760 = vmatpush2.msra.mxu0 %v2759
    %v2761 = vand.u32 %v2009, 4294901760
    %2762 = vmatprep.mubr.f32.mxu0 %v2761
    %v2763 = vand.u32 %v2008, 4294901760
    %2764 = vmatmul.mubr.f32.gmra.mxu0 %v2763
    %v2765 = vpop.f32.mrf.mxu0
    %v2766 = vadd.f32 %v2598, %v2765
    %v2767 = vpop.f32.mrf.mxu0
    %2768 = vdwg.mxu0
    %2769 = vmatprep.subr.mxu0 0.0
    %v2770 = vand.u32 %v1956, 4294901760
    %2771 = vmatpush1.msra.mxu0 %v2770
    %2772 = vmatprep.subr.mxu0 0.0
    %v2773 = vand.u32 %v1955, 4294901760
    %2774 = vmatpush1.msra.mxu0 %v2773
    %2775 = vmatprep.subr.mxu0 0.0
    %v2776 = vand.u32 %v1954, 4294901760
    %2777 = vmatpush1.msra.mxu0 %v2776
    %2778 = vmatprep.subr.mxu0 0.0
    %v2779 = vand.u32 %v1953, 4294901760
    %2780 = vmatpush1.msra.mxu0 %v2779
    %2781 = vmatprep.subr.mxu0 0.0
    %v2782 = vand.u32 %v1952, 4294901760
    %2783 = vmatpush1.msra.mxu0 %v2782
    %2784 = vmatprep.subr.mxu0 0.0
    %v2785 = vand.u32 %v1951, 4294901760
    %2786 = vmatpush1.msra.mxu0 %v2785
    %2787 = vmatprep.subr.mxu0 0.0
    %v2788 = vand.u32 %v1950, 4294901760
    %2789 = vmatpush1.msra.mxu0 %v2788
    %2790 = vmatprep.subr.mxu0 0.0
    %v2791 = vand.u32 %v1949, 4294901760
    %2792 = vmatpush1.msra.mxu0 %v2791
    %2793 = vmatprep.subr.mxu0 0.0
    %v2794 = vand.u32 %v1948, 4294901760
    %2795 = vmatpush1.msra.mxu0 %v2794
    %2796 = vmatprep.subr.mxu0 0.0
    %v2797 = vand.u32 %v1947, 4294901760
    %2798 = vmatpush1.msra.mxu0 %v2797
    %2799 = vmatprep.subr.mxu0 0.0
    %v2800 = vand.u32 %v1946, 4294901760
    %2801 = vmatpush1.msra.mxu0 %v2800
    %2802 = vmatprep.subr.mxu0 0.0
    %v2803 = vand.u32 %v1945, 4294901760
    %2804 = vmatpush1.msra.mxu0 %v2803
    %2805 = vmatprep.subr.mxu0 0.0
    %v2806 = vand.u32 %v1944, 4294901760
    %2807 = vmatpush1.msra.mxu0 %v2806
    %2808 = vmatprep.subr.mxu0 0.0
    %v2809 = vand.u32 %v1943, 4294901760
    %2810 = vmatpush1.msra.mxu0 %v2809
    %2811 = vmatprep.subr.mxu0 0.0
    %v2812 = vand.u32 %v1942, 4294901760
    %2813 = vmatpush1.msra.mxu0 %v2812
    %2814 = vmatprep.subr.mxu0 0.0
    %v2815 = vand.u32 %v1941, 4294901760
    %2816 = vmatpush1.msra.mxu0 %v2815
    %2817 = vmatprep.subr.mxu0 0.0
    %v2818 = vand.u32 %v1972, 4294901760
    %2819 = vmatpush2.msra.mxu0 %v2818
    %2820 = vmatprep.subr.mxu0 0.0
    %v2821 = vand.u32 %v1971, 4294901760
    %2822 = vmatpush2.msra.mxu0 %v2821
    %2823 = vmatprep.subr.mxu0 0.0
    %v2824 = vand.u32 %v1970, 4294901760
    %2825 = vmatpush2.msra.mxu0 %v2824
    %2826 = vmatprep.subr.mxu0 0.0
    %v2827 = vand.u32 %v1969, 4294901760
    %2828 = vmatpush2.msra.mxu0 %v2827
    %2829 = vmatprep.subr.mxu0 0.0
    %v2830 = vand.u32 %v1968, 4294901760
    %2831 = vmatpush2.msra.mxu0 %v2830
    %2832 = vmatprep.subr.mxu0 0.0
    %v2833 = vand.u32 %v1967, 4294901760
    %2834 = vmatpush2.msra.mxu0 %v2833
    %2835 = vmatprep.subr.mxu0 0.0
    %v2836 = vand.u32 %v1966, 4294901760
    %2837 = vmatpush2.msra.mxu0 %v2836
    %2838 = vmatprep.subr.mxu0 0.0
    %v2839 = vand.u32 %v1965, 4294901760
    %2840 = vmatpush2.msra.mxu0 %v2839
    %2841 = vmatprep.subr.mxu0 0.0
    %v2842 = vand.u32 %v1964, 4294901760
    %2843 = vmatpush2.msra.mxu0 %v2842
    %2844 = vmatprep.subr.mxu0 0.0
    %v2845 = vand.u32 %v1963, 4294901760
    %2846 = vmatpush2.msra.mxu0 %v2845
    %2847 = vmatprep.subr.mxu0 0.0
    %v2848 = vand.u32 %v1962, 4294901760
    %2849 = vmatpush2.msra.mxu0 %v2848
    %2850 = vmatprep.subr.mxu0 0.0
    %v2851 = vand.u32 %v1961, 4294901760
    %2852 = vmatpush2.msra.mxu0 %v2851
    %2853 = vmatprep.subr.mxu0 0.0
    %v2854 = vand.u32 %v1960, 4294901760
    %2855 = vmatpush2.msra.mxu0 %v2854
    %2856 = vmatprep.subr.mxu0 0.0
    %v2857 = vand.u32 %v1959, 4294901760
    %2858 = vmatpush2.msra.mxu0 %v2857
    %2859 = vmatprep.subr.mxu0 0.0
    %v2860 = vand.u32 %v1958, 4294901760
    %2861 = vmatpush2.msra.mxu0 %v2860
    %2862 = vmatprep.subr.mxu0 0.0
    %v2863 = vand.u32 %v1957, 4294901760
    %2864 = vmatpush2.msra.mxu0 %v2863
    %v2865 = vand.u32 %v2009, 4294901760
    %2866 = vmatprep.mubr.f32.mxu0 %v2865
    %v2867 = vand.u32 %v2008, 4294901760
    %2868 = vmatmul.mubr.f32.gmra.mxu0 %v2867
    %v2869 = vpop.f32.mrf.mxu0
    %v2870 = vadd.f32 %v2766, %v2869
    %v2871 = vpop.f32.mrf.mxu0
    %2872 = vdwg.mxu0
    %2873 = vmatprep.subr.mxu0 0.0
    %v2874 = vand.u32 %v1988, 4294901760
    %2875 = vmatpush1.msra.mxu0 %v2874
    %2876 = vmatprep.subr.mxu0 0.0
    %v2877 = vand.u32 %v1987, 4294901760
    %2878 = vmatpush1.msra.mxu0 %v2877
    %2879 = vmatprep.subr.mxu0 0.0
    %v2880 = vand.u32 %v1986, 4294901760
    %2881 = vmatpush1.msra.mxu0 %v2880
    %2882 = vmatprep.subr.mxu0 0.0
    %v2883 = vand.u32 %v1985, 4294901760
    %2884 = vmatpush1.msra.mxu0 %v2883
    %2885 = vmatprep.subr.mxu0 0.0
    %v2886 = vand.u32 %v1984, 4294901760
    %2887 = vmatpush1.msra.mxu0 %v2886
    %2888 = vmatprep.subr.mxu0 0.0
    %v2889 = vand.u32 %v1983, 4294901760
    %2890 = vmatpush1.msra.mxu0 %v2889
    %2891 = vmatprep.subr.mxu0 0.0
    %v2892 = vand.u32 %v1982, 4294901760
    %2893 = vmatpush1.msra.mxu0 %v2892
    %2894 = vmatprep.subr.mxu0 0.0
    %v2895 = vand.u32 %v1981, 4294901760
    %2896 = vmatpush1.msra.mxu0 %v2895
    %2897 = vmatprep.subr.mxu0 0.0
    %v2898 = vand.u32 %v1980, 4294901760
    %2899 = vmatpush1.msra.mxu0 %v2898
    %2900 = vmatprep.subr.mxu0 0.0
    %v2901 = vand.u32 %v1979, 4294901760
    %2902 = vmatpush1.msra.mxu0 %v2901
    %2903 = vmatprep.subr.mxu0 0.0
    %v2904 = vand.u32 %v1978, 4294901760
    %2905 = vmatpush1.msra.mxu0 %v2904
    %2906 = vmatprep.subr.mxu0 0.0
    %v2907 = vand.u32 %v1977, 4294901760
    %2908 = vmatpush1.msra.mxu0 %v2907
    %2909 = vmatprep.subr.mxu0 0.0
    %v2910 = vand.u32 %v1976, 4294901760
    %2911 = vmatpush1.msra.mxu0 %v2910
    %2912 = vmatprep.subr.mxu0 0.0
    %v2913 = vand.u32 %v1975, 4294901760
    %2914 = vmatpush1.msra.mxu0 %v2913
    %2915 = vmatprep.subr.mxu0 0.0
    %v2916 = vand.u32 %v1974, 4294901760
    %2917 = vmatpush1.msra.mxu0 %v2916
    %2918 = vmatprep.subr.mxu0 0.0
    %v2919 = vand.u32 %v1973, 4294901760
    %2920 = vmatpush1.msra.mxu0 %v2919
    %2921 = vmatprep.subr.mxu0 0.0
    %2922 = vmatpush2.msra.mxu0 0.0
    %2923 = vmatprep.subr.mxu0 0.0
    %2924 = vmatpush2.msra.mxu0 0.0
    %2925 = vmatprep.subr.mxu0 0.0
    %2926 = vmatpush2.msra.mxu0 0.0
    %2927 = vmatprep.subr.mxu0 0.0
    %2928 = vmatpush2.msra.mxu0 0.0
    %2929 = vmatprep.subr.mxu0 0.0
    %2930 = vmatpush2.msra.mxu0 0.0
    %2931 = vmatprep.subr.mxu0 0.0
    %2932 = vmatpush2.msra.mxu0 0.0
    %2933 = vmatprep.subr.mxu0 0.0
    %2934 = vmatpush2.msra.mxu0 0.0
    %2935 = vmatprep.subr.mxu0 0.0
    %2936 = vmatpush2.msra.mxu0 0.0
    %2937 = vmatprep.subr.mxu0 0.0
    %2938 = vmatpush2.msra.mxu0 0.0
    %2939 = vmatprep.subr.mxu0 0.0
    %2940 = vmatpush2.msra.mxu0 0.0
    %2941 = vmatprep.subr.mxu0 0.0
    %2942 = vmatpush2.msra.mxu0 0.0
    %2943 = vmatprep.subr.mxu0 0.0
    %2944 = vmatpush2.msra.mxu0 0.0
    %2945 = vmatprep.subr.mxu0 0.0
    %2946 = vmatpush2.msra.mxu0 0.0
    %2947 = vmatprep.subr.mxu0 0.0
    %2948 = vmatpush2.msra.mxu0 0.0
    %2949 = vmatprep.subr.mxu0 0.0
    %2950 = vmatpush2.msra.mxu0 0.0
    %2951 = vmatprep.subr.mxu0 0.0
    %2952 = vmatpush2.msra.mxu0 0.0
    %2953 = vmatprep.mubr.f32.mxu0 0.0
    %v2954 = vand.u32 %v2010, 4294901760
    %v2955 = vsub.f32 %v2010, %v2954
    %v2956 = vand.u32 %v2955, 4294901760
    %v2957 = vsub.f32 %v2955, %v2956
    %v2958 = vand.u32 %v2957, 4294901760
    %2959 = vmatmul.mubr.f32.gmra.mxu0 %v2958
    %v2960 = vpop.f32.mrf.mxu0
    %v2961 = vadd.f32 %v2870, %v2960
    %v2962 = vpop.f32.mrf.mxu0
    %2963 = vdwg.mxu0
    %2964 = vmatprep.subr.mxu0 0.0
    %v2965 = vand.u32 %v1988, 4294901760
    %v2966 = vsub.f32 %v1988, %v2965
    %v2967 = vand.u32 %v2966, 4294901760
    %v2968 = vsub.f32 %v2966, %v2967
    %v2969 = vand.u32 %v2968, 4294901760
    %2970 = vmatpush1.msra.mxu0 %v2969
    %2971 = vmatprep.subr.mxu0 0.0
    %v2972 = vand.u32 %v1987, 4294901760
    %v2973 = vsub.f32 %v1987, %v2972
    %v2974 = vand.u32 %v2973, 4294901760
    %v2975 = vsub.f32 %v2973, %v2974
    %v2976 = vand.u32 %v2975, 4294901760
    %2977 = vmatpush1.msra.mxu0 %v2976
    %2978 = vmatprep.subr.mxu0 0.0
    %v2979 = vand.u32 %v1986, 4294901760
    %v2980 = vsub.f32 %v1986, %v2979
    %v2981 = vand.u32 %v2980, 4294901760
    %v2982 = vsub.f32 %v2980, %v2981
    %v2983 = vand.u32 %v2982, 4294901760
    %2984 = vmatpush1.msra.mxu0 %v2983
    %2985 = vmatprep.subr.mxu0 0.0
    %v2986 = vand.u32 %v1985, 4294901760
    %v2987 = vsub.f32 %v1985, %v2986
    %v2988 = vand.u32 %v2987, 4294901760
    %v2989 = vsub.f32 %v2987, %v2988
    %v2990 = vand.u32 %v2989, 4294901760
    %2991 = vmatpush1.msra.mxu0 %v2990
    %2992 = vmatprep.subr.mxu0 0.0
    %v2993 = vand.u32 %v1984, 4294901760
    %v2994 = vsub.f32 %v1984, %v2993
    %v2995 = vand.u32 %v2994, 4294901760
    %v2996 = vsub.f32 %v2994, %v2995
    %v2997 = vand.u32 %v2996, 4294901760
    %2998 = vmatpush1.msra.mxu0 %v2997
    %2999 = vmatprep.subr.mxu0 0.0
    %v3000 = vand.u32 %v1983, 4294901760
    %v3001 = vsub.f32 %v1983, %v3000
    %v3002 = vand.u32 %v3001, 4294901760
    %v3003 = vsub.f32 %v3001, %v3002
    %v3004 = vand.u32 %v3003, 4294901760
    %3005 = vmatpush1.msra.mxu0 %v3004
    %3006 = vmatprep.subr.mxu0 0.0
    %v3007 = vand.u32 %v1982, 4294901760
    %v3008 = vsub.f32 %v1982, %v3007
    %v3009 = vand.u32 %v3008, 4294901760
    %v3010 = vsub.f32 %v3008, %v3009
    %v3011 = vand.u32 %v3010, 4294901760
    %3012 = vmatpush1.msra.mxu0 %v3011
    %3013 = vmatprep.subr.mxu0 0.0
    %v3014 = vand.u32 %v1981, 4294901760
    %v3015 = vsub.f32 %v1981, %v3014
    %v3016 = vand.u32 %v3015, 4294901760
    %v3017 = vsub.f32 %v3015, %v3016
    %v3018 = vand.u32 %v3017, 4294901760
    %3019 = vmatpush1.msra.mxu0 %v3018
    %3020 = vmatprep.subr.mxu0 0.0
    %v3021 = vand.u32 %v1980, 4294901760
    %v3022 = vsub.f32 %v1980, %v3021
    %v3023 = vand.u32 %v3022, 4294901760
    %v3024 = vsub.f32 %v3022, %v3023
    %v3025 = vand.u32 %v3024, 4294901760
    %3026 = vmatpush1.msra.mxu0 %v3025
    %3027 = vmatprep.subr.mxu0 0.0
    %v3028 = vand.u32 %v1979, 4294901760
    %v3029 = vsub.f32 %v1979, %v3028
    %v3030 = vand.u32 %v3029, 4294901760
    %v3031 = vsub.f32 %v3029, %v3030
    %v3032 = vand.u32 %v3031, 4294901760
    %3033 = vmatpush1.msra.mxu0 %v3032
    %3034 = vmatprep.subr.mxu0 0.0
    %v3035 = vand.u32 %v1978, 4294901760
    %v3036 = vsub.f32 %v1978, %v3035
    %v3037 = vand.u32 %v3036, 4294901760
    %v3038 = vsub.f32 %v3036, %v3037
    %v3039 = vand.u32 %v3038, 4294901760
    %3040 = vmatpush1.msra.mxu0 %v3039
    %3041 = vmatprep.subr.mxu0 0.0
    %v3042 = vand.u32 %v1977, 4294901760
    %v3043 = vsub.f32 %v1977, %v3042
    %v3044 = vand.u32 %v3043, 4294901760
    %v3045 = vsub.f32 %v3043, %v3044
    %v3046 = vand.u32 %v3045, 4294901760
    %3047 = vmatpush1.msra.mxu0 %v3046
    %3048 = vmatprep.subr.mxu0 0.0
    %v3049 = vand.u32 %v1976, 4294901760
    %v3050 = vsub.f32 %v1976, %v3049
    %v3051 = vand.u32 %v3050, 4294901760
    %v3052 = vsub.f32 %v3050, %v3051
    %v3053 = vand.u32 %v3052, 4294901760
    %3054 = vmatpush1.msra.mxu0 %v3053
    %3055 = vmatprep.subr.mxu0 0.0
    %v3056 = vand.u32 %v1975, 4294901760
    %v3057 = vsub.f32 %v1975, %v3056
    %v3058 = vand.u32 %v3057, 4294901760
    %v3059 = vsub.f32 %v3057, %v3058
    %v3060 = vand.u32 %v3059, 4294901760
    %3061 = vmatpush1.msra.mxu0 %v3060
    %3062 = vmatprep.subr.mxu0 0.0
    %v3063 = vand.u32 %v1974, 4294901760
    %v3064 = vsub.f32 %v1974, %v3063
    %v3065 = vand.u32 %v3064, 4294901760
    %v3066 = vsub.f32 %v3064, %v3065
    %v3067 = vand.u32 %v3066, 4294901760
    %3068 = vmatpush1.msra.mxu0 %v3067
    %3069 = vmatprep.subr.mxu0 0.0
    %v3070 = vand.u32 %v1973, 4294901760
    %v3071 = vsub.f32 %v1973, %v3070
    %v3072 = vand.u32 %v3071, 4294901760
    %v3073 = vsub.f32 %v3071, %v3072
    %v3074 = vand.u32 %v3073, 4294901760
    %3075 = vmatpush1.msra.mxu0 %v3074
    %3076 = vmatprep.subr.mxu0 0.0
    %3077 = vmatpush2.msra.mxu0 0.0
    %3078 = vmatprep.subr.mxu0 0.0
    %3079 = vmatpush2.msra.mxu0 0.0
    %3080 = vmatprep.subr.mxu0 0.0
    %3081 = vmatpush2.msra.mxu0 0.0
    %3082 = vmatprep.subr.mxu0 0.0
    %3083 = vmatpush2.msra.mxu0 0.0
    %3084 = vmatprep.subr.mxu0 0.0
    %3085 = vmatpush2.msra.mxu0 0.0
    %3086 = vmatprep.subr.mxu0 0.0
    %3087 = vmatpush2.msra.mxu0 0.0
    %3088 = vmatprep.subr.mxu0 0.0
    %3089 = vmatpush2.msra.mxu0 0.0
    %3090 = vmatprep.subr.mxu0 0.0
    %3091 = vmatpush2.msra.mxu0 0.0
    %3092 = vmatprep.subr.mxu0 0.0
    %3093 = vmatpush2.msra.mxu0 0.0
    %3094 = vmatprep.subr.mxu0 0.0
    %3095 = vmatpush2.msra.mxu0 0.0
    %3096 = vmatprep.subr.mxu0 0.0
    %3097 = vmatpush2.msra.mxu0 0.0
    %3098 = vmatprep.subr.mxu0 0.0
    %3099 = vmatpush2.msra.mxu0 0.0
    %3100 = vmatprep.subr.mxu0 0.0
    %3101 = vmatpush2.msra.mxu0 0.0
    %3102 = vmatprep.subr.mxu0 0.0
    %3103 = vmatpush2.msra.mxu0 0.0
    %3104 = vmatprep.subr.mxu0 0.0
    %3105 = vmatpush2.msra.mxu0 0.0
    %3106 = vmatprep.subr.mxu0 0.0
    %3107 = vmatpush2.msra.mxu0 0.0
    %3108 = vmatprep.mubr.f32.mxu0 0.0
    %v3109 = vand.u32 %v2010, 4294901760
    %3110 = vmatmul.mubr.f32.gmra.mxu0 %v3109
    %v3111 = vpop.f32.mrf.mxu0
    %v3112 = vadd.f32 %v2961, %v3111
    %v3113 = vpop.f32.mrf.mxu0
    %3114 = vdwg.mxu0
    %3115 = vmatprep.subr.mxu0 0.0
    %v3116 = vand.u32 %v1988, 4294901760
    %v3117 = vsub.f32 %v1988, %v3116
    %3118 = vmatpush1.msra.mxu0 %v3117
    %3119 = vmatprep.subr.mxu0 0.0
    %v3120 = vand.u32 %v1987, 4294901760
    %v3121 = vsub.f32 %v1987, %v3120
    %3122 = vmatpush1.msra.mxu0 %v3121
    %3123 = vmatprep.subr.mxu0 0.0
    %v3124 = vand.u32 %v1986, 4294901760
    %v3125 = vsub.f32 %v1986, %v3124
    %3126 = vmatpush1.msra.mxu0 %v3125
    %3127 = vmatprep.subr.mxu0 0.0
    %v3128 = vand.u32 %v1985, 4294901760
    %v3129 = vsub.f32 %v1985, %v3128
    %3130 = vmatpush1.msra.mxu0 %v3129
    %3131 = vmatprep.subr.mxu0 0.0
    %v3132 = vand.u32 %v1984, 4294901760
    %v3133 = vsub.f32 %v1984, %v3132
    %3134 = vmatpush1.msra.mxu0 %v3133
    %3135 = vmatprep.subr.mxu0 0.0
    %v3136 = vand.u32 %v1983, 4294901760
    %v3137 = vsub.f32 %v1983, %v3136
    %3138 = vmatpush1.msra.mxu0 %v3137
    %3139 = vmatprep.subr.mxu0 0.0
    %v3140 = vand.u32 %v1982, 4294901760
    %v3141 = vsub.f32 %v1982, %v3140
    %3142 = vmatpush1.msra.mxu0 %v3141
    %3143 = vmatprep.subr.mxu0 0.0
    %v3144 = vand.u32 %v1981, 4294901760
    %v3145 = vsub.f32 %v1981, %v3144
    %3146 = vmatpush1.msra.mxu0 %v3145
    %3147 = vmatprep.subr.mxu0 0.0
    %v3148 = vand.u32 %v1980, 4294901760
    %v3149 = vsub.f32 %v1980, %v3148
    %3150 = vmatpush1.msra.mxu0 %v3149
    %3151 = vmatprep.subr.mxu0 0.0
    %v3152 = vand.u32 %v1979, 4294901760
    %v3153 = vsub.f32 %v1979, %v3152
    %3154 = vmatpush1.msra.mxu0 %v3153
    %3155 = vmatprep.subr.mxu0 0.0
    %v3156 = vand.u32 %v1978, 4294901760
    %v3157 = vsub.f32 %v1978, %v3156
    %3158 = vmatpush1.msra.mxu0 %v3157
    %3159 = vmatprep.subr.mxu0 0.0
    %v3160 = vand.u32 %v1977, 4294901760
    %v3161 = vsub.f32 %v1977, %v3160
    %3162 = vmatpush1.msra.mxu0 %v3161
    %3163 = vmatprep.subr.mxu0 0.0
    %v3164 = vand.u32 %v1976, 4294901760
    %v3165 = vsub.f32 %v1976, %v3164
    %3166 = vmatpush1.msra.mxu0 %v3165
    %3167 = vmatprep.subr.mxu0 0.0
    %v3168 = vand.u32 %v1975, 4294901760
    %v3169 = vsub.f32 %v1975, %v3168
    %3170 = vmatpush1.msra.mxu0 %v3169
    %3171 = vmatprep.subr.mxu0 0.0
    %v3172 = vand.u32 %v1974, 4294901760
    %v3173 = vsub.f32 %v1974, %v3172
    %3174 = vmatpush1.msra.mxu0 %v3173
    %3175 = vmatprep.subr.mxu0 0.0
    %v3176 = vand.u32 %v1973, 4294901760
    %v3177 = vsub.f32 %v1973, %v3176
    %3178 = vmatpush1.msra.mxu0 %v3177
    %3179 = vmatprep.subr.mxu0 0.0
    %3180 = vmatpush2.msra.mxu0 0.0
    %3181 = vmatprep.subr.mxu0 0.0
    %3182 = vmatpush2.msra.mxu0 0.0
    %3183 = vmatprep.subr.mxu0 0.0
    %3184 = vmatpush2.msra.mxu0 0.0
    %3185 = vmatprep.subr.mxu0 0.0
    %3186 = vmatpush2.msra.mxu0 0.0
    %3187 = vmatprep.subr.mxu0 0.0
    %3188 = vmatpush2.msra.mxu0 0.0
    %3189 = vmatprep.subr.mxu0 0.0
    %3190 = vmatpush2.msra.mxu0 0.0
    %3191 = vmatprep.subr.mxu0 0.0
    %3192 = vmatpush2.msra.mxu0 0.0
    %3193 = vmatprep.subr.mxu0 0.0
    %3194 = vmatpush2.msra.mxu0 0.0
    %3195 = vmatprep.subr.mxu0 0.0
    %3196 = vmatpush2.msra.mxu0 0.0
    %3197 = vmatprep.subr.mxu0 0.0
    %3198 = vmatpush2.msra.mxu0 0.0
    %3199 = vmatprep.subr.mxu0 0.0
    %3200 = vmatpush2.msra.mxu0 0.0
    %3201 = vmatprep.subr.mxu0 0.0
    %3202 = vmatpush2.msra.mxu0 0.0
    %3203 = vmatprep.subr.mxu0 0.0
    %3204 = vmatpush2.msra.mxu0 0.0
    %3205 = vmatprep.subr.mxu0 0.0
    %3206 = vmatpush2.msra.mxu0 0.0
    %3207 = vmatprep.subr.mxu0 0.0
    %3208 = vmatpush2.msra.mxu0 0.0
    %3209 = vmatprep.subr.mxu0 0.0
    %3210 = vmatpush2.msra.mxu0 0.0
    %3211 = vmatprep.mubr.f32.mxu0 0.0
    %v3212 = vand.u32 %v2010, 4294901760
    %v3213 = vsub.f32 %v2010, %v3212
    %3214 = vmatmul.mubr.f32.gmra.mxu0 %v3213
    %v3215 = vpop.f32.mrf.mxu0
    %v3216 = vadd.f32 %v3112, %v3215
    %v3217 = vpop.f32.mrf.mxu0
    %3218 = vdwg.mxu0
    %3219 = vmatprep.subr.mxu0 0.0
    %v3220 = vand.u32 %v1988, 4294901760
    %3221 = vmatpush1.msra.mxu0 %v3220
    %3222 = vmatprep.subr.mxu0 0.0
    %v3223 = vand.u32 %v1987, 4294901760
    %3224 = vmatpush1.msra.mxu0 %v3223
    %3225 = vmatprep.subr.mxu0 0.0
    %v3226 = vand.u32 %v1986, 4294901760
    %3227 = vmatpush1.msra.mxu0 %v3226
    %3228 = vmatprep.subr.mxu0 0.0
    %v3229 = vand.u32 %v1985, 4294901760
    %3230 = vmatpush1.msra.mxu0 %v3229
    %3231 = vmatprep.subr.mxu0 0.0
    %v3232 = vand.u32 %v1984, 4294901760
    %3233 = vmatpush1.msra.mxu0 %v3232
    %3234 = vmatprep.subr.mxu0 0.0
    %v3235 = vand.u32 %v1983, 4294901760
    %3236 = vmatpush1.msra.mxu0 %v3235
    %3237 = vmatprep.subr.mxu0 0.0
    %v3238 = vand.u32 %v1982, 4294901760
    %3239 = vmatpush1.msra.mxu0 %v3238
    %3240 = vmatprep.subr.mxu0 0.0
    %v3241 = vand.u32 %v1981, 4294901760
    %3242 = vmatpush1.msra.mxu0 %v3241
    %3243 = vmatprep.subr.mxu0 0.0
    %v3244 = vand.u32 %v1980, 4294901760
    %3245 = vmatpush1.msra.mxu0 %v3244
    %3246 = vmatprep.subr.mxu0 0.0
    %v3247 = vand.u32 %v1979, 4294901760
    %3248 = vmatpush1.msra.mxu0 %v3247
    %3249 = vmatprep.subr.mxu0 0.0
    %v3250 = vand.u32 %v1978, 4294901760
    %3251 = vmatpush1.msra.mxu0 %v3250
    %3252 = vmatprep.subr.mxu0 0.0
    %v3253 = vand.u32 %v1977, 4294901760
    %3254 = vmatpush1.msra.mxu0 %v3253
    %3255 = vmatprep.subr.mxu0 0.0
    %v3256 = vand.u32 %v1976, 4294901760
    %3257 = vmatpush1.msra.mxu0 %v3256
    %3258 = vmatprep.subr.mxu0 0.0
    %v3259 = vand.u32 %v1975, 4294901760
    %3260 = vmatpush1.msra.mxu0 %v3259
    %3261 = vmatprep.subr.mxu0 0.0
    %v3262 = vand.u32 %v1974, 4294901760
    %3263 = vmatpush1.msra.mxu0 %v3262
    %3264 = vmatprep.subr.mxu0 0.0
    %v3265 = vand.u32 %v1973, 4294901760
    %3266 = vmatpush1.msra.mxu0 %v3265
    %3267 = vmatprep.subr.mxu0 0.0
    %3268 = vmatpush2.msra.mxu0 0.0
    %3269 = vmatprep.subr.mxu0 0.0
    %3270 = vmatpush2.msra.mxu0 0.0
    %3271 = vmatprep.subr.mxu0 0.0
    %3272 = vmatpush2.msra.mxu0 0.0
    %3273 = vmatprep.subr.mxu0 0.0
    %3274 = vmatpush2.msra.mxu0 0.0
    %3275 = vmatprep.subr.mxu0 0.0
    %3276 = vmatpush2.msra.mxu0 0.0
    %3277 = vmatprep.subr.mxu0 0.0
    %3278 = vmatpush2.msra.mxu0 0.0
    %3279 = vmatprep.subr.mxu0 0.0
    %3280 = vmatpush2.msra.mxu0 0.0
    %3281 = vmatprep.subr.mxu0 0.0
    %3282 = vmatpush2.msra.mxu0 0.0
    %3283 = vmatprep.subr.mxu0 0.0
    %3284 = vmatpush2.msra.mxu0 0.0
    %3285 = vmatprep.subr.mxu0 0.0
    %3286 = vmatpush2.msra.mxu0 0.0
    %3287 = vmatprep.subr.mxu0 0.0
    %3288 = vmatpush2.msra.mxu0 0.0
    %3289 = vmatprep.subr.mxu0 0.0
    %3290 = vmatpush2.msra.mxu0 0.0
    %3291 = vmatprep.subr.mxu0 0.0
    %3292 = vmatpush2.msra.mxu0 0.0
    %3293 = vmatprep.subr.mxu0 0.0
    %3294 = vmatpush2.msra.mxu0 0.0
    %3295 = vmatprep.subr.mxu0 0.0
    %3296 = vmatpush2.msra.mxu0 0.0
    %3297 = vmatprep.subr.mxu0 0.0
    %3298 = vmatpush2.msra.mxu0 0.0
    %3299 = vmatprep.mubr.f32.mxu0 0.0
    %v3300 = vand.u32 %v2010, 4294901760
    %v3301 = vsub.f32 %v2010, %v3300
    %v3302 = vand.u32 %v3301, 4294901760
    %3303 = vmatmul.mubr.f32.gmra.mxu0 %v3302
    %v3304 = vpop.f32.mrf.mxu0
    %v3305 = vadd.f32 %v3216, %v3304
    %v3306 = vpop.f32.mrf.mxu0
    %3307 = vdwg.mxu0
    %3308 = vmatprep.subr.mxu0 0.0
    %v3309 = vand.u32 %v1988, 4294901760
    %v3310 = vsub.f32 %v1988, %v3309
    %v3311 = vand.u32 %v3310, 4294901760
    %3312 = vmatpush1.msra.mxu0 %v3311
    %3313 = vmatprep.subr.mxu0 0.0
    %v3314 = vand.u32 %v1987, 4294901760
    %v3315 = vsub.f32 %v1987, %v3314
    %v3316 = vand.u32 %v3315, 4294901760
    %3317 = vmatpush1.msra.mxu0 %v3316
    %3318 = vmatprep.subr.mxu0 0.0
    %v3319 = vand.u32 %v1986, 4294901760
    %v3320 = vsub.f32 %v1986, %v3319
    %v3321 = vand.u32 %v3320, 4294901760
    %3322 = vmatpush1.msra.mxu0 %v3321
    %3323 = vmatprep.subr.mxu0 0.0
    %v3324 = vand.u32 %v1985, 4294901760
    %v3325 = vsub.f32 %v1985, %v3324
    %v3326 = vand.u32 %v3325, 4294901760
    %3327 = vmatpush1.msra.mxu0 %v3326
    %3328 = vmatprep.subr.mxu0 0.0
    %v3329 = vand.u32 %v1984, 4294901760
    %v3330 = vsub.f32 %v1984, %v3329
    %v3331 = vand.u32 %v3330, 4294901760
    %3332 = vmatpush1.msra.mxu0 %v3331
    %3333 = vmatprep.subr.mxu0 0.0
    %v3334 = vand.u32 %v1983, 4294901760
    %v3335 = vsub.f32 %v1983, %v3334
    %v3336 = vand.u32 %v3335, 4294901760
    %3337 = vmatpush1.msra.mxu0 %v3336
    %3338 = vmatprep.subr.mxu0 0.0
    %v3339 = vand.u32 %v1982, 4294901760
    %v3340 = vsub.f32 %v1982, %v3339
    %v3341 = vand.u32 %v3340, 4294901760
    %3342 = vmatpush1.msra.mxu0 %v3341
    %3343 = vmatprep.subr.mxu0 0.0
    %v3344 = vand.u32 %v1981, 4294901760
    %v3345 = vsub.f32 %v1981, %v3344
    %v3346 = vand.u32 %v3345, 4294901760
    %3347 = vmatpush1.msra.mxu0 %v3346
    %3348 = vmatprep.subr.mxu0 0.0
    %v3349 = vand.u32 %v1980, 4294901760
    %v3350 = vsub.f32 %v1980, %v3349
    %v3351 = vand.u32 %v3350, 4294901760
    %3352 = vmatpush1.msra.mxu0 %v3351
    %3353 = vmatprep.subr.mxu0 0.0
    %v3354 = vand.u32 %v1979, 4294901760
    %v3355 = vsub.f32 %v1979, %v3354
    %v3356 = vand.u32 %v3355, 4294901760
    %3357 = vmatpush1.msra.mxu0 %v3356
    %3358 = vmatprep.subr.mxu0 0.0
    %v3359 = vand.u32 %v1978, 4294901760
    %v3360 = vsub.f32 %v1978, %v3359
    %v3361 = vand.u32 %v3360, 4294901760
    %3362 = vmatpush1.msra.mxu0 %v3361
    %3363 = vmatprep.subr.mxu0 0.0
    %v3364 = vand.u32 %v1977, 4294901760
    %v3365 = vsub.f32 %v1977, %v3364
    %v3366 = vand.u32 %v3365, 4294901760
    %3367 = vmatpush1.msra.mxu0 %v3366
    %3368 = vmatprep.subr.mxu0 0.0
    %v3369 = vand.u32 %v1976, 4294901760
    %v3370 = vsub.f32 %v1976, %v3369
    %v3371 = vand.u32 %v3370, 4294901760
    %3372 = vmatpush1.msra.mxu0 %v3371
    %3373 = vmatprep.subr.mxu0 0.0
    %v3374 = vand.u32 %v1975, 4294901760
    %v3375 = vsub.f32 %v1975, %v3374
    %v3376 = vand.u32 %v3375, 4294901760
    %3377 = vmatpush1.msra.mxu0 %v3376
    %3378 = vmatprep.subr.mxu0 0.0
    %v3379 = vand.u32 %v1974, 4294901760
    %v3380 = vsub.f32 %v1974, %v3379
    %v3381 = vand.u32 %v3380, 4294901760
    %3382 = vmatpush1.msra.mxu0 %v3381
    %3383 = vmatprep.subr.mxu0 0.0
    %v3384 = vand.u32 %v1973, 4294901760
    %v3385 = vsub.f32 %v1973, %v3384
    %v3386 = vand.u32 %v3385, 4294901760
    %3387 = vmatpush1.msra.mxu0 %v3386
    %3388 = vmatprep.subr.mxu0 0.0
    %3389 = vmatpush2.msra.mxu0 0.0
    %3390 = vmatprep.subr.mxu0 0.0
    %3391 = vmatpush2.msra.mxu0 0.0
    %3392 = vmatprep.subr.mxu0 0.0
    %3393 = vmatpush2.msra.mxu0 0.0
    %3394 = vmatprep.subr.mxu0 0.0
    %3395 = vmatpush2.msra.mxu0 0.0
    %3396 = vmatprep.subr.mxu0 0.0
    %3397 = vmatpush2.msra.mxu0 0.0
    %3398 = vmatprep.subr.mxu0 0.0
    %3399 = vmatpush2.msra.mxu0 0.0
    %3400 = vmatprep.subr.mxu0 0.0
    %3401 = vmatpush2.msra.mxu0 0.0
    %3402 = vmatprep.subr.mxu0 0.0
    %3403 = vmatpush2.msra.mxu0 0.0
    %3404 = vmatprep.subr.mxu0 0.0
    %3405 = vmatpush2.msra.mxu0 0.0
    %3406 = vmatprep.subr.mxu0 0.0
    %3407 = vmatpush2.msra.mxu0 0.0
    %3408 = vmatprep.subr.mxu0 0.0
    %3409 = vmatpush2.msra.mxu0 0.0
    %3410 = vmatprep.subr.mxu0 0.0
    %3411 = vmatpush2.msra.mxu0 0.0
    %3412 = vmatprep.subr.mxu0 0.0
    %3413 = vmatpush2.msra.mxu0 0.0
    %3414 = vmatprep.subr.mxu0 0.0
    %3415 = vmatpush2.msra.mxu0 0.0
    %3416 = vmatprep.subr.mxu0 0.0
    %3417 = vmatpush2.msra.mxu0 0.0
    %3418 = vmatprep.subr.mxu0 0.0
    %3419 = vmatpush2.msra.mxu0 0.0
    %3420 = vmatprep.mubr.f32.mxu0 0.0
    %v3421 = vand.u32 %v2010, 4294901760
    %3422 = vmatmul.mubr.f32.gmra.mxu0 %v3421
    %v3423 = vpop.f32.mrf.mxu0
    %v3424 = vadd.f32 %v3305, %v3423
    %v3425 = vpop.f32.mrf.mxu0
    %3426 = vdwg.mxu0
    %3427 = vmatprep.subr.mxu0 0.0
    %v3428 = vand.u32 %v1988, 4294901760
    %3429 = vmatpush1.msra.mxu0 %v3428
    %3430 = vmatprep.subr.mxu0 0.0
    %v3431 = vand.u32 %v1987, 4294901760
    %3432 = vmatpush1.msra.mxu0 %v3431
    %3433 = vmatprep.subr.mxu0 0.0
    %v3434 = vand.u32 %v1986, 4294901760
    %3435 = vmatpush1.msra.mxu0 %v3434
    %3436 = vmatprep.subr.mxu0 0.0
    %v3437 = vand.u32 %v1985, 4294901760
    %3438 = vmatpush1.msra.mxu0 %v3437
    %3439 = vmatprep.subr.mxu0 0.0
    %v3440 = vand.u32 %v1984, 4294901760
    %3441 = vmatpush1.msra.mxu0 %v3440
    %3442 = vmatprep.subr.mxu0 0.0
    %v3443 = vand.u32 %v1983, 4294901760
    %3444 = vmatpush1.msra.mxu0 %v3443
    %3445 = vmatprep.subr.mxu0 0.0
    %v3446 = vand.u32 %v1982, 4294901760
    %3447 = vmatpush1.msra.mxu0 %v3446
    %3448 = vmatprep.subr.mxu0 0.0
    %v3449 = vand.u32 %v1981, 4294901760
    %3450 = vmatpush1.msra.mxu0 %v3449
    %3451 = vmatprep.subr.mxu0 0.0
    %v3452 = vand.u32 %v1980, 4294901760
    %3453 = vmatpush1.msra.mxu0 %v3452
    %3454 = vmatprep.subr.mxu0 0.0
    %v3455 = vand.u32 %v1979, 4294901760
    %3456 = vmatpush1.msra.mxu0 %v3455
    %3457 = vmatprep.subr.mxu0 0.0
    %v3458 = vand.u32 %v1978, 4294901760
    %3459 = vmatpush1.msra.mxu0 %v3458
    %3460 = vmatprep.subr.mxu0 0.0
    %v3461 = vand.u32 %v1977, 4294901760
    %3462 = vmatpush1.msra.mxu0 %v3461
    %3463 = vmatprep.subr.mxu0 0.0
    %v3464 = vand.u32 %v1976, 4294901760
    %3465 = vmatpush1.msra.mxu0 %v3464
    %3466 = vmatprep.subr.mxu0 0.0
    %v3467 = vand.u32 %v1975, 4294901760
    %3468 = vmatpush1.msra.mxu0 %v3467
    %3469 = vmatprep.subr.mxu0 0.0
    %v3470 = vand.u32 %v1974, 4294901760
    %3471 = vmatpush1.msra.mxu0 %v3470
    %3472 = vmatprep.subr.mxu0 0.0
    %v3473 = vand.u32 %v1973, 4294901760
    %3474 = vmatpush1.msra.mxu0 %v3473
    %3475 = vmatprep.subr.mxu0 0.0
    %3476 = vmatpush2.msra.mxu0 0.0
    %3477 = vmatprep.subr.mxu0 0.0
    %3478 = vmatpush2.msra.mxu0 0.0
    %3479 = vmatprep.subr.mxu0 0.0
    %3480 = vmatpush2.msra.mxu0 0.0
    %3481 = vmatprep.subr.mxu0 0.0
    %3482 = vmatpush2.msra.mxu0 0.0
    %3483 = vmatprep.subr.mxu0 0.0
    %3484 = vmatpush2.msra.mxu0 0.0
    %3485 = vmatprep.subr.mxu0 0.0
    %3486 = vmatpush2.msra.mxu0 0.0
    %3487 = vmatprep.subr.mxu0 0.0
    %3488 = vmatpush2.msra.mxu0 0.0
    %3489 = vmatprep.subr.mxu0 0.0
    %3490 = vmatpush2.msra.mxu0 0.0
    %3491 = vmatprep.subr.mxu0 0.0
    %3492 = vmatpush2.msra.mxu0 0.0
    %3493 = vmatprep.subr.mxu0 0.0
    %3494 = vmatpush2.msra.mxu0 0.0
    %3495 = vmatprep.subr.mxu0 0.0
    %3496 = vmatpush2.msra.mxu0 0.0
    %3497 = vmatprep.subr.mxu0 0.0
    %3498 = vmatpush2.msra.mxu0 0.0
    %3499 = vmatprep.subr.mxu0 0.0
    %3500 = vmatpush2.msra.mxu0 0.0
    %3501 = vmatprep.subr.mxu0 0.0
    %3502 = vmatpush2.msra.mxu0 0.0
    %3503 = vmatprep.subr.mxu0 0.0
    %3504 = vmatpush2.msra.mxu0 0.0
    %3505 = vmatprep.subr.mxu0 0.0
    %3506 = vmatpush2.msra.mxu0 0.0
    %3507 = vmatprep.mubr.f32.mxu0 0.0
    %v3508 = vand.u32 %v2010, 4294901760
    %3509 = vmatmul.mubr.f32.gmra.mxu0 %v3508
    %v3510 = vpop.f32.mrf.mxu0
    %v3511 = vadd.f32 %v3424, %v3510
    %v3512 = vpop.f32.mrf.mxu0
    %3513 = vdwg.mxu0
    %3514 = vst [vmem:[#allocation8] sm:$0xff] %v3511
    // Predicated region
    $region18: #{tpu_custom_call.1} parent=1 // pred_check
      _
    $region19: #{tpu_custom_call.1} parent=1 // pred_check_branch
      %3516 = sbr.rel (0) target = $region21
    $region20: #{tpu_custom_call.1} parent=1 // pred_region
      %s3518 = ssub.s32 48, 48
      %3519 = vsyncadd [#allocation4], %s3518
      %s3521 = sshll.u32 [#allocation7], 4
      %s3522 = int_to_ptr.vmem [resolvable:$true] %s3521
      %3524 = dma.vmem_to_hbm [thread:$0]  %s3522, 48, %s2, [#allocation4]
    $region21: #{tpu_custom_call.1} parent=1 // pred_fallthru
      _
    // Predicated region
    $region22: #{tpu_custom_call.1} parent=1 // pred_check
      _
    $region23: #{tpu_custom_call.1} parent=1 // pred_check_branch
      %3526 = sbr.rel (0) target = $region25
    $region24: #{tpu_custom_call.1} parent=1 // pred_region
      %s3528 = ssub.s32 128, 128
      %3529 = vsyncadd [#allocation9], %s3528
      %s3531 = sshll.u32 [#allocation8], 4
      %s3532 = int_to_ptr.vmem [resolvable:$true] %s3531
      %3534 = dma.vmem_to_hbm [thread:$0]  %s3532, 128, %s3, [#allocation9]
    $region25: #{tpu_custom_call.1} parent=1 // pred_fallthru
      _
    // Predicated region
    $region26: #{tpu_custom_call.1} parent=1 // pred_check
      _
    $region27: #{tpu_custom_call.1} parent=1 // pred_check_branch
      %3536 = sbr.rel (0) target = $region29
    $region28: #{tpu_custom_call.1} parent=1 // pred_region
      _
    $region29: #{tpu_custom_call.1} parent=1 // pred_fallthru
      _
    // Predicated region
    $region30: #{tpu_custom_call.1} parent=1 // pred_check
      _
    $region31: #{tpu_custom_call.1} parent=1 // pred_check_branch
      %3538 = sbr.rel (0) target = $region33
    $region32: #{tpu_custom_call.1} parent=1 // pred_region
      %3539 = dma.done [#allocation4], 48
    $region33: #{tpu_custom_call.1} parent=1 // pred_fallthru
      _
    // Predicated region
    $region34: #{tpu_custom_call.1} parent=1 // pred_check
      _
    $region35: #{tpu_custom_call.1} parent=1 // pred_check_branch
      %3541 = sbr.rel (0) target = $region37
    $region36: #{tpu_custom_call.1} parent=1 // pred_region
      %3542 = dma.done [#allocation9], 128
    $region37: #{tpu_custom_call.1} parent=1 // pred_fallthru
      _
    // Predicated region
    $region38: #{tpu_custom_call.1} parent=1 // pred_check
      _
    $region39: #{tpu_custom_call.1} parent=1 // pred_check_branch
      %3544 = sbr.rel (0) target = $region41
    $region40: #{tpu_custom_call.1} parent=1 // pred_region
      _
    $region41: #{tpu_custom_call.1} parent=1 // pred_fallthru
      _
    %3545 = vsyncpa [#allocation3], 1
    %3546 = vsyncpa [#allocation6], 1
    %3547 = vsyncpa [#allocation4], 1
    %3548 = vsyncpa [#allocation9], 1

</llo_original>
